<compile_context>
chip_gen: v7x
topology: tpu7x:2x2x1
jax: 0.10.0
libtpu: 0.0.40
codegen_flags: <defaults>
</compile_context>

<pallas_src>
import functools

import numpy as np

import jax
import jax.numpy as jnp
from jax.experimental import pallas as pl
from jax.experimental.pallas import tpu as pltpu


# conv0aa .. conv0bh (Cin, Cout) pairs from the PyTorch module __init__.
_LAYER_CHANNELS = ((3, 64), (64, 64), (64, 64), (64, 32), (32, 32),
                   (32, 32), (32, 16), (16, 16), (16, 16))
_NUM_LAYERS = len(_LAYER_CHANNELS)
_OUT_CHANNELS = _LAYER_CHANNELS[-1][1]

_LANE = 128                       # lane-aligned channel width of activations / tap blocks
_NTAPS = 9                        # 3x3 taps
_TAPS = tuple((dy, dx) for dy in (-1, 0, 1) for dx in (-1, 0, 1))
_ROW_CHUNK = 128                  # slab-assembly row chunk (16 vregs per f32 operand)


def _round_up(x, m):
    return ((x + m - 1) // m) * m


# ---------------------------------------------------------------------------
# Fused kernel: all scales x all 9 conv layers for one batch element per grid step
# ---------------------------------------------------------------------------
def _pyramid_kernel(chunks, guard, img_ref, mask_ref, w_ref, b_ref,
                    out_ref, act_ref, slab_ref):
    """chunks : static tuple of (slab_row_start, rows, image_width) assembly jobs.
    guard  : static guard-row count (>= max |tap shift|) on both ends of act_ref.

    img_ref  : (M_total, 128)   packed pyramid, channels zero-padded to 128.
    mask_ref : (M_total, 1152)  per-(scale, tap) validity, replicated across lanes.
    w_ref    : (9, 1152, 128)   layer-stacked, zero-padded im2col weights.
    b_ref    : (9, 1, 128)      layer-stacked, zero-padded biases.
    out_ref  : (M_total, 128)   final activations (first 16 channels are real).
    act_ref  : (2*guard + M_total, 128) VMEM scratch, running activation.
    slab_ref : (M_total, 1152)  VMEM scratch, im2col slab.
    """
    m_total = img_ref.shape[0]
    g = guard
    n_layers = w_ref.shape[0]

    # Zero the guard strips once so statically shifted reads never see uninitialised
    # VMEM (a NaN there would survive the mask multiply).
    act_ref[0:g, :] = jnp.zeros((g, _LANE), jnp.float32)
    act_ref[g + m_total:2 * g + m_total, :] = jnp.zeros((g, _LANE), jnp.float32)
    # Layer-0 activations: the packed image (padding rows/channels already zero).
    act_ref[g:g + m_total, :] = img_ref[...]

    def layer(l, carry):
        # --- im2col slab assembly: full 128-lane, sublane-aligned block stores only ---
        for row0, rows, w_img in chunks:               # static Python loop
            for t, (dy, dx) in enumerate(_TAPS):
                shift = dy * w_img + dx                # flat-index shift of this tap
                src = act_ref[g + row0 + shift:g + row0 + shift + rows, :]
                msk = mask_ref[row0:row0 + rows, t * _LANE:(t + 1) * _LANE]
                slab_ref[row0:row0 + rows, t * _LANE:(t + 1) * _LANE] = src * msk
        # --- one MXU matmul for the whole pyramid (all scales stacked along M) ---
        y = jnp.dot(slab_ref[...], w_ref[l],
                    preferred_element_type=jnp.float32)          # (M_total, 128)
        y = y + b_ref[l]                                         # (1, 128) bias
        act_ref[g:g + m_total, :] = jnp.maximum(y, 0.1 * y)      # LeakyReLU(0.1)
        return carry

    jax.lax.fori_loop(0, n_layers, layer, 0)

    # Lane-dense, unmasked output store; host slices the 16 real channels.
    out_ref[...] = act_ref[g:g + m_total, :]


# ---------------------------------------------------------------------------
# Host-side glue
# ---------------------------------------------------------------------------
def downsample_half(x_nhwc):
    """F.interpolate(scale_factor=0.5, mode='bilinear', align_corners=None) equals an
    exact 2x2 average pool for even spatial sizes (sample point lands between pixels)."""
    # TODO(synk): exact bilinear equivalence only holds for even H, W (true for every
    # size reached from the 16x16 test input); odd sizes need true bilinear weights.
    n, h, w, c = x_nhwc.shape
    ho, wo = h // 2, w // 2
    x = x_nhwc[:, :2 * ho, :2 * wo, :].reshape(n, ho, 2, wo, 2, c)
    return x.mean(axis=(2, 4))


def _build_masks(scale_dims, m_sizes, offs, m_total):
    """(M_total, 9*128) f32 validity masks: 1 where the tap's source pixel is inside
    the image, 0 on SAME-padding borders and on row-padding rows."""
    mask = np.zeros((m_total, _NTAPS * _LANE), np.float32)
    for (h_img, w_img), m, off in zip(scale_dims, m_sizes, offs):
        r = np.arange(m)
        hh, ww = r // w_img, r % w_img
        for t, (dy, dx) in enumerate(_TAPS):
            valid = ((hh + dy >= 0) & (hh + dy < h_img) &
                     (ww + dx >= 0) & (ww + dx < w_img)).astype(np.float32)
            mask[off:off + m, t * _LANE:(t + 1) * _LANE] = valid[:, None]
    return mask


def init_feature_pyramid_params(key):
    """Deterministic PyTorch-like init (uniform(-1/sqrt(fan_in), 1/sqrt(fan_in))), HWIO."""
    params = []
    for i, (cin, cout) in enumerate(_LAYER_CHANNELS):
        kw_key, kb_key = jax.random.split(jax.random.fold_in(key, i))
        bound = 1.0 / jnp.sqrt(jnp.float32(cin * 9))
        w = jax.random.uniform(kw_key, (3, 3, cin, cout), jnp.float32, -bound, bound)
        b = jax.random.uniform(kb_key, (cout,), jnp.float32, -bound, bound)
        params.append((w, b))
    return params


@functools.partial(jax.jit, static_argnames="scales")
def feature_pyramid_forward(params, img_nchw, scales=5):
    """Mirrors FeaturePyramid.forward: NCHW image in, list of NCHW feature maps out."""
    img = jnp.transpose(img_nchw, (0, 2, 3, 1)).astype(jnp.float32)    # NCHW -> NHWC
    n = img.shape[0]

    # Image pyramid (3-channel thumbnails, a few KB total) in plain JAX.
    pyr = [img]
    for _ in range(scales - 1):
        pyr.append(downsample_half(pyr[-1]))
    scale_dims = tuple((int(p.shape[1]), int(p.shape[2])) for p in pyr)
    m_sizes = [h * w for (h, w) in scale_dims]
    m_pads = [_round_up(m, 8) for m in m_sizes]          # sublane (x8) row padding
    offs, acc = [], 0
    for mp in m_pads:
        offs.append(acc)
        acc += mp
    m_total = acc                                        # 352 for 16x16 / 5 scales

    guard = _round_up(scale_dims[0][1] + 1, 8)           # >= max |tap shift| (W0 + 1)

    # Pack the whole pyramid into one lane-dense (N, M_total, 128) input:
    # per-scale flattened rows (padded to x8), channels zero-padded to 128.
    blocks = []
    for p, m, mp in zip(pyr, m_sizes, m_pads):
        flat = p.reshape(n, m, 3)
        blocks.append(jnp.pad(flat, ((0, 0), (0, mp - m), (0, _LANE - 3))))
    img_packed = jnp.concatenate(blocks, axis=1)

    # Per-(scale, tap) validity masks: trace-time numpy constant, DMA'd once.
    mask = jnp.asarray(_build_masks(scale_dims, m_sizes, offs, m_total))

    # Weights / biases zero-padded to the lane-aligned im2col layout, layer-stacked.
    w_stack = jnp.stack([
        jnp.pad(w.reshape(9, cin, cout),
                ((0, 0), (0, _LANE - cin), (0, _LANE - cout))
                ).reshape(_NTAPS * _LANE, _LANE)
        for (w, _), (cin, cout) in zip(params, _LAYER_CHANNELS)])       # (9, 1152, 128)
    b_stack = jnp.stack([
        jnp.pad(b, (0, _LANE - cout)).reshape(1, _LANE)
        for (_, b), (_, cout) in zip(params, _LAYER_CHANNELS)])         # (9, 1, 128)

    # Static slab-assembly schedule: (slab_row_start, rows, image_width) chunks.
    chunks = []
    for (h, w), mp, off in zip(scale_dims, m_pads, offs):
        for c in range(0, mp, _ROW_CHUNK):
            chunks.append((off + c, min(_ROW_CHUNK, mp - c), w))
    chunks = tuple(chunks)

    kernel = functools.partial(_pyramid_kernel, chunks, guard)

    out = pl.pallas_call(
        kernel,
        grid=(n,),
        in_specs=[
            pl.BlockSpec((None, m_total, _LANE), lambda i: (i, 0, 0)),          # image
            pl.BlockSpec((m_total, _NTAPS * _LANE), lambda i: (0, 0)),          # masks
            pl.BlockSpec((_NUM_LAYERS, _NTAPS * _LANE, _LANE),
                         lambda i: (0, 0, 0)),                                  # weights
            pl.BlockSpec((_NUM_LAYERS, 1, _LANE), lambda i: (0, 0, 0)),         # biases
        ],
        out_specs=pl.BlockSpec((None, m_total, _LANE), lambda i: (i, 0, 0)),
        out_shape=jax.ShapeDtypeStruct((n, m_total, _LANE), jnp.float32),
        scratch_shapes=[
            pltpu.VMEM((2 * guard + m_total, _LANE), jnp.float32),   # activations
            pltpu.VMEM((m_total, _NTAPS * _LANE), jnp.float32),      # im2col slab
        ],
        compiler_params=pltpu.CompilerParams(
            dimension_semantics=("parallel",),
            vmem_limit_bytes=40 * 1024 * 1024),
    )(img_packed, mask, w_stack, b_stack)

    # Unpack per scale: slice real rows + the 16 real channels, reshape to NCHW.
    feats = []
    for (h, w), m, off in zip(scale_dims, m_sizes, offs):
        f = out[:, off:off + m, :_OUT_CHANNELS].reshape(n, h, w, _OUT_CHANNELS)
        feats.append(jnp.transpose(f, (0, 3, 1, 2)))
    return feats


# ---------------------------------------------------------------------------
# Pure-JAX reference (correctness check)
# ---------------------------------------------------------------------------
def _conv_ref(x_nhwc, w, b):
    y = jax.lax.conv_general_dilated(
        x_nhwc, w, window_strides=(1, 1), padding="SAME",
        dimension_numbers=("NHWC", "HWIO", "NHWC"),
        precision=jax.lax.Precision.HIGHEST)
    y = y + b[None, None, None, :]
    return jnp.where(y >= 0.0, y, 0.1 * y)


def feature_pyramid_reference(params, img_nchw, scales=5):
    img = jnp.transpose(img_nchw, (0, 2, 3, 1))

    def trunk(x):
        for (w, b) in params:
            x = _conv_ref(x, w, b)
        return x

    fp = [jnp.transpose(trunk(img), (0, 3, 1, 2))]
    for _ in range(scales - 1):
        img = downsample_half(img)
        fp.append(jnp.transpose(trunk(img), (0, 3, 1, 2)))
    return fp


# ---------------------------------------------------------------------------
if __name__ == "__main__":
    key = jax.random.PRNGKey(0)
    pkey, xkey = jax.random.split(key)

    params = init_feature_pyramid_params(pkey)
    img = jax.random.normal(xkey, (2, 3, 16, 16), jnp.float32)     # NCHW, like PyTorch

    outs = feature_pyramid_forward(params, img, scales=5)
    outs = [jax.block_until_ready(o) for o in outs]

    expected_shapes = [(2, 16, 16, 16), (2, 16, 8, 8), (2, 16, 4, 4),
                       (2, 16, 2, 2), (2, 16, 1, 1)]
    assert [tuple(o.shape) for o in outs] == expected_shapes, \
        [tuple(o.shape) for o in outs]

    refs = feature_pyramid_reference(params, img, scales=5)
    for o, r in zip(outs, refs):
        err = float(jnp.max(jnp.abs(o - r)))
        assert err < 2e-2, f"max abs err {err}"

    print("KERNEL_OK")
</pallas_src>

<mosaic_0001>
module attributes {stable_mosaic.version = 11 : i64} {
  func.func @_pyramid_kernel(%arg0: i32, %arg1: memref<1x352x128xf32, #tpu.memory_space<vmem>>, %arg2: memref<352x1152xf32, #tpu.memory_space<vmem>>, %arg3: memref<9x1152x128xf32, #tpu.memory_space<vmem>>, %arg4: memref<9x1x128xf32, #tpu.memory_space<vmem>>, %arg5: memref<1x352x128xf32, #tpu.memory_space<vmem>>, %arg6: memref<400x128xf32, #tpu.memory_space<vmem>>, %arg7: memref<352x1152xf32, #tpu.memory_space<vmem>>) attributes {dimension_semantics = [#tpu.dimension_semantics<parallel>], iteration_bounds = array<i64: 2>, scalar_prefetch = 0 : i64, scratch_operands = 2 : i64, tpu.core_type = #tpu.core_type<tc>, window_params = [{transform_indices = @transform_0, window_bounds = array<i64: 1, 352, 128>}, {pipeline_mode = #tpu.pipeline_mode<synchronous>, transform_indices = @transform_1, window_bounds = array<i64: 352, 1152>}, {pipeline_mode = #tpu.pipeline_mode<synchronous>, transform_indices = @transform_2, window_bounds = array<i64: 9, 1152, 128>}, {pipeline_mode = #tpu.pipeline_mode<synchronous>, transform_indices = @transform_3, window_bounds = array<i64: 9, 1, 128>}, {transform_indices = @transform_4, window_bounds = array<i64: 1, 352, 128>}]} {
    %cst = arith.constant 0.000000e+00 : f32
    %0 = vector.broadcast %cst : f32 to vector<24x128xf32>
    %c0 = arith.constant 0 : index
    %c0_0 = arith.constant 0 : index
    %1 = vector.load %arg6[%c0, %c0_0] : memref<400x128xf32, #tpu.memory_space<vmem>>, vector<24x128xf32>
    tpu.vector_store %arg6[%c0, %c0_0], %0 {strides = array<i32>} : memref<400x128xf32, #tpu.memory_space<vmem>>, vector<24x128xf32>,
    %cst_1 = arith.constant 0.000000e+00 : f32
    %2 = vector.broadcast %cst_1 : f32 to vector<24x128xf32>
    %c376 = arith.constant 376 : index
    %c0_2 = arith.constant 0 : index
    %3 = vector.load %arg6[%c376, %c0_2] : memref<400x128xf32, #tpu.memory_space<vmem>>, vector<24x128xf32>
    tpu.vector_store %arg6[%c376, %c0_2], %2 {strides = array<i32>} : memref<400x128xf32, #tpu.memory_space<vmem>>, vector<24x128xf32>,
    %c0_3 = arith.constant 0 : index
    %c0_4 = arith.constant 0 : index
    %c0_5 = arith.constant 0 : index
    %4 = vector.load %arg1[%c0_3, %c0_4, %c0_5] : memref<1x352x128xf32, #tpu.memory_space<vmem>>, vector<1x352x128xf32>
    %5 = vector.shape_cast %4 : vector<1x352x128xf32> to vector<352x128xf32>
    %c24 = arith.constant 24 : index
    %c0_6 = arith.constant 0 : index
    %6 = vector.load %arg6[%c24, %c0_6] : memref<400x128xf32, #tpu.memory_space<vmem>>, vector<352x128xf32>
    tpu.vector_store %arg6[%c24, %c0_6], %5 {strides = array<i32>} : memref<400x128xf32, #tpu.memory_space<vmem>>, vector<352x128xf32>,
    %c0_i32 = arith.constant 0 : i32
    %c9_i32 = arith.constant 9 : i32
    %7 = arith.addi %c0_i32, %c9_i32 : i32
    %c1_i32 = arith.constant 1 : i32
    scf.for %arg8 = %c0_i32 to %7 step %c1_i32  : i32 {
      %c7 = arith.constant 7 : index
      %c0_13 = arith.constant 0 : index
      %12 = vector.load %arg6[%c7, %c0_13] : memref<400x128xf32, #tpu.memory_space<vmem>>, vector<128x128xf32>
      %c0_14 = arith.constant 0 : index
      %c0_15 = arith.constant 0 : index
      %13 = vector.load %arg2[%c0_14, %c0_15] : memref<352x1152xf32, #tpu.memory_space<vmem>>, vector<128x128xf32>
      %14 = arith.mulf %12, %13 : vector<128x128xf32>
      %c0_16 = arith.constant 0 : index
      %c0_17 = arith.constant 0 : index
      %15 = vector.load %arg7[%c0_16, %c0_17] : memref<352x1152xf32, #tpu.memory_space<vmem>>, vector<128x128xf32>
      tpu.vector_store %arg7[%c0_16, %c0_17], %14 {strides = array<i32>} : memref<352x1152xf32, #tpu.memory_space<vmem>>, vector<128x128xf32>,
      %c8 = arith.constant 8 : index
      %c0_18 = arith.constant 0 : index
      %16 = vector.load %arg6[%c8, %c0_18] : memref<400x128xf32, #tpu.memory_space<vmem>>, vector<128x128xf32>
      %c0_19 = arith.constant 0 : index
      %c128 = arith.constant 128 : index
      %17 = vector.load %arg2[%c0_19, %c128] : memref<352x1152xf32, #tpu.memory_space<vmem>>, vector<128x128xf32>
      %18 = arith.mulf %16, %17 : vector<128x128xf32>
      %c0_20 = arith.constant 0 : index
      %c128_21 = arith.constant 128 : index
      %19 = vector.load %arg7[%c0_20, %c128_21] : memref<352x1152xf32, #tpu.memory_space<vmem>>, vector<128x128xf32>
      tpu.vector_store %arg7[%c0_20, %c128_21], %18 {strides = array<i32>} : memref<352x1152xf32, #tpu.memory_space<vmem>>, vector<128x128xf32>,
      %c9 = arith.constant 9 : index
      %c0_22 = arith.constant 0 : index
      %20 = vector.load %arg6[%c9, %c0_22] : memref<400x128xf32, #tpu.memory_space<vmem>>, vector<128x128xf32>
      %c0_23 = arith.constant 0 : index
      %c256 = arith.constant 256 : index
      %21 = vector.load %arg2[%c0_23, %c256] : memref<352x1152xf32, #tpu.memory_space<vmem>>, vector<128x128xf32>
      %22 = arith.mulf %20, %21 : vector<128x128xf32>
      %c0_24 = arith.constant 0 : index
      %c256_25 = arith.constant 256 : index
      %23 = vector.load %arg7[%c0_24, %c256_25] : memref<352x1152xf32, #tpu.memory_space<vmem>>, vector<128x128xf32>
      tpu.vector_store %arg7[%c0_24, %c256_25], %22 {strides = array<i32>} : memref<352x1152xf32, #tpu.memory_space<vmem>>, vector<128x128xf32>,
      %c23 = arith.constant 23 : index
      %c0_26 = arith.constant 0 : index
      %24 = vector.load %arg6[%c23, %c0_26] : memref<400x128xf32, #tpu.memory_space<vmem>>, vector<128x128xf32>
      %c0_27 = arith.constant 0 : index
      %c384 = arith.constant 384 : index
      %25 = vector.load %arg2[%c0_27, %c384] : memref<352x1152xf32, #tpu.memory_space<vmem>>, vector<128x128xf32>
      %26 = arith.mulf %24, %25 : vector<128x128xf32>
      %c0_28 = arith.constant 0 : index
      %c384_29 = arith.constant 384 : index
      %27 = vector.load %arg7[%c0_28, %c384_29] : memref<352x1152xf32, #tpu.memory_space<vmem>>, vector<128x128xf32>
      tpu.vector_store %arg7[%c0_28, %c384_29], %26 {strides = array<i32>} : memref<352x1152xf32, #tpu.memory_space<vmem>>, vector<128x128xf32>,
      %c24_30 = arith.constant 24 : index
      %c0_31 = arith.constant 0 : index
      %28 = vector.load %arg6[%c24_30, %c0_31] : memref<400x128xf32, #tpu.memory_space<vmem>>, vector<128x128xf32>
      %c0_32 = arith.constant 0 : index
      %c512 = arith.constant 512 : index
      %29 = vector.load %arg2[%c0_32, %c512] : memref<352x1152xf32, #tpu.memory_space<vmem>>, vector<128x128xf32>
      %30 = arith.mulf %28, %29 : vector<128x128xf32>
      %c0_33 = arith.constant 0 : index
      %c512_34 = arith.constant 512 : index
      %31 = vector.load %arg7[%c0_33, %c512_34] : memref<352x1152xf32, #tpu.memory_space<vmem>>, vector<128x128xf32>
      tpu.vector_store %arg7[%c0_33, %c512_34], %30 {strides = array<i32>} : memref<352x1152xf32, #tpu.memory_space<vmem>>, vector<128x128xf32>,
      %c25 = arith.constant 25 : index
      %c0_35 = arith.constant 0 : index
      %32 = vector.load %arg6[%c25, %c0_35] : memref<400x128xf32, #tpu.memory_space<vmem>>, vector<128x128xf32>
      %c0_36 = arith.constant 0 : index
      %c640 = arith.constant 640 : index
      %33 = vector.load %arg2[%c0_36, %c640] : memref<352x1152xf32, #tpu.memory_space<vmem>>, vector<128x128xf32>
      %34 = arith.mulf %32, %33 : vector<128x128xf32>
      %c0_37 = arith.constant 0 : index
      %c640_38 = arith.constant 640 : index
      %35 = vector.load %arg7[%c0_37, %c640_38] : memref<352x1152xf32, #tpu.memory_space<vmem>>, vector<128x128xf32>
      tpu.vector_store %arg7[%c0_37, %c640_38], %34 {strides = array<i32>} : memref<352x1152xf32, #tpu.memory_space<vmem>>, vector<128x128xf32>,
      %c39 = arith.constant 39 : index
      %c0_39 = arith.constant 0 : index
      %36 = vector.load %arg6[%c39, %c0_39] : memref<400x128xf32, #tpu.memory_space<vmem>>, vector<128x128xf32>
      %c0_40 = arith.constant 0 : index
      %c768 = arith.constant 768 : index
      %37 = vector.load %arg2[%c0_40, %c768] : memref<352x1152xf32, #tpu.memory_space<vmem>>, vector<128x128xf32>
      %38 = arith.mulf %36, %37 : vector<128x128xf32>
      %c0_41 = arith.constant 0 : index
      %c768_42 = arith.constant 768 : index
      %39 = vector.load %arg7[%c0_41, %c768_42] : memref<352x1152xf32, #tpu.memory_space<vmem>>, vector<128x128xf32>
      tpu.vector_store %arg7[%c0_41, %c768_42], %38 {strides = array<i32>} : memref<352x1152xf32, #tpu.memory_space<vmem>>, vector<128x128xf32>,
      %c40 = arith.constant 40 : index
      %c0_43 = arith.constant 0 : index
      %40 = vector.load %arg6[%c40, %c0_43] : memref<400x128xf32, #tpu.memory_space<vmem>>, vector<128x128xf32>
      %c0_44 = arith.constant 0 : index
      %c896 = arith.constant 896 : index
      %41 = vector.load %arg2[%c0_44, %c896] : memref<352x1152xf32, #tpu.memory_space<vmem>>, vector<128x128xf32>
      %42 = arith.mulf %40, %41 : vector<128x128xf32>
      %c0_45 = arith.constant 0 : index
      %c896_46 = arith.constant 896 : index
      %43 = vector.load %arg7[%c0_45, %c896_46] : memref<352x1152xf32, #tpu.memory_space<vmem>>, vector<128x128xf32>
      tpu.vector_store %arg7[%c0_45, %c896_46], %42 {strides = array<i32>} : memref<352x1152xf32, #tpu.memory_space<vmem>>, vector<128x128xf32>,
      %c41 = arith.constant 41 : index
      %c0_47 = arith.constant 0 : index
      %44 = vector.load %arg6[%c41, %c0_47] : memref<400x128xf32, #tpu.memory_space<vmem>>, vector<128x128xf32>
      %c0_48 = arith.constant 0 : index
      %c1024 = arith.constant 1024 : index
      %45 = vector.load %arg2[%c0_48, %c1024] : memref<352x1152xf32, #tpu.memory_space<vmem>>, vector<128x128xf32>
      %46 = arith.mulf %44, %45 : vector<128x128xf32>
      %c0_49 = arith.constant 0 : index
      %c1024_50 = arith.constant 1024 : index
      %47 = vector.load %arg7[%c0_49, %c1024_50] : memref<352x1152xf32, #tpu.memory_space<vmem>>, vector<128x128xf32>
      tpu.vector_store %arg7[%c0_49, %c1024_50], %46 {strides = array<i32>} : memref<352x1152xf32, #tpu.memory_space<vmem>>, vector<128x128xf32>,
      %c135 = arith.constant 135 : index
      %c0_51 = arith.constant 0 : index
      %48 = vector.load %arg6[%c135, %c0_51] : memref<400x128xf32, #tpu.memory_space<vmem>>, vector<128x128xf32>
      %c128_52 = arith.constant 128 : index
      %c0_53 = arith.constant 0 : index
      %49 = vector.load %arg2[%c128_52, %c0_53] : memref<352x1152xf32, #tpu.memory_space<vmem>>, vector<128x128xf32>
      %50 = arith.mulf %48, %49 : vector<128x128xf32>
      %c128_54 = arith.constant 128 : index
      %c0_55 = arith.constant 0 : index
      %51 = vector.load %arg7[%c128_54, %c0_55] : memref<352x1152xf32, #tpu.memory_space<vmem>>, vector<128x128xf32>
      tpu.vector_store %arg7[%c128_54, %c0_55], %50 {strides = array<i32>} : memref<352x1152xf32, #tpu.memory_space<vmem>>, vector<128x128xf32>,
      %c136 = arith.constant 136 : index
      %c0_56 = arith.constant 0 : index
      %52 = vector.load %arg6[%c136, %c0_56] : memref<400x128xf32, #tpu.memory_space<vmem>>, vector<128x128xf32>
      %c128_57 = arith.constant 128 : index
      %c128_58 = arith.constant 128 : index
      %53 = vector.load %arg2[%c128_57, %c128_58] : memref<352x1152xf32, #tpu.memory_space<vmem>>, vector<128x128xf32>
      %54 = arith.mulf %52, %53 : vector<128x128xf32>
      %c128_59 = arith.constant 128 : index
      %c128_60 = arith.constant 128 : index
      %55 = vector.load %arg7[%c128_59, %c128_60] : memref<352x1152xf32, #tpu.memory_space<vmem>>, vector<128x128xf32>
      tpu.vector_store %arg7[%c128_59, %c128_60], %54 {strides = array<i32>} : memref<352x1152xf32, #tpu.memory_space<vmem>>, vector<128x128xf32>,
      %c137 = arith.constant 137 : index
      %c0_61 = arith.constant 0 : index
      %56 = vector.load %arg6[%c137, %c0_61] : memref<400x128xf32, #tpu.memory_space<vmem>>, vector<128x128xf32>
      %c128_62 = arith.constant 128 : index
      %c256_63 = arith.constant 256 : index
      %57 = vector.load %arg2[%c128_62, %c256_63] : memref<352x1152xf32, #tpu.memory_space<vmem>>, vector<128x128xf32>
      %58 = arith.mulf %56, %57 : vector<128x128xf32>
      %c128_64 = arith.constant 128 : index
      %c256_65 = arith.constant 256 : index
      %59 = vector.load %arg7[%c128_64, %c256_65] : memref<352x1152xf32, #tpu.memory_space<vmem>>, vector<128x128xf32>
      tpu.vector_store %arg7[%c128_64, %c256_65], %58 {strides = array<i32>} : memref<352x1152xf32, #tpu.memory_space<vmem>>, vector<128x128xf32>,
      %c151 = arith.constant 151 : index
      %c0_66 = arith.constant 0 : index
      %60 = vector.load %arg6[%c151, %c0_66] : memref<400x128xf32, #tpu.memory_space<vmem>>, vector<128x128xf32>
      %c128_67 = arith.constant 128 : index
      %c384_68 = arith.constant 384 : index
      %61 = vector.load %arg2[%c128_67, %c384_68] : memref<352x1152xf32, #tpu.memory_space<vmem>>, vector<128x128xf32>
      %62 = arith.mulf %60, %61 : vector<128x128xf32>
      %c128_69 = arith.constant 128 : index
      %c384_70 = arith.constant 384 : index
      %63 = vector.load %arg7[%c128_69, %c384_70] : memref<352x1152xf32, #tpu.memory_space<vmem>>, vector<128x128xf32>
      tpu.vector_store %arg7[%c128_69, %c384_70], %62 {strides = array<i32>} : memref<352x1152xf32, #tpu.memory_space<vmem>>, vector<128x128xf32>,
      %c152 = arith.constant 152 : index
      %c0_71 = arith.constant 0 : index
      %64 = vector.load %arg6[%c152, %c0_71] : memref<400x128xf32, #tpu.memory_space<vmem>>, vector<128x128xf32>
      %c128_72 = arith.constant 128 : index
      %c512_73 = arith.constant 512 : index
      %65 = vector.load %arg2[%c128_72, %c512_73] : memref<352x1152xf32, #tpu.memory_space<vmem>>, vector<128x128xf32>
      %66 = arith.mulf %64, %65 : vector<128x128xf32>
      %c128_74 = arith.constant 128 : index
      %c512_75 = arith.constant 512 : index
      %67 = vector.load %arg7[%c128_74, %c512_75] : memref<352x1152xf32, #tpu.memory_space<vmem>>, vector<128x128xf32>
      tpu.vector_store %arg7[%c128_74, %c512_75], %66 {strides = array<i32>} : memref<352x1152xf32, #tpu.memory_space<vmem>>, vector<128x128xf32>,
      %c153 = arith.constant 153 : index
      %c0_76 = arith.constant 0 : index
      %68 = vector.load %arg6[%c153, %c0_76] : memref<400x128xf32, #tpu.memory_space<vmem>>, vector<128x128xf32>
      %c128_77 = arith.constant 128 : index
      %c640_78 = arith.constant 640 : index
      %69 = vector.load %arg2[%c128_77, %c640_78] : memref<352x1152xf32, #tpu.memory_space<vmem>>, vector<128x128xf32>
      %70 = arith.mulf %68, %69 : vector<128x128xf32>
      %c128_79 = arith.constant 128 : index
      %c640_80 = arith.constant 640 : index
      %71 = vector.load %arg7[%c128_79, %c640_80] : memref<352x1152xf32, #tpu.memory_space<vmem>>, vector<128x128xf32>
      tpu.vector_store %arg7[%c128_79, %c640_80], %70 {strides = array<i32>} : memref<352x1152xf32, #tpu.memory_space<vmem>>, vector<128x128xf32>,
      %c167 = arith.constant 167 : index
      %c0_81 = arith.constant 0 : index
      %72 = vector.load %arg6[%c167, %c0_81] : memref<400x128xf32, #tpu.memory_space<vmem>>, vector<128x128xf32>
      %c128_82 = arith.constant 128 : index
      %c768_83 = arith.constant 768 : index
      %73 = vector.load %arg2[%c128_82, %c768_83] : memref<352x1152xf32, #tpu.memory_space<vmem>>, vector<128x128xf32>
      %74 = arith.mulf %72, %73 : vector<128x128xf32>
      %c128_84 = arith.constant 128 : index
      %c768_85 = arith.constant 768 : index
      %75 = vector.load %arg7[%c128_84, %c768_85] : memref<352x1152xf32, #tpu.memory_space<vmem>>, vector<128x128xf32>
      tpu.vector_store %arg7[%c128_84, %c768_85], %74 {strides = array<i32>} : memref<352x1152xf32, #tpu.memory_space<vmem>>, vector<128x128xf32>,
      %c168 = arith.constant 168 : index
      %c0_86 = arith.constant 0 : index
      %76 = vector.load %arg6[%c168, %c0_86] : memref<400x128xf32, #tpu.memory_space<vmem>>, vector<128x128xf32>
      %c128_87 = arith.constant 128 : index
      %c896_88 = arith.constant 896 : index
      %77 = vector.load %arg2[%c128_87, %c896_88] : memref<352x1152xf32, #tpu.memory_space<vmem>>, vector<128x128xf32>
      %78 = arith.mulf %76, %77 : vector<128x128xf32>
      %c128_89 = arith.constant 128 : index
      %c896_90 = arith.constant 896 : index
      %79 = vector.load %arg7[%c128_89, %c896_90] : memref<352x1152xf32, #tpu.memory_space<vmem>>, vector<128x128xf32>
      tpu.vector_store %arg7[%c128_89, %c896_90], %78 {strides = array<i32>} : memref<352x1152xf32, #tpu.memory_space<vmem>>, vector<128x128xf32>,
      %c169 = arith.constant 169 : index
      %c0_91 = arith.constant 0 : index
      %80 = vector.load %arg6[%c169, %c0_91] : memref<400x128xf32, #tpu.memory_space<vmem>>, vector<128x128xf32>
      %c128_92 = arith.constant 128 : index
      %c1024_93 = arith.constant 1024 : index
      %81 = vector.load %arg2[%c128_92, %c1024_93] : memref<352x1152xf32, #tpu.memory_space<vmem>>, vector<128x128xf32>
      %82 = arith.mulf %80, %81 : vector<128x128xf32>
      %c128_94 = arith.constant 128 : index
      %c1024_95 = arith.constant 1024 : index
      %83 = vector.load %arg7[%c128_94, %c1024_95] : memref<352x1152xf32, #tpu.memory_space<vmem>>, vector<128x128xf32>
      tpu.vector_store %arg7[%c128_94, %c1024_95], %82 {strides = array<i32>} : memref<352x1152xf32, #tpu.memory_space<vmem>>, vector<128x128xf32>,
      %c271 = arith.constant 271 : index
      %c0_96 = arith.constant 0 : index
      %84 = vector.load %arg6[%c271, %c0_96] : memref<400x128xf32, #tpu.memory_space<vmem>>, vector<64x128xf32>
      %c256_97 = arith.constant 256 : index
      %c0_98 = arith.constant 0 : index
      %85 = vector.load %arg2[%c256_97, %c0_98] : memref<352x1152xf32, #tpu.memory_space<vmem>>, vector<64x128xf32>
      %86 = arith.mulf %84, %85 : vector<64x128xf32>
      %c256_99 = arith.constant 256 : index
      %c0_100 = arith.constant 0 : index
      %87 = vector.load %arg7[%c256_99, %c0_100] : memref<352x1152xf32, #tpu.memory_space<vmem>>, vector<64x128xf32>
      tpu.vector_store %arg7[%c256_99, %c0_100], %86 {strides = array<i32>} : memref<352x1152xf32, #tpu.memory_space<vmem>>, vector<64x128xf32>,
      %c272 = arith.constant 272 : index
      %c0_101 = arith.constant 0 : index
      %88 = vector.load %arg6[%c272, %c0_101] : memref<400x128xf32, #tpu.memory_space<vmem>>, vector<64x128xf32>
      %c256_102 = arith.constant 256 : index
      %c128_103 = arith.constant 128 : index
      %89 = vector.load %arg2[%c256_102, %c128_103] : memref<352x1152xf32, #tpu.memory_space<vmem>>, vector<64x128xf32>
      %90 = arith.mulf %88, %89 : vector<64x128xf32>
      %c256_104 = arith.constant 256 : index
      %c128_105 = arith.constant 128 : index
      %91 = vector.load %arg7[%c256_104, %c128_105] : memref<352x1152xf32, #tpu.memory_space<vmem>>, vector<64x128xf32>
      tpu.vector_store %arg7[%c256_104, %c128_105], %90 {strides = array<i32>} : memref<352x1152xf32, #tpu.memory_space<vmem>>, vector<64x128xf32>,
      %c273 = arith.constant 273 : index
      %c0_106 = arith.constant 0 : index
      %92 = vector.load %arg6[%c273, %c0_106] : memref<400x128xf32, #tpu.memory_space<vmem>>, vector<64x128xf32>
      %c256_107 = arith.constant 256 : index
      %c256_108 = arith.constant 256 : index
      %93 = vector.load %arg2[%c256_107, %c256_108] : memref<352x1152xf32, #tpu.memory_space<vmem>>, vector<64x128xf32>
      %94 = arith.mulf %92, %93 : vector<64x128xf32>
      %c256_109 = arith.constant 256 : index
      %c256_110 = arith.constant 256 : index
      %95 = vector.load %arg7[%c256_109, %c256_110] : memref<352x1152xf32, #tpu.memory_space<vmem>>, vector<64x128xf32>
      tpu.vector_store %arg7[%c256_109, %c256_110], %94 {strides = array<i32>} : memref<352x1152xf32, #tpu.memory_space<vmem>>, vector<64x128xf32>,
      %c279 = arith.constant 279 : index
      %c0_111 = arith.constant 0 : index
      %96 = vector.load %arg6[%c279, %c0_111] : memref<400x128xf32, #tpu.memory_space<vmem>>, vector<64x128xf32>
      %c256_112 = arith.constant 256 : index
      %c384_113 = arith.constant 384 : index
      %97 = vector.load %arg2[%c256_112, %c384_113] : memref<352x1152xf32, #tpu.memory_space<vmem>>, vector<64x128xf32>
      %98 = arith.mulf %96, %97 : vector<64x128xf32>
      %c256_114 = arith.constant 256 : index
      %c384_115 = arith.constant 384 : index
      %99 = vector.load %arg7[%c256_114, %c384_115] : memref<352x1152xf32, #tpu.memory_space<vmem>>, vector<64x128xf32>
      tpu.vector_store %arg7[%c256_114, %c384_115], %98 {strides = array<i32>} : memref<352x1152xf32, #tpu.memory_space<vmem>>, vector<64x128xf32>,
      %c280 = arith.constant 280 : index
      %c0_116 = arith.constant 0 : index
      %100 = vector.load %arg6[%c280, %c0_116] : memref<400x128xf32, #tpu.memory_space<vmem>>, vector<64x128xf32>
      %c256_117 = arith.constant 256 : index
      %c512_118 = arith.constant 512 : index
      %101 = vector.load %arg2[%c256_117, %c512_118] : memref<352x1152xf32, #tpu.memory_space<vmem>>, vector<64x128xf32>
      %102 = arith.mulf %100, %101 : vector<64x128xf32>
      %c256_119 = arith.constant 256 : index
      %c512_120 = arith.constant 512 : index
      %103 = vector.load %arg7[%c256_119, %c512_120] : memref<352x1152xf32, #tpu.memory_space<vmem>>, vector<64x128xf32>
      tpu.vector_store %arg7[%c256_119, %c512_120], %102 {strides = array<i32>} : memref<352x1152xf32, #tpu.memory_space<vmem>>, vector<64x128xf32>,
      %c281 = arith.constant 281 : index
      %c0_121 = arith.constant 0 : index
      %104 = vector.load %arg6[%c281, %c0_121] : memref<400x128xf32, #tpu.memory_space<vmem>>, vector<64x128xf32>
      %c256_122 = arith.constant 256 : index
      %c640_123 = arith.constant 640 : index
      %105 = vector.load %arg2[%c256_122, %c640_123] : memref<352x1152xf32, #tpu.memory_space<vmem>>, vector<64x128xf32>
      %106 = arith.mulf %104, %105 : vector<64x128xf32>
      %c256_124 = arith.constant 256 : index
      %c640_125 = arith.constant 640 : index
      %107 = vector.load %arg7[%c256_124, %c640_125] : memref<352x1152xf32, #tpu.memory_space<vmem>>, vector<64x128xf32>
      tpu.vector_store %arg7[%c256_124, %c640_125], %106 {strides = array<i32>} : memref<352x1152xf32, #tpu.memory_space<vmem>>, vector<64x128xf32>,
      %c287 = arith.constant 287 : index
      %c0_126 = arith.constant 0 : index
      %108 = vector.load %arg6[%c287, %c0_126] : memref<400x128xf32, #tpu.memory_space<vmem>>, vector<64x128xf32>
      %c256_127 = arith.constant 256 : index
      %c768_128 = arith.constant 768 : index
      %109 = vector.load %arg2[%c256_127, %c768_128] : memref<352x1152xf32, #tpu.memory_space<vmem>>, vector<64x128xf32>
      %110 = arith.mulf %108, %109 : vector<64x128xf32>
      %c256_129 = arith.constant 256 : index
      %c768_130 = arith.constant 768 : index
      %111 = vector.load %arg7[%c256_129, %c768_130] : memref<352x1152xf32, #tpu.memory_space<vmem>>, vector<64x128xf32>
      tpu.vector_store %arg7[%c256_129, %c768_130], %110 {strides = array<i32>} : memref<352x1152xf32, #tpu.memory_space<vmem>>, vector<64x128xf32>,
      %c288 = arith.constant 288 : index
      %c0_131 = arith.constant 0 : index
      %112 = vector.load %arg6[%c288, %c0_131] : memref<400x128xf32, #tpu.memory_space<vmem>>, vector<64x128xf32>
      %c256_132 = arith.constant 256 : index
      %c896_133 = arith.constant 896 : index
      %113 = vector.load %arg2[%c256_132, %c896_133] : memref<352x1152xf32, #tpu.memory_space<vmem>>, vector<64x128xf32>
      %114 = arith.mulf %112, %113 : vector<64x128xf32>
      %c256_134 = arith.constant 256 : index
      %c896_135 = arith.constant 896 : index
      %115 = vector.load %arg7[%c256_134, %c896_135] : memref<352x1152xf32, #tpu.memory_space<vmem>>, vector<64x128xf32>
      tpu.vector_store %arg7[%c256_134, %c896_135], %114 {strides = array<i32>} : memref<352x1152xf32, #tpu.memory_space<vmem>>, vector<64x128xf32>,
      %c289 = arith.constant 289 : index
      %c0_136 = arith.constant 0 : index
      %116 = vector.load %arg6[%c289, %c0_136] : memref<400x128xf32, #tpu.memory_space<vmem>>, vector<64x128xf32>
      %c256_137 = arith.constant 256 : index
      %c1024_138 = arith.constant 1024 : index
      %117 = vector.load %arg2[%c256_137, %c1024_138] : memref<352x1152xf32, #tpu.memory_space<vmem>>, vector<64x128xf32>
      %118 = arith.mulf %116, %117 : vector<64x128xf32>
      %c256_139 = arith.constant 256 : index
      %c1024_140 = arith.constant 1024 : index
      %119 = vector.load %arg7[%c256_139, %c1024_140] : memref<352x1152xf32, #tpu.memory_space<vmem>>, vector<64x128xf32>
      tpu.vector_store %arg7[%c256_139, %c1024_140], %118 {strides = array<i32>} : memref<352x1152xf32, #tpu.memory_space<vmem>>, vector<64x128xf32>,
      %c339 = arith.constant 339 : index
      %c0_141 = arith.constant 0 : index
      %120 = vector.load %arg6[%c339, %c0_141] : memref<400x128xf32, #tpu.memory_space<vmem>>, vector<16x128xf32>
      %c320 = arith.constant 320 : index
      %c0_142 = arith.constant 0 : index
      %121 = vector.load %arg2[%c320, %c0_142] : memref<352x1152xf32, #tpu.memory_space<vmem>>, vector<16x128xf32>
      %122 = arith.mulf %120, %121 : vector<16x128xf32>
      %c320_143 = arith.constant 320 : index
      %c0_144 = arith.constant 0 : index
      %123 = vector.load %arg7[%c320_143, %c0_144] : memref<352x1152xf32, #tpu.memory_space<vmem>>, vector<16x128xf32>
      tpu.vector_store %arg7[%c320_143, %c0_144], %122 {strides = array<i32>} : memref<352x1152xf32, #tpu.memory_space<vmem>>, vector<16x128xf32>,
      %c340 = arith.constant 340 : index
      %c0_145 = arith.constant 0 : index
      %124 = vector.load %arg6[%c340, %c0_145] : memref<400x128xf32, #tpu.memory_space<vmem>>, vector<16x128xf32>
      %c320_146 = arith.constant 320 : index
      %c128_147 = arith.constant 128 : index
      %125 = vector.load %arg2[%c320_146, %c128_147] : memref<352x1152xf32, #tpu.memory_space<vmem>>, vector<16x128xf32>
      %126 = arith.mulf %124, %125 : vector<16x128xf32>
      %c320_148 = arith.constant 320 : index
      %c128_149 = arith.constant 128 : index
      %127 = vector.load %arg7[%c320_148, %c128_149] : memref<352x1152xf32, #tpu.memory_space<vmem>>, vector<16x128xf32>
      tpu.vector_store %arg7[%c320_148, %c128_149], %126 {strides = array<i32>} : memref<352x1152xf32, #tpu.memory_space<vmem>>, vector<16x128xf32>,
      %c341 = arith.constant 341 : index
      %c0_150 = arith.constant 0 : index
      %128 = vector.load %arg6[%c341, %c0_150] : memref<400x128xf32, #tpu.memory_space<vmem>>, vector<16x128xf32>
      %c320_151 = arith.constant 320 : index
      %c256_152 = arith.constant 256 : index
      %129 = vector.load %arg2[%c320_151, %c256_152] : memref<352x1152xf32, #tpu.memory_space<vmem>>, vector<16x128xf32>
      %130 = arith.mulf %128, %129 : vector<16x128xf32>
      %c320_153 = arith.constant 320 : index
      %c256_154 = arith.constant 256 : index
      %131 = vector.load %arg7[%c320_153, %c256_154] : memref<352x1152xf32, #tpu.memory_space<vmem>>, vector<16x128xf32>
      tpu.vector_store %arg7[%c320_153, %c256_154], %130 {strides = array<i32>} : memref<352x1152xf32, #tpu.memory_space<vmem>>, vector<16x128xf32>,
      %c343 = arith.constant 343 : index
      %c0_155 = arith.constant 0 : index
      %132 = vector.load %arg6[%c343, %c0_155] : memref<400x128xf32, #tpu.memory_space<vmem>>, vector<16x128xf32>
      %c320_156 = arith.constant 320 : index
      %c384_157 = arith.constant 384 : index
      %133 = vector.load %arg2[%c320_156, %c384_157] : memref<352x1152xf32, #tpu.memory_space<vmem>>, vector<16x128xf32>
      %134 = arith.mulf %132, %133 : vector<16x128xf32>
      %c320_158 = arith.constant 320 : index
      %c384_159 = arith.constant 384 : index
      %135 = vector.load %arg7[%c320_158, %c384_159] : memref<352x1152xf32, #tpu.memory_space<vmem>>, vector<16x128xf32>
      tpu.vector_store %arg7[%c320_158, %c384_159], %134 {strides = array<i32>} : memref<352x1152xf32, #tpu.memory_space<vmem>>, vector<16x128xf32>,
      %c344 = arith.constant 344 : index
      %c0_160 = arith.constant 0 : index
      %136 = vector.load %arg6[%c344, %c0_160] : memref<400x128xf32, #tpu.memory_space<vmem>>, vector<16x128xf32>
      %c320_161 = arith.constant 320 : index
      %c512_162 = arith.constant 512 : index
      %137 = vector.load %arg2[%c320_161, %c512_162] : memref<352x1152xf32, #tpu.memory_space<vmem>>, vector<16x128xf32>
      %138 = arith.mulf %136, %137 : vector<16x128xf32>
      %c320_163 = arith.constant 320 : index
      %c512_164 = arith.constant 512 : index
      %139 = vector.load %arg7[%c320_163, %c512_164] : memref<352x1152xf32, #tpu.memory_space<vmem>>, vector<16x128xf32>
      tpu.vector_store %arg7[%c320_163, %c512_164], %138 {strides = array<i32>} : memref<352x1152xf32, #tpu.memory_space<vmem>>, vector<16x128xf32>,
      %c345 = arith.constant 345 : index
      %c0_165 = arith.constant 0 : index
      %140 = vector.load %arg6[%c345, %c0_165] : memref<400x128xf32, #tpu.memory_space<vmem>>, vector<16x128xf32>
      %c320_166 = arith.constant 320 : index
      %c640_167 = arith.constant 640 : index
      %141 = vector.load %arg2[%c320_166, %c640_167] : memref<352x1152xf32, #tpu.memory_space<vmem>>, vector<16x128xf32>
      %142 = arith.mulf %140, %141 : vector<16x128xf32>
      %c320_168 = arith.constant 320 : index
      %c640_169 = arith.constant 640 : index
      %143 = vector.load %arg7[%c320_168, %c640_169] : memref<352x1152xf32, #tpu.memory_space<vmem>>, vector<16x128xf32>
      tpu.vector_store %arg7[%c320_168, %c640_169], %142 {strides = array<i32>} : memref<352x1152xf32, #tpu.memory_space<vmem>>, vector<16x128xf32>,
      %c347 = arith.constant 347 : index
      %c0_170 = arith.constant 0 : index
      %144 = vector.load %arg6[%c347, %c0_170] : memref<400x128xf32, #tpu.memory_space<vmem>>, vector<16x128xf32>
      %c320_171 = arith.constant 320 : index
      %c768_172 = arith.constant 768 : index
      %145 = vector.load %arg2[%c320_171, %c768_172] : memref<352x1152xf32, #tpu.memory_space<vmem>>, vector<16x128xf32>
      %146 = arith.mulf %144, %145 : vector<16x128xf32>
      %c320_173 = arith.constant 320 : index
      %c768_174 = arith.constant 768 : index
      %147 = vector.load %arg7[%c320_173, %c768_174] : memref<352x1152xf32, #tpu.memory_space<vmem>>, vector<16x128xf32>
      tpu.vector_store %arg7[%c320_173, %c768_174], %146 {strides = array<i32>} : memref<352x1152xf32, #tpu.memory_space<vmem>>, vector<16x128xf32>,
      %c348 = arith.constant 348 : index
      %c0_175 = arith.constant 0 : index
      %148 = vector.load %arg6[%c348, %c0_175] : memref<400x128xf32, #tpu.memory_space<vmem>>, vector<16x128xf32>
      %c320_176 = arith.constant 320 : index
      %c896_177 = arith.constant 896 : index
      %149 = vector.load %arg2[%c320_176, %c896_177] : memref<352x1152xf32, #tpu.memory_space<vmem>>, vector<16x128xf32>
      %150 = arith.mulf %148, %149 : vector<16x128xf32>
      %c320_178 = arith.constant 320 : index
      %c896_179 = arith.constant 896 : index
      %151 = vector.load %arg7[%c320_178, %c896_179] : memref<352x1152xf32, #tpu.memory_space<vmem>>, vector<16x128xf32>
      tpu.vector_store %arg7[%c320_178, %c896_179], %150 {strides = array<i32>} : memref<352x1152xf32, #tpu.memory_space<vmem>>, vector<16x128xf32>,
      %c349 = arith.constant 349 : index
      %c0_180 = arith.constant 0 : index
      %152 = vector.load %arg6[%c349, %c0_180] : memref<400x128xf32, #tpu.memory_space<vmem>>, vector<16x128xf32>
      %c320_181 = arith.constant 320 : index
      %c1024_182 = arith.constant 1024 : index
      %153 = vector.load %arg2[%c320_181, %c1024_182] : memref<352x1152xf32, #tpu.memory_space<vmem>>, vector<16x128xf32>
      %154 = arith.mulf %152, %153 : vector<16x128xf32>
      %c320_183 = arith.constant 320 : index
      %c1024_184 = arith.constant 1024 : index
      %155 = vector.load %arg7[%c320_183, %c1024_184] : memref<352x1152xf32, #tpu.memory_space<vmem>>, vector<16x128xf32>
      tpu.vector_store %arg7[%c320_183, %c1024_184], %154 {strides = array<i32>} : memref<352x1152xf32, #tpu.memory_space<vmem>>, vector<16x128xf32>,
      %c357 = arith.constant 357 : index
      %c0_185 = arith.constant 0 : index
      %156 = vector.load %arg6[%c357, %c0_185] : memref<400x128xf32, #tpu.memory_space<vmem>>, vector<8x128xf32>
      %c336 = arith.constant 336 : index
      %c0_186 = arith.constant 0 : index
      %157 = vector.load %arg2[%c336, %c0_186] : memref<352x1152xf32, #tpu.memory_space<vmem>>, vector<8x128xf32>
      %158 = arith.mulf %156, %157 : vector<8x128xf32>
      %c336_187 = arith.constant 336 : index
      %c0_188 = arith.constant 0 : index
      %159 = vector.load %arg7[%c336_187, %c0_188] : memref<352x1152xf32, #tpu.memory_space<vmem>>, vector<8x128xf32>
      tpu.vector_store %arg7[%c336_187, %c0_188], %158 {strides = array<i32>} : memref<352x1152xf32, #tpu.memory_space<vmem>>, vector<8x128xf32>,
      %c358 = arith.constant 358 : index
      %c0_189 = arith.constant 0 : index
      %160 = vector.load %arg6[%c358, %c0_189] : memref<400x128xf32, #tpu.memory_space<vmem>>, vector<8x128xf32>
      %c336_190 = arith.constant 336 : index
      %c128_191 = arith.constant 128 : index
      %161 = vector.load %arg2[%c336_190, %c128_191] : memref<352x1152xf32, #tpu.memory_space<vmem>>, vector<8x128xf32>
      %162 = arith.mulf %160, %161 : vector<8x128xf32>
      %c336_192 = arith.constant 336 : index
      %c128_193 = arith.constant 128 : index
      %163 = vector.load %arg7[%c336_192, %c128_193] : memref<352x1152xf32, #tpu.memory_space<vmem>>, vector<8x128xf32>
      tpu.vector_store %arg7[%c336_192, %c128_193], %162 {strides = array<i32>} : memref<352x1152xf32, #tpu.memory_space<vmem>>, vector<8x128xf32>,
      %c359 = arith.constant 359 : index
      %c0_194 = arith.constant 0 : index
      %164 = vector.load %arg6[%c359, %c0_194] : memref<400x128xf32, #tpu.memory_space<vmem>>, vector<8x128xf32>
      %c336_195 = arith.constant 336 : index
      %c256_196 = arith.constant 256 : index
      %165 = vector.load %arg2[%c336_195, %c256_196] : memref<352x1152xf32, #tpu.memory_space<vmem>>, vector<8x128xf32>
      %166 = arith.mulf %164, %165 : vector<8x128xf32>
      %c336_197 = arith.constant 336 : index
      %c256_198 = arith.constant 256 : index
      %167 = vector.load %arg7[%c336_197, %c256_198] : memref<352x1152xf32, #tpu.memory_space<vmem>>, vector<8x128xf32>
      tpu.vector_store %arg7[%c336_197, %c256_198], %166 {strides = array<i32>} : memref<352x1152xf32, #tpu.memory_space<vmem>>, vector<8x128xf32>,
      %c359_199 = arith.constant 359 : index
      %c0_200 = arith.constant 0 : index
      %168 = vector.load %arg6[%c359_199, %c0_200] : memref<400x128xf32, #tpu.memory_space<vmem>>, vector<8x128xf32>
      %c336_201 = arith.constant 336 : index
      %c384_202 = arith.constant 384 : index
      %169 = vector.load %arg2[%c336_201, %c384_202] : memref<352x1152xf32, #tpu.memory_space<vmem>>, vector<8x128xf32>
      %170 = arith.mulf %168, %169 : vector<8x128xf32>
      %c336_203 = arith.constant 336 : index
      %c384_204 = arith.constant 384 : index
      %171 = vector.load %arg7[%c336_203, %c384_204] : memref<352x1152xf32, #tpu.memory_space<vmem>>, vector<8x128xf32>
      tpu.vector_store %arg7[%c336_203, %c384_204], %170 {strides = array<i32>} : memref<352x1152xf32, #tpu.memory_space<vmem>>, vector<8x128xf32>,
      %c360 = arith.constant 360 : index
      %c0_205 = arith.constant 0 : index
      %172 = vector.load %arg6[%c360, %c0_205] : memref<400x128xf32, #tpu.memory_space<vmem>>, vector<8x128xf32>
      %c336_206 = arith.constant 336 : index
      %c512_207 = arith.constant 512 : index
      %173 = vector.load %arg2[%c336_206, %c512_207] : memref<352x1152xf32, #tpu.memory_space<vmem>>, vector<8x128xf32>
      %174 = arith.mulf %172, %173 : vector<8x128xf32>
      %c336_208 = arith.constant 336 : index
      %c512_209 = arith.constant 512 : index
      %175 = vector.load %arg7[%c336_208, %c512_209] : memref<352x1152xf32, #tpu.memory_space<vmem>>, vector<8x128xf32>
      tpu.vector_store %arg7[%c336_208, %c512_209], %174 {strides = array<i32>} : memref<352x1152xf32, #tpu.memory_space<vmem>>, vector<8x128xf32>,
      %c361 = arith.constant 361 : index
      %c0_210 = arith.constant 0 : index
      %176 = vector.load %arg6[%c361, %c0_210] : memref<400x128xf32, #tpu.memory_space<vmem>>, vector<8x128xf32>
      %c336_211 = arith.constant 336 : index
      %c640_212 = arith.constant 640 : index
      %177 = vector.load %arg2[%c336_211, %c640_212] : memref<352x1152xf32, #tpu.memory_space<vmem>>, vector<8x128xf32>
      %178 = arith.mulf %176, %177 : vector<8x128xf32>
      %c336_213 = arith.constant 336 : index
      %c640_214 = arith.constant 640 : index
      %179 = vector.load %arg7[%c336_213, %c640_214] : memref<352x1152xf32, #tpu.memory_space<vmem>>, vector<8x128xf32>
      tpu.vector_store %arg7[%c336_213, %c640_214], %178 {strides = array<i32>} : memref<352x1152xf32, #tpu.memory_space<vmem>>, vector<8x128xf32>,
      %c361_215 = arith.constant 361 : index
      %c0_216 = arith.constant 0 : index
      %180 = vector.load %arg6[%c361_215, %c0_216] : memref<400x128xf32, #tpu.memory_space<vmem>>, vector<8x128xf32>
      %c336_217 = arith.constant 336 : index
      %c768_218 = arith.constant 768 : index
      %181 = vector.load %arg2[%c336_217, %c768_218] : memref<352x1152xf32, #tpu.memory_space<vmem>>, vector<8x128xf32>
      %182 = arith.mulf %180, %181 : vector<8x128xf32>
      %c336_219 = arith.constant 336 : index
      %c768_220 = arith.constant 768 : index
      %183 = vector.load %arg7[%c336_219, %c768_220] : memref<352x1152xf32, #tpu.memory_space<vmem>>, vector<8x128xf32>
      tpu.vector_store %arg7[%c336_219, %c768_220], %182 {strides = array<i32>} : memref<352x1152xf32, #tpu.memory_space<vmem>>, vector<8x128xf32>,
      %c362 = arith.constant 362 : index
      %c0_221 = arith.constant 0 : index
      %184 = vector.load %arg6[%c362, %c0_221] : memref<400x128xf32, #tpu.memory_space<vmem>>, vector<8x128xf32>
      %c336_222 = arith.constant 336 : index
      %c896_223 = arith.constant 896 : index
      %185 = vector.load %arg2[%c336_222, %c896_223] : memref<352x1152xf32, #tpu.memory_space<vmem>>, vector<8x128xf32>
      %186 = arith.mulf %184, %185 : vector<8x128xf32>
      %c336_224 = arith.constant 336 : index
      %c896_225 = arith.constant 896 : index
      %187 = vector.load %arg7[%c336_224, %c896_225] : memref<352x1152xf32, #tpu.memory_space<vmem>>, vector<8x128xf32>
      tpu.vector_store %arg7[%c336_224, %c896_225], %186 {strides = array<i32>} : memref<352x1152xf32, #tpu.memory_space<vmem>>, vector<8x128xf32>,
      %c363 = arith.constant 363 : index
      %c0_226 = arith.constant 0 : index
      %188 = vector.load %arg6[%c363, %c0_226] : memref<400x128xf32, #tpu.memory_space<vmem>>, vector<8x128xf32>
      %c336_227 = arith.constant 336 : index
      %c1024_228 = arith.constant 1024 : index
      %189 = vector.load %arg2[%c336_227, %c1024_228] : memref<352x1152xf32, #tpu.memory_space<vmem>>, vector<8x128xf32>
      %190 = arith.mulf %188, %189 : vector<8x128xf32>
      %c336_229 = arith.constant 336 : index
      %c1024_230 = arith.constant 1024 : index
      %191 = vector.load %arg7[%c336_229, %c1024_230] : memref<352x1152xf32, #tpu.memory_space<vmem>>, vector<8x128xf32>
      tpu.vector_store %arg7[%c336_229, %c1024_230], %190 {strides = array<i32>} : memref<352x1152xf32, #tpu.memory_space<vmem>>, vector<8x128xf32>,
      %c366 = arith.constant 366 : index
      %c0_231 = arith.constant 0 : index
      %192 = vector.load %arg6[%c366, %c0_231] : memref<400x128xf32, #tpu.memory_space<vmem>>, vector<8x128xf32>
      %c344_232 = arith.constant 344 : index
      %c0_233 = arith.constant 0 : index
      %193 = vector.load %arg2[%c344_232, %c0_233] : memref<352x1152xf32, #tpu.memory_space<vmem>>, vector<8x128xf32>
      %194 = arith.mulf %192, %193 : vector<8x128xf32>
      %c344_234 = arith.constant 344 : index
      %c0_235 = arith.constant 0 : index
      %195 = vector.load %arg7[%c344_234, %c0_235] : memref<352x1152xf32, #tpu.memory_space<vmem>>, vector<8x128xf32>
      tpu.vector_store %arg7[%c344_234, %c0_235], %194 {strides = array<i32>} : memref<352x1152xf32, #tpu.memory_space<vmem>>, vector<8x128xf32>,
      %c367 = arith.constant 367 : index
      %c0_236 = arith.constant 0 : index
      %196 = vector.load %arg6[%c367, %c0_236] : memref<400x128xf32, #tpu.memory_space<vmem>>, vector<8x128xf32>
      %c344_237 = arith.constant 344 : index
      %c128_238 = arith.constant 128 : index
      %197 = vector.load %arg2[%c344_237, %c128_238] : memref<352x1152xf32, #tpu.memory_space<vmem>>, vector<8x128xf32>
      %198 = arith.mulf %196, %197 : vector<8x128xf32>
      %c344_239 = arith.constant 344 : index
      %c128_240 = arith.constant 128 : index
      %199 = vector.load %arg7[%c344_239, %c128_240] : memref<352x1152xf32, #tpu.memory_space<vmem>>, vector<8x128xf32>
      tpu.vector_store %arg7[%c344_239, %c128_240], %198 {strides = array<i32>} : memref<352x1152xf32, #tpu.memory_space<vmem>>, vector<8x128xf32>,
      %c368 = arith.constant 368 : index
      %c0_241 = arith.constant 0 : index
      %200 = vector.load %arg6[%c368, %c0_241] : memref<400x128xf32, #tpu.memory_space<vmem>>, vector<8x128xf32>
      %c344_242 = arith.constant 344 : index
      %c256_243 = arith.constant 256 : index
      %201 = vector.load %arg2[%c344_242, %c256_243] : memref<352x1152xf32, #tpu.memory_space<vmem>>, vector<8x128xf32>
      %202 = arith.mulf %200, %201 : vector<8x128xf32>
      %c344_244 = arith.constant 344 : index
      %c256_245 = arith.constant 256 : index
      %203 = vector.load %arg7[%c344_244, %c256_245] : memref<352x1152xf32, #tpu.memory_space<vmem>>, vector<8x128xf32>
      tpu.vector_store %arg7[%c344_244, %c256_245], %202 {strides = array<i32>} : memref<352x1152xf32, #tpu.memory_space<vmem>>, vector<8x128xf32>,
      %c367_246 = arith.constant 367 : index
      %c0_247 = arith.constant 0 : index
      %204 = vector.load %arg6[%c367_246, %c0_247] : memref<400x128xf32, #tpu.memory_space<vmem>>, vector<8x128xf32>
      %c344_248 = arith.constant 344 : index
      %c384_249 = arith.constant 384 : index
      %205 = vector.load %arg2[%c344_248, %c384_249] : memref<352x1152xf32, #tpu.memory_space<vmem>>, vector<8x128xf32>
      %206 = arith.mulf %204, %205 : vector<8x128xf32>
      %c344_250 = arith.constant 344 : index
      %c384_251 = arith.constant 384 : index
      %207 = vector.load %arg7[%c344_250, %c384_251] : memref<352x1152xf32, #tpu.memory_space<vmem>>, vector<8x128xf32>
      tpu.vector_store %arg7[%c344_250, %c384_251], %206 {strides = array<i32>} : memref<352x1152xf32, #tpu.memory_space<vmem>>, vector<8x128xf32>,
      %c368_252 = arith.constant 368 : index
      %c0_253 = arith.constant 0 : index
      %208 = vector.load %arg6[%c368_252, %c0_253] : memref<400x128xf32, #tpu.memory_space<vmem>>, vector<8x128xf32>
      %c344_254 = arith.constant 344 : index
      %c512_255 = arith.constant 512 : index
      %209 = vector.load %arg2[%c344_254, %c512_255] : memref<352x1152xf32, #tpu.memory_space<vmem>>, vector<8x128xf32>
      %210 = arith.mulf %208, %209 : vector<8x128xf32>
      %c344_256 = arith.constant 344 : index
      %c512_257 = arith.constant 512 : index
      %211 = vector.load %arg7[%c344_256, %c512_257] : memref<352x1152xf32, #tpu.memory_space<vmem>>, vector<8x128xf32>
      tpu.vector_store %arg7[%c344_256, %c512_257], %210 {strides = array<i32>} : memref<352x1152xf32, #tpu.memory_space<vmem>>, vector<8x128xf32>,
      %c369 = arith.constant 369 : index
      %c0_258 = arith.constant 0 : index
      %212 = vector.load %arg6[%c369, %c0_258] : memref<400x128xf32, #tpu.memory_space<vmem>>, vector<8x128xf32>
      %c344_259 = arith.constant 344 : index
      %c640_260 = arith.constant 640 : index
      %213 = vector.load %arg2[%c344_259, %c640_260] : memref<352x1152xf32, #tpu.memory_space<vmem>>, vector<8x128xf32>
      %214 = arith.mulf %212, %213 : vector<8x128xf32>
      %c344_261 = arith.constant 344 : index
      %c640_262 = arith.constant 640 : index
      %215 = vector.load %arg7[%c344_261, %c640_262] : memref<352x1152xf32, #tpu.memory_space<vmem>>, vector<8x128xf32>
      tpu.vector_store %arg7[%c344_261, %c640_262], %214 {strides = array<i32>} : memref<352x1152xf32, #tpu.memory_space<vmem>>, vector<8x128xf32>,
      %c368_263 = arith.constant 368 : index
      %c0_264 = arith.constant 0 : index
      %216 = vector.load %arg6[%c368_263, %c0_264] : memref<400x128xf32, #tpu.memory_space<vmem>>, vector<8x128xf32>
      %c344_265 = arith.constant 344 : index
      %c768_266 = arith.constant 768 : index
      %217 = vector.load %arg2[%c344_265, %c768_266] : memref<352x1152xf32, #tpu.memory_space<vmem>>, vector<8x128xf32>
      %218 = arith.mulf %216, %217 : vector<8x128xf32>
      %c344_267 = arith.constant 344 : index
      %c768_268 = arith.constant 768 : index
      %219 = vector.load %arg7[%c344_267, %c768_268] : memref<352x1152xf32, #tpu.memory_space<vmem>>, vector<8x128xf32>
      tpu.vector_store %arg7[%c344_267, %c768_268], %218 {strides = array<i32>} : memref<352x1152xf32, #tpu.memory_space<vmem>>, vector<8x128xf32>,
      %c369_269 = arith.constant 369 : index
      %c0_270 = arith.constant 0 : index
      %220 = vector.load %arg6[%c369_269, %c0_270] : memref<400x128xf32, #tpu.memory_space<vmem>>, vector<8x128xf32>
      %c344_271 = arith.constant 344 : index
      %c896_272 = arith.constant 896 : index
      %221 = vector.load %arg2[%c344_271, %c896_272] : memref<352x1152xf32, #tpu.memory_space<vmem>>, vector<8x128xf32>
      %222 = arith.mulf %220, %221 : vector<8x128xf32>
      %c344_273 = arith.constant 344 : index
      %c896_274 = arith.constant 896 : index
      %223 = vector.load %arg7[%c344_273, %c896_274] : memref<352x1152xf32, #tpu.memory_space<vmem>>, vector<8x128xf32>
      tpu.vector_store %arg7[%c344_273, %c896_274], %222 {strides = array<i32>} : memref<352x1152xf32, #tpu.memory_space<vmem>>, vector<8x128xf32>,
      %c370 = arith.constant 370 : index
      %c0_275 = arith.constant 0 : index
      %224 = vector.load %arg6[%c370, %c0_275] : memref<400x128xf32, #tpu.memory_space<vmem>>, vector<8x128xf32>
      %c344_276 = arith.constant 344 : index
      %c1024_277 = arith.constant 1024 : index
      %225 = vector.load %arg2[%c344_276, %c1024_277] : memref<352x1152xf32, #tpu.memory_space<vmem>>, vector<8x128xf32>
      %226 = arith.mulf %224, %225 : vector<8x128xf32>
      %c344_278 = arith.constant 344 : index
      %c1024_279 = arith.constant 1024 : index
      %227 = vector.load %arg7[%c344_278, %c1024_279] : memref<352x1152xf32, #tpu.memory_space<vmem>>, vector<8x128xf32>
      tpu.vector_store %arg7[%c344_278, %c1024_279], %226 {strides = array<i32>} : memref<352x1152xf32, #tpu.memory_space<vmem>>, vector<8x128xf32>,
      %c0_280 = arith.constant 0 : index
      %c0_281 = arith.constant 0 : index
      %228 = vector.load %arg7[%c0_280, %c0_281] : memref<352x1152xf32, #tpu.memory_space<vmem>>, vector<352x1152xf32>
      %229 = arith.index_cast %arg8 : i32 to index
      %c0_282 = arith.constant 0 : index
      %c0_283 = arith.constant 0 : index
      %230 = vector.load %arg3[%229, %c0_282, %c0_283] : memref<9x1152x128xf32, #tpu.memory_space<vmem>>, vector<1x1152x128xf32>
      %231 = vector.shape_cast %230 : vector<1x1152x128xf32> to vector<1152x128xf32>
      %cst_284 = arith.constant dense<0.000000e+00> : vector<352x128xf32>
      %232 = tpu.matmul %228, %231, %cst_284 {dimension_numbers = #tpu.dot_dimension_numbers<[1], [0], [0], [1], [0, 0, 1, 1], [], []>} : vector<352x1152xf32>, vector<1152x128xf32>, vector<352x128xf32> -> vector<352x128xf32>
      %233 = arith.index_cast %arg8 : i32 to index
      %c0_285 = arith.constant 0 : index
      %c0_286 = arith.constant 0 : index
      %234 = vector.load %arg4[%233, %c0_285, %c0_286] : memref<9x1x128xf32, #tpu.memory_space<vmem>>, vector<1x1x128xf32>
      %235 = vector.shape_cast %234 : vector<1x1x128xf32> to vector<1x128xf32>
      %236 = vector.broadcast %235 : vector<1x128xf32> to vector<352x128xf32>
      %237 = arith.addf %232, %236 : vector<352x128xf32>
      %cst_287 = arith.constant 1.000000e-01 : f32
      %238 = vector.broadcast %cst_287 : f32 to vector<352x128xf32>
      %239 = arith.mulf %238, %237 : vector<352x128xf32>
      %240 = arith.maximumf %237, %239 : vector<352x128xf32>
      %c24_288 = arith.constant 24 : index
      %c0_289 = arith.constant 0 : index
      %241 = vector.load %arg6[%c24_288, %c0_289] : memref<400x128xf32, #tpu.memory_space<vmem>>, vector<352x128xf32>
      tpu.vector_store %arg6[%c24_288, %c0_289], %240 {strides = array<i32>} : memref<400x128xf32, #tpu.memory_space<vmem>>, vector<352x128xf32>,
    }
    %c9_i32_7 = arith.constant 9 : i32
    %c24_8 = arith.constant 24 : index
    %c0_9 = arith.constant 0 : index
    %8 = vector.load %arg6[%c24_8, %c0_9] : memref<400x128xf32, #tpu.memory_space<vmem>>, vector<352x128xf32>
    %c0_10 = arith.constant 0 : index
    %c0_11 = arith.constant 0 : index
    %c0_12 = arith.constant 0 : index
    %9 = vector.load %arg5[%c0_10, %c0_11, %c0_12] : memref<1x352x128xf32, #tpu.memory_space<vmem>>, vector<1x352x128xf32>
    %10 = vector.shape_cast %9 : vector<1x352x128xf32> to vector<352x128xf32>
    %11 = vector.shape_cast %8 : vector<352x128xf32> to vector<1x352x128xf32>
    tpu.vector_store %arg5[%c0_10, %c0_11, %c0_12], %11 {strides = array<i32>} : memref<1x352x128xf32, #tpu.memory_space<vmem>>, vector<1x352x128xf32>,
    return
  }
  func.func @transform_0(%arg0: i32) -> (i32, i32, i32) {
    %c0_i32 = arith.constant 0 : i32
    %c0_i32_0 = arith.constant 0 : i32
    %c0_i32_1 = arith.constant 0 : i32
    return %arg0, %c0_i32, %c0_i32_0 : i32, i32, i32
  }
  func.func @transform_1(%arg0: i32) -> (i32, i32) {
    %c0_i32 = arith.constant 0 : i32
    %c0_i32_0 = arith.constant 0 : i32
    %c0_i32_1 = arith.constant 0 : i32
    return %c0_i32, %c0_i32_0 : i32, i32
  }
  func.func @transform_2(%arg0: i32) -> (i32, i32, i32) {
    %c0_i32 = arith.constant 0 : i32
    %c0_i32_0 = arith.constant 0 : i32
    %c0_i32_1 = arith.constant 0 : i32
    %c0_i32_2 = arith.constant 0 : i32
    return %c0_i32, %c0_i32_0, %c0_i32_1 : i32, i32, i32
  }
  func.func @transform_3(%arg0: i32) -> (i32, i32, i32) {
    %c0_i32 = arith.constant 0 : i32
    %c0_i32_0 = arith.constant 0 : i32
    %c0_i32_1 = arith.constant 0 : i32
    %c0_i32_2 = arith.constant 0 : i32
    return %c0_i32, %c0_i32_0, %c0_i32_1 : i32, i32, i32
  }
  func.func @transform_4(%arg0: i32) -> (i32, i32, i32) {
    %c0_i32 = arith.constant 0 : i32
    %c0_i32_0 = arith.constant 0 : i32
    %c0_i32_1 = arith.constant 0 : i32
    return %arg0, %c0_i32, %c0_i32_0 : i32, i32, i32
  }
}

</mosaic_0001>

<llo_original>
// kernel: feature_pyramid_forward.1
$region0: #{feature_pyramid_forward.1}
  #allocation0 [shape = 'u32[]', space=smem, size = 0x4, offset = 0x4, fixed_abs, tag = 'smem constant byte address 0x4 - core index']
  #allocation1 [shape = 'u32[144,128]{1,0:T(1,128)}', space=vmem, size = 0x12000, scoped, tag = 'internal scratch']
  #allocation2 [shape = 'f32[400,128]{1,0:T(8,128)}', space=vmem, size = 0x32000, scoped, tag = 'scratch operand']
  #allocation3 [shape = 'f32[352,1152]{1,0:T(8,128)}', space=vmem, size = 0x18c000, scoped, tag = 'scratch operand']
  %s0 = inlined_call_operand.vmem [shape: f32[2,352,128], index: 0, kind: input, shape index: {}]
  %s1 = inlined_call_operand.vmem [shape: f32[352,1152], index: 1, kind: input, shape index: {}]
  %s2 = inlined_call_operand.vmem [shape: f32[9,1152,128], index: 2, kind: input, shape index: {}]
  %s3 = inlined_call_operand.vmem [shape: f32[9,1,128], index: 3, kind: input, shape index: {}]
  %s4 = inlined_call_operand.vmem [shape: f32[2,352,128], index: 4, kind: output, shape index: {}]
  %s5 = sld [smem:[#allocation0]]
  $region56: #{feature_pyramid_forward.1} parent=0
    _
  %s7 = ssub.s32 1, %s5
  %s8 = scalar_select 0, %s7, %s5
  loop: start=0, step=1, limit=4
  $region2: #{feature_pyramid_forward.1} parent=0 // loop_pre_header
    _
  $region3: #{feature_pyramid_forward.1} parent=0 // loop_header
    %s10 = sphi 0, %s14
    %p11 = scmp.ge.s32.totalorder %s10, 4
    %s20 = sphi 0, %s22
    %s23 = sphi 0, %s20
    %s24 = sphi 0, %s23
    %s40 = sphi 0, %s24
    %s44 = sphi 0, %s44
    %s46 = sphi 0, %s44
    %s47 = sphi 0, %s46
    %s61 = sphi 0, %s47
    %s65 = sphi 0, %s65
    %s67 = sphi 0, %s65
    %s68 = sphi 0, %s67
    %s82 = sphi 0, %s68
    %s86 = sphi 0, %s86
    %s88 = sphi 0, %s86
    %s89 = sphi 0, %s88
    %s103 = sphi 0, %s89
    %s109 = sphi 0, %s111
    %s112 = sphi 0, %s109
    %s113 = sphi 0, %s112
    %s129 = sphi 0, %s113
  $region4: #{feature_pyramid_forward.1} parent=0 // loop_header_branch
    %13 = sbr.rel (%p11) target = $region8
  $region5: #{feature_pyramid_forward.1} parent=0 // loop_body
    %s15 = ssub.s32 %s10, 1
    %s16 = ssub.s32 %s10, 2
    %s17 = sadd.s32 %s10, 1
    %s18 = ssub.s32 %s10, %s17
    %p19 = scmp.eq.s32.totalorder %s18, 0
    %s21 = sadd.s32 %s20, 1
    %s22 = scalar_select %p19, %s20, %s21
    %p25 = pneg %p19
    %p26 = scmp.eq.s32.totalorder %s10, 1
    %p27 = por %p25, %p26
    %p28 = scmp.ne.s32.totalorder %s20, %s23
    %p29 = scmp.eq.s32.totalorder %s10, 0
    %p30 = por %p28, %p29
    %p31 = scmp.ne.s32.totalorder %s20, %s23
    %p32 = scmp.eq.s32.totalorder %s15, 1
    %p33 = por %p31, %p32
    %p34 = scmp.ne.s32.totalorder %s23, %s24
    %p35 = scmp.eq.s32.totalorder %s15, 0
    %p36 = por %p34, %p35
    %p37 = scmp.ne.s32.totalorder %s23, %s24
    %p38 = scmp.eq.s32.totalorder %s16, 1
    %p39 = por %p37, %p38
    %p41 = scmp.ne.s32.totalorder %s24, %s40
    %p42 = scmp.eq.s32.totalorder %s16, 0
    %p43 = por %p41, %p42
    %s45 = sadd.s32 %s44, 1
    %p48 = scmp.eq.s32.totalorder %s10, 1
    %p49 = scmp.ne.s32.totalorder %s44, %s46
    %p50 = scmp.eq.s32.totalorder %s10, 0
    %p51 = por %p49, %p50
    %p52 = scmp.ne.s32.totalorder %s44, %s46
    %p53 = scmp.eq.s32.totalorder %s15, 1
    %p54 = por %p52, %p53
    %p55 = scmp.ne.s32.totalorder %s46, %s47
    %p56 = scmp.eq.s32.totalorder %s15, 0
    %p57 = por %p55, %p56
    %p58 = scmp.ne.s32.totalorder %s46, %s47
    %p59 = scmp.eq.s32.totalorder %s16, 1
    %p60 = por %p58, %p59
    %p62 = scmp.ne.s32.totalorder %s47, %s61
    %p63 = scmp.eq.s32.totalorder %s16, 0
    %p64 = por %p62, %p63
    %s66 = sadd.s32 %s65, 1
    %p69 = scmp.eq.s32.totalorder %s10, 1
    %p70 = scmp.ne.s32.totalorder %s65, %s67
    %p71 = scmp.eq.s32.totalorder %s10, 0
    %p72 = por %p70, %p71
    %p73 = scmp.ne.s32.totalorder %s65, %s67
    %p74 = scmp.eq.s32.totalorder %s15, 1
    %p75 = por %p73, %p74
    %p76 = scmp.ne.s32.totalorder %s67, %s68
    %p77 = scmp.eq.s32.totalorder %s15, 0
    %p78 = por %p76, %p77
    %p79 = scmp.ne.s32.totalorder %s67, %s68
    %p80 = scmp.eq.s32.totalorder %s16, 1
    %p81 = por %p79, %p80
    %p83 = scmp.ne.s32.totalorder %s68, %s82
    %p84 = scmp.eq.s32.totalorder %s16, 0
    %p85 = por %p83, %p84
    %s87 = sadd.s32 %s86, 1
    %p90 = scmp.eq.s32.totalorder %s10, 1
    %p91 = scmp.ne.s32.totalorder %s86, %s88
    %p92 = scmp.eq.s32.totalorder %s10, 0
    %p93 = por %p91, %p92
    %p94 = scmp.ne.s32.totalorder %s86, %s88
    %p95 = scmp.eq.s32.totalorder %s15, 1
    %p96 = por %p94, %p95
    %p97 = scmp.ne.s32.totalorder %s88, %s89
    %p98 = scmp.eq.s32.totalorder %s15, 0
    %p99 = por %p97, %p98
    %p100 = scmp.ne.s32.totalorder %s88, %s89
    %p101 = scmp.eq.s32.totalorder %s16, 1
    %p102 = por %p100, %p101
    %p104 = scmp.ne.s32.totalorder %s89, %s103
    %p105 = scmp.eq.s32.totalorder %s16, 0
    %p106 = por %p104, %p105
    %s107 = ssub.s32 %s10, %s17
    %p108 = scmp.eq.s32.totalorder %s107, 0
    %s110 = sadd.s32 %s109, 1
    %s111 = scalar_select %p108, %s109, %s110
    %p114 = pneg %p108
    %p115 = scmp.eq.s32.totalorder %s10, 1
    %p116 = por %p114, %p115
    %p117 = scmp.ne.s32.totalorder %s109, %s112
    %p118 = scmp.eq.s32.totalorder %s10, 0
    %p119 = por %p117, %p118
    %p120 = scmp.ne.s32.totalorder %s109, %s112
    %p121 = scmp.eq.s32.totalorder %s15, 1
    %p122 = por %p120, %p121
    %p123 = scmp.ne.s32.totalorder %s112, %s113
    %p124 = scmp.eq.s32.totalorder %s15, 0
    %p125 = por %p123, %p124
    %p126 = scmp.ne.s32.totalorder %s112, %s113
    %p127 = scmp.eq.s32.totalorder %s16, 1
    %p128 = por %p126, %p127
    %p130 = scmp.ne.s32.totalorder %s113, %s129
    %p131 = scmp.eq.s32.totalorder %s16, 0
    %p132 = por %p130, %p131
    %p133 = scmp.le.s32.totalorder 1, %s10
    %p134 = scmp.lt.s32.totalorder %s10, 3
    %p135 = pnand %p133, %p134
    %p136 = pneg %p135
    // Predicated region
    $region9: #{feature_pyramid_forward.1} parent=5 // pred_check
      _
    $region10: #{feature_pyramid_forward.1} parent=5 // pred_check_branch
      %138 = sbr.rel (%p135) target = $region12
    $region11: #{feature_pyramid_forward.1} parent=5 // pred_region
      %s139 = ssub.s32 %s10, 1
      // Predicated region
      $region13: #{feature_pyramid_forward.1} parent=11 // pred_check
        %p140 = pneg %p57
      $region14: #{feature_pyramid_forward.1} parent=11 // pred_check_branch
        %142 = sbr.rel (%p140) target = $region16
      $region15: #{feature_pyramid_forward.1} parent=11 // pred_region
        _
      $region16: #{feature_pyramid_forward.1} parent=11 // pred_fallthru
        _
      // Predicated region
      $region17: #{feature_pyramid_forward.1} parent=11 // pred_check
        %p143 = pneg %p78
      $region18: #{feature_pyramid_forward.1} parent=11 // pred_check_branch
        %145 = sbr.rel (%p143) target = $region20
      $region19: #{feature_pyramid_forward.1} parent=11 // pred_region
        _
      $region20: #{feature_pyramid_forward.1} parent=11 // pred_fallthru
        _
      // Predicated region
      $region21: #{feature_pyramid_forward.1} parent=11 // pred_check
        %p146 = pneg %p99
      $region22: #{feature_pyramid_forward.1} parent=11 // pred_check_branch
        %148 = sbr.rel (%p146) target = $region24
      $region23: #{feature_pyramid_forward.1} parent=11 // pred_region
        _
      $region24: #{feature_pyramid_forward.1} parent=11 // pred_fallthru
        _
    $region12: #{feature_pyramid_forward.1} parent=5 // pred_fallthru
      _
    %p149 = scmp.lt.s32.totalorder %s10, 2
    // Predicated region
    $region25: #{feature_pyramid_forward.1} parent=5 // pred_check
      %p150 = pneg %p149
    $region26: #{feature_pyramid_forward.1} parent=5 // pred_check_branch
      %152 = sbr.rel (%p150) target = $region28
    $region27: #{feature_pyramid_forward.1} parent=5 // pred_region
      // Predicated region
      $region29: #{feature_pyramid_forward.1} parent=27 // pred_check
        %p153 = pneg %p30
      $region30: #{feature_pyramid_forward.1} parent=27 // pred_check_branch
        %155 = sbr.rel (%p153) target = $region32
      $region31: #{feature_pyramid_forward.1} parent=27 // pred_region
        %p156 = scmp.lt.s32.totalorder %s10, 1
        %s157 = scalar_select %p156, %s10, 1
        %s158 = smul.addr %s157, 44
        %s159 = smul.addr %s158, 8
        %s160 = scalar_lea.vmem %s0, %s159
      $region32: #{feature_pyramid_forward.1} parent=27 // pred_fallthru
        _
    $region28: #{feature_pyramid_forward.1} parent=5 // pred_fallthru
      _
    %p161 = scmp.le.s32.totalorder 1, %s10
    %p162 = scmp.lt.s32.totalorder %s10, 3
    %p163 = pnand %p161, %p162
    %p164 = pneg %p163
    // Predicated region
    $region33: #{feature_pyramid_forward.1} parent=5 // pred_check
      _
    $region34: #{feature_pyramid_forward.1} parent=5 // pred_check_branch
      %166 = sbr.rel (%p163) target = $region36
    $region35: #{feature_pyramid_forward.1} parent=5 // pred_region
      %s167 = ssub.s32 %s10, 1
      %p168 = scmp.lt.s32.totalorder %s15, 1
      %s169 = scalar_select %p168, %s15, 1
      %s170 = smul.addr %s169, 44
      %s171 = smul.addr %s170, 8
      %s172 = scalar_lea.vmem %s0, %s171
      %p173 = pneg %p36
      %p174 = pneg %p33
      %p175 = pneg %p57
      %p176 = pneg %p54
      %p177 = pneg %p78
      %p178 = pneg %p75
      %p179 = pneg %p99
      %p180 = pneg %p96
      %p181 = pneg %p125
      %p182 = pneg %p122
      %p183 = scmp.lt.s32.totalorder %s15, 1
      %s184 = scalar_select %p183, %s15, 1
      %s185 = smul.addr %s184, 44
      %s186 = smul.addr %s185, 8
      %s187 = scalar_lea.vmem %s4, %s186
      %p188 = scmp.lt.s32.totalorder %s15, 1
      %s189 = scalar_select %p188, %s15, 1
      %s190 = smul.addr %s189, 44
      %s191 = smul.addr %s190, 8
      %s192 = scalar_lea.vmem %s0, %s191
      %p193 = scmp.lt.s32.totalorder %s15, 1
      %s194 = scalar_select %p193, %s15, 1
      %s195 = smul.addr %s194, 44
      %s196 = smul.addr %s195, 8
      %s197 = scalar_lea.vmem %s4, %s196
      %198 = vst [vmem:[#allocation2] sm:$0xff] 0.0
      %199 = vst [vmem:[#allocation2 + $0x8] sm:$0xff] 0.0
      %200 = vst [vmem:[#allocation2 + $0x10] sm:$0xff] 0.0
      %201 = vst [vmem:[#allocation2 + $0x178] sm:$0xff] 0.0
      %202 = vst [vmem:[#allocation2 + $0x180] sm:$0xff] 0.0
      %203 = vst [vmem:[#allocation2 + $0x188] sm:$0xff] 0.0
      %v204 = vld [vmem:[%s192] sm:$0xff]
      %v205 = vld [vmem:[%s192 + $0x8] sm:$0xff]
      %v206 = vld [vmem:[%s192 + $0x10] sm:$0xff]
      %v207 = vld [vmem:[%s192 + $0x18] sm:$0xff]
      %v208 = vld [vmem:[%s192 + $0x20] sm:$0xff]
      %v209 = vld [vmem:[%s192 + $0x28] sm:$0xff]
      %v210 = vld [vmem:[%s192 + $0x30] sm:$0xff]
      %v211 = vld [vmem:[%s192 + $0x38] sm:$0xff]
      %v212 = vld [vmem:[%s192 + $0x40] sm:$0xff]
      %v213 = vld [vmem:[%s192 + $0x48] sm:$0xff]
      %v214 = vld [vmem:[%s192 + $0x50] sm:$0xff]
      %v215 = vld [vmem:[%s192 + $0x58] sm:$0xff]
      %v216 = vld [vmem:[%s192 + $0x60] sm:$0xff]
      %v217 = vld [vmem:[%s192 + $0x68] sm:$0xff]
      %v218 = vld [vmem:[%s192 + $0x70] sm:$0xff]
      %v219 = vld [vmem:[%s192 + $0x78] sm:$0xff]
      %v220 = vld [vmem:[%s192 + $0x80] sm:$0xff]
      %v221 = vld [vmem:[%s192 + $0x88] sm:$0xff]
      %v222 = vld [vmem:[%s192 + $0x90] sm:$0xff]
      %v223 = vld [vmem:[%s192 + $0x98] sm:$0xff]
      %v224 = vld [vmem:[%s192 + $0xa0] sm:$0xff]
      %v225 = vld [vmem:[%s192 + $0xa8] sm:$0xff]
      %v226 = vld [vmem:[%s192 + $0xb0] sm:$0xff]
      %v227 = vld [vmem:[%s192 + $0xb8] sm:$0xff]
      %v228 = vld [vmem:[%s192 + $0xc0] sm:$0xff]
      %v229 = vld [vmem:[%s192 + $0xc8] sm:$0xff]
      %v230 = vld [vmem:[%s192 + $0xd0] sm:$0xff]
      %v231 = vld [vmem:[%s192 + $0xd8] sm:$0xff]
      %v232 = vld [vmem:[%s192 + $0xe0] sm:$0xff]
      %v233 = vld [vmem:[%s192 + $0xe8] sm:$0xff]
      %v234 = vld [vmem:[%s192 + $0xf0] sm:$0xff]
      %v235 = vld [vmem:[%s192 + $0xf8] sm:$0xff]
      %v236 = vld [vmem:[%s192 + $0x100] sm:$0xff]
      %v237 = vld [vmem:[%s192 + $0x108] sm:$0xff]
      %v238 = vld [vmem:[%s192 + $0x110] sm:$0xff]
      %v239 = vld [vmem:[%s192 + $0x118] sm:$0xff]
      %v240 = vld [vmem:[%s192 + $0x120] sm:$0xff]
      %v241 = vld [vmem:[%s192 + $0x128] sm:$0xff]
      %v242 = vld [vmem:[%s192 + $0x130] sm:$0xff]
      %v243 = vld [vmem:[%s192 + $0x138] sm:$0xff]
      %v244 = vld [vmem:[%s192 + $0x140] sm:$0xff]
      %v245 = vld [vmem:[%s192 + $0x148] sm:$0xff]
      %v246 = vld [vmem:[%s192 + $0x150] sm:$0xff]
      %v247 = vld [vmem:[%s192 + $0x158] sm:$0xff]
      %248 = vst [vmem:[#allocation2 + $0x18] sm:$0xff] %v204
      %249 = vst [vmem:[#allocation2 + $0x20] sm:$0xff] %v205
      %250 = vst [vmem:[#allocation2 + $0x28] sm:$0xff] %v206
      %251 = vst [vmem:[#allocation2 + $0x30] sm:$0xff] %v207
      %252 = vst [vmem:[#allocation2 + $0x38] sm:$0xff] %v208
      %253 = vst [vmem:[#allocation2 + $0x40] sm:$0xff] %v209
      %254 = vst [vmem:[#allocation2 + $0x48] sm:$0xff] %v210
      %255 = vst [vmem:[#allocation2 + $0x50] sm:$0xff] %v211
      %256 = vst [vmem:[#allocation2 + $0x58] sm:$0xff] %v212
      %257 = vst [vmem:[#allocation2 + $0x60] sm:$0xff] %v213
      %258 = vst [vmem:[#allocation2 + $0x68] sm:$0xff] %v214
      %259 = vst [vmem:[#allocation2 + $0x70] sm:$0xff] %v215
      %260 = vst [vmem:[#allocation2 + $0x78] sm:$0xff] %v216
      %261 = vst [vmem:[#allocation2 + $0x80] sm:$0xff] %v217
      %262 = vst [vmem:[#allocation2 + $0x88] sm:$0xff] %v218
      %263 = vst [vmem:[#allocation2 + $0x90] sm:$0xff] %v219
      %264 = vst [vmem:[#allocation2 + $0x98] sm:$0xff] %v220
      %265 = vst [vmem:[#allocation2 + $0xa0] sm:$0xff] %v221
      %266 = vst [vmem:[#allocation2 + $0xa8] sm:$0xff] %v222
      %267 = vst [vmem:[#allocation2 + $0xb0] sm:$0xff] %v223
      %268 = vst [vmem:[#allocation2 + $0xb8] sm:$0xff] %v224
      %269 = vst [vmem:[#allocation2 + $0xc0] sm:$0xff] %v225
      %270 = vst [vmem:[#allocation2 + $0xc8] sm:$0xff] %v226
      %271 = vst [vmem:[#allocation2 + $0xd0] sm:$0xff] %v227
      %272 = vst [vmem:[#allocation2 + $0xd8] sm:$0xff] %v228
      %273 = vst [vmem:[#allocation2 + $0xe0] sm:$0xff] %v229
      %274 = vst [vmem:[#allocation2 + $0xe8] sm:$0xff] %v230
      %275 = vst [vmem:[#allocation2 + $0xf0] sm:$0xff] %v231
      %276 = vst [vmem:[#allocation2 + $0xf8] sm:$0xff] %v232
      %277 = vst [vmem:[#allocation2 + $0x100] sm:$0xff] %v233
      %278 = vst [vmem:[#allocation2 + $0x108] sm:$0xff] %v234
      %279 = vst [vmem:[#allocation2 + $0x110] sm:$0xff] %v235
      %280 = vst [vmem:[#allocation2 + $0x118] sm:$0xff] %v236
      %281 = vst [vmem:[#allocation2 + $0x120] sm:$0xff] %v237
      %282 = vst [vmem:[#allocation2 + $0x128] sm:$0xff] %v238
      %283 = vst [vmem:[#allocation2 + $0x130] sm:$0xff] %v239
      %284 = vst [vmem:[#allocation2 + $0x138] sm:$0xff] %v240
      %285 = vst [vmem:[#allocation2 + $0x140] sm:$0xff] %v241
      %286 = vst [vmem:[#allocation2 + $0x148] sm:$0xff] %v242
      %287 = vst [vmem:[#allocation2 + $0x150] sm:$0xff] %v243
      %288 = vst [vmem:[#allocation2 + $0x158] sm:$0xff] %v244
      %289 = vst [vmem:[#allocation2 + $0x160] sm:$0xff] %v245
      %290 = vst [vmem:[#allocation2 + $0x168] sm:$0xff] %v246
      %291 = vst [vmem:[#allocation2 + $0x170] sm:$0xff] %v247
      loop: start=0, step=1, limit=9
      $region37: #{feature_pyramid_forward.1} parent=35 // loop_pre_header
        _
      $region38: #{feature_pyramid_forward.1} parent=35 // loop_header
        %s293 = sphi 0, %s297
        %p294 = scmp.ge.s32.totalorder %s293, 9
      $region39: #{feature_pyramid_forward.1} parent=35 // loop_header_branch
        %296 = sbr.rel (%p294) target = $region43
      $region40: #{feature_pyramid_forward.1} parent=35 // loop_body
        %v298 = vld [vmem:[#allocation2 + $0x7] sm:$0xff]
        %v299 = vld [vmem:[#allocation2 + $0xf] sm:$0xff]
        %v300 = vld [vmem:[#allocation2 + $0x17] sm:$0xff]
        %v301 = vld [vmem:[#allocation2 + $0x1f] sm:$0xff]
        %v302 = vld [vmem:[#allocation2 + $0x27] sm:$0xff]
        %v303 = vld [vmem:[#allocation2 + $0x2f] sm:$0xff]
        %v304 = vld [vmem:[#allocation2 + $0x37] sm:$0xff]
        %v305 = vld [vmem:[#allocation2 + $0x3f] sm:$0xff]
        %v306 = vld [vmem:[#allocation2 + $0x47] sm:$0xff]
        %v307 = vld [vmem:[#allocation2 + $0x4f] sm:$0xff]
        %v308 = vld [vmem:[#allocation2 + $0x57] sm:$0xff]
        %v309 = vld [vmem:[#allocation2 + $0x5f] sm:$0xff]
        %v310 = vld [vmem:[#allocation2 + $0x67] sm:$0xff]
        %v311 = vld [vmem:[#allocation2 + $0x6f] sm:$0xff]
        %v312 = vld [vmem:[#allocation2 + $0x77] sm:$0xff]
        %v313 = vld [vmem:[#allocation2 + $0x7f] sm:$0xff]
        %v314 = vld [vmem:[%s1] sm:$0xff]
        %v315 = vld [vmem:[%s1 + $0x48] sm:$0xff]
        %v316 = vld [vmem:[%s1 + $0x90] sm:$0xff]
        %v317 = vld [vmem:[%s1 + $0xd8] sm:$0xff]
        %v318 = vld [vmem:[%s1 + $0x120] sm:$0xff]
        %v319 = vld [vmem:[%s1 + $0x168] sm:$0xff]
        %v320 = vld [vmem:[%s1 + $0x1b0] sm:$0xff]
        %v321 = vld [vmem:[%s1 + $0x1f8] sm:$0xff]
        %v322 = vld [vmem:[%s1 + $0x240] sm:$0xff]
        %v323 = vld [vmem:[%s1 + $0x288] sm:$0xff]
        %v324 = vld [vmem:[%s1 + $0x2d0] sm:$0xff]
        %v325 = vld [vmem:[%s1 + $0x318] sm:$0xff]
        %v326 = vld [vmem:[%s1 + $0x360] sm:$0xff]
        %v327 = vld [vmem:[%s1 + $0x3a8] sm:$0xff]
        %v328 = vld [vmem:[%s1 + $0x3f0] sm:$0xff]
        %v329 = vld [vmem:[%s1 + $0x438] sm:$0xff]
        %v330 = vmul.f32 %v298, %v314
        %v331 = vmul.f32 %v299, %v315
        %v332 = vmul.f32 %v300, %v316
        %v333 = vmul.f32 %v301, %v317
        %v334 = vmul.f32 %v302, %v318
        %v335 = vmul.f32 %v303, %v319
        %v336 = vmul.f32 %v304, %v320
        %v337 = vmul.f32 %v305, %v321
        %v338 = vmul.f32 %v306, %v322
        %v339 = vmul.f32 %v307, %v323
        %v340 = vmul.f32 %v308, %v324
        %v341 = vmul.f32 %v309, %v325
        %v342 = vmul.f32 %v310, %v326
        %v343 = vmul.f32 %v311, %v327
        %v344 = vmul.f32 %v312, %v328
        %v345 = vmul.f32 %v313, %v329
        %346 = vst [vmem:[#allocation3] sm:$0xff] %v330
        %347 = vst [vmem:[#allocation3 + $0x48] sm:$0xff] %v331
        %348 = vst [vmem:[#allocation3 + $0x90] sm:$0xff] %v332
        %349 = vst [vmem:[#allocation3 + $0xd8] sm:$0xff] %v333
        %350 = vst [vmem:[#allocation3 + $0x120] sm:$0xff] %v334
        %351 = vst [vmem:[#allocation3 + $0x168] sm:$0xff] %v335
        %352 = vst [vmem:[#allocation3 + $0x1b0] sm:$0xff] %v336
        %353 = vst [vmem:[#allocation3 + $0x1f8] sm:$0xff] %v337
        %354 = vst [vmem:[#allocation3 + $0x240] sm:$0xff] %v338
        %355 = vst [vmem:[#allocation3 + $0x288] sm:$0xff] %v339
        %356 = vst [vmem:[#allocation3 + $0x2d0] sm:$0xff] %v340
        %357 = vst [vmem:[#allocation3 + $0x318] sm:$0xff] %v341
        %358 = vst [vmem:[#allocation3 + $0x360] sm:$0xff] %v342
        %359 = vst [vmem:[#allocation3 + $0x3a8] sm:$0xff] %v343
        %360 = vst [vmem:[#allocation3 + $0x3f0] sm:$0xff] %v344
        %361 = vst [vmem:[#allocation3 + $0x438] sm:$0xff] %v345
        %v362 = vld [vmem:[#allocation2 + $0x8] sm:$0xff]
        %v363 = vld [vmem:[#allocation2 + $0x10] sm:$0xff]
        %v364 = vld [vmem:[#allocation2 + $0x18] sm:$0xff]
        %v365 = vld [vmem:[#allocation2 + $0x20] sm:$0xff]
        %v366 = vld [vmem:[#allocation2 + $0x28] sm:$0xff]
        %v367 = vld [vmem:[#allocation2 + $0x30] sm:$0xff]
        %v368 = vld [vmem:[#allocation2 + $0x38] sm:$0xff]
        %v369 = vld [vmem:[#allocation2 + $0x40] sm:$0xff]
        %v370 = vld [vmem:[#allocation2 + $0x48] sm:$0xff]
        %v371 = vld [vmem:[#allocation2 + $0x50] sm:$0xff]
        %v372 = vld [vmem:[#allocation2 + $0x58] sm:$0xff]
        %v373 = vld [vmem:[#allocation2 + $0x60] sm:$0xff]
        %v374 = vld [vmem:[#allocation2 + $0x68] sm:$0xff]
        %v375 = vld [vmem:[#allocation2 + $0x70] sm:$0xff]
        %v376 = vld [vmem:[#allocation2 + $0x78] sm:$0xff]
        %v377 = vld [vmem:[#allocation2 + $0x80] sm:$0xff]
        %v378 = vld [vmem:[%s1 + $0x8] sm:$0xff]
        %v379 = vld [vmem:[%s1 + $0x50] sm:$0xff]
        %v380 = vld [vmem:[%s1 + $0x98] sm:$0xff]
        %v381 = vld [vmem:[%s1 + $0xe0] sm:$0xff]
        %v382 = vld [vmem:[%s1 + $0x128] sm:$0xff]
        %v383 = vld [vmem:[%s1 + $0x170] sm:$0xff]
        %v384 = vld [vmem:[%s1 + $0x1b8] sm:$0xff]
        %v385 = vld [vmem:[%s1 + $0x200] sm:$0xff]
        %v386 = vld [vmem:[%s1 + $0x248] sm:$0xff]
        %v387 = vld [vmem:[%s1 + $0x290] sm:$0xff]
        %v388 = vld [vmem:[%s1 + $0x2d8] sm:$0xff]
        %v389 = vld [vmem:[%s1 + $0x320] sm:$0xff]
        %v390 = vld [vmem:[%s1 + $0x368] sm:$0xff]
        %v391 = vld [vmem:[%s1 + $0x3b0] sm:$0xff]
        %v392 = vld [vmem:[%s1 + $0x3f8] sm:$0xff]
        %v393 = vld [vmem:[%s1 + $0x440] sm:$0xff]
        %v394 = vmul.f32 %v362, %v378
        %v395 = vmul.f32 %v363, %v379
        %v396 = vmul.f32 %v364, %v380
        %v397 = vmul.f32 %v365, %v381
        %v398 = vmul.f32 %v366, %v382
        %v399 = vmul.f32 %v367, %v383
        %v400 = vmul.f32 %v368, %v384
        %v401 = vmul.f32 %v369, %v385
        %v402 = vmul.f32 %v370, %v386
        %v403 = vmul.f32 %v371, %v387
        %v404 = vmul.f32 %v372, %v388
        %v405 = vmul.f32 %v373, %v389
        %v406 = vmul.f32 %v374, %v390
        %v407 = vmul.f32 %v375, %v391
        %v408 = vmul.f32 %v376, %v392
        %v409 = vmul.f32 %v377, %v393
        %410 = vst [vmem:[#allocation3 + $0x8] sm:$0xff] %v394
        %411 = vst [vmem:[#allocation3 + $0x50] sm:$0xff] %v395
        %412 = vst [vmem:[#allocation3 + $0x98] sm:$0xff] %v396
        %413 = vst [vmem:[#allocation3 + $0xe0] sm:$0xff] %v397
        %414 = vst [vmem:[#allocation3 + $0x128] sm:$0xff] %v398
        %415 = vst [vmem:[#allocation3 + $0x170] sm:$0xff] %v399
        %416 = vst [vmem:[#allocation3 + $0x1b8] sm:$0xff] %v400
        %417 = vst [vmem:[#allocation3 + $0x200] sm:$0xff] %v401
        %418 = vst [vmem:[#allocation3 + $0x248] sm:$0xff] %v402
        %419 = vst [vmem:[#allocation3 + $0x290] sm:$0xff] %v403
        %420 = vst [vmem:[#allocation3 + $0x2d8] sm:$0xff] %v404
        %421 = vst [vmem:[#allocation3 + $0x320] sm:$0xff] %v405
        %422 = vst [vmem:[#allocation3 + $0x368] sm:$0xff] %v406
        %423 = vst [vmem:[#allocation3 + $0x3b0] sm:$0xff] %v407
        %424 = vst [vmem:[#allocation3 + $0x3f8] sm:$0xff] %v408
        %425 = vst [vmem:[#allocation3 + $0x440] sm:$0xff] %v409
        %v426 = vld [vmem:[#allocation2 + $0x9] sm:$0xff]
        %v427 = vld [vmem:[#allocation2 + $0x11] sm:$0xff]
        %v428 = vld [vmem:[#allocation2 + $0x19] sm:$0xff]
        %v429 = vld [vmem:[#allocation2 + $0x21] sm:$0xff]
        %v430 = vld [vmem:[#allocation2 + $0x29] sm:$0xff]
        %v431 = vld [vmem:[#allocation2 + $0x31] sm:$0xff]
        %v432 = vld [vmem:[#allocation2 + $0x39] sm:$0xff]
        %v433 = vld [vmem:[#allocation2 + $0x41] sm:$0xff]
        %v434 = vld [vmem:[#allocation2 + $0x49] sm:$0xff]
        %v435 = vld [vmem:[#allocation2 + $0x51] sm:$0xff]
        %v436 = vld [vmem:[#allocation2 + $0x59] sm:$0xff]
        %v437 = vld [vmem:[#allocation2 + $0x61] sm:$0xff]
        %v438 = vld [vmem:[#allocation2 + $0x69] sm:$0xff]
        %v439 = vld [vmem:[#allocation2 + $0x71] sm:$0xff]
        %v440 = vld [vmem:[#allocation2 + $0x79] sm:$0xff]
        %v441 = vld [vmem:[#allocation2 + $0x81] sm:$0xff]
        %v442 = vld [vmem:[%s1 + $0x10] sm:$0xff]
        %v443 = vld [vmem:[%s1 + $0x58] sm:$0xff]
        %v444 = vld [vmem:[%s1 + $0xa0] sm:$0xff]
        %v445 = vld [vmem:[%s1 + $0xe8] sm:$0xff]
        %v446 = vld [vmem:[%s1 + $0x130] sm:$0xff]
        %v447 = vld [vmem:[%s1 + $0x178] sm:$0xff]
        %v448 = vld [vmem:[%s1 + $0x1c0] sm:$0xff]
        %v449 = vld [vmem:[%s1 + $0x208] sm:$0xff]
        %v450 = vld [vmem:[%s1 + $0x250] sm:$0xff]
        %v451 = vld [vmem:[%s1 + $0x298] sm:$0xff]
        %v452 = vld [vmem:[%s1 + $0x2e0] sm:$0xff]
        %v453 = vld [vmem:[%s1 + $0x328] sm:$0xff]
        %v454 = vld [vmem:[%s1 + $0x370] sm:$0xff]
        %v455 = vld [vmem:[%s1 + $0x3b8] sm:$0xff]
        %v456 = vld [vmem:[%s1 + $0x400] sm:$0xff]
        %v457 = vld [vmem:[%s1 + $0x448] sm:$0xff]
        %v458 = vmul.f32 %v426, %v442
        %v459 = vmul.f32 %v427, %v443
        %v460 = vmul.f32 %v428, %v444
        %v461 = vmul.f32 %v429, %v445
        %v462 = vmul.f32 %v430, %v446
        %v463 = vmul.f32 %v431, %v447
        %v464 = vmul.f32 %v432, %v448
        %v465 = vmul.f32 %v433, %v449
        %v466 = vmul.f32 %v434, %v450
        %v467 = vmul.f32 %v435, %v451
        %v468 = vmul.f32 %v436, %v452
        %v469 = vmul.f32 %v437, %v453
        %v470 = vmul.f32 %v438, %v454
        %v471 = vmul.f32 %v439, %v455
        %v472 = vmul.f32 %v440, %v456
        %v473 = vmul.f32 %v441, %v457
        %474 = vst [vmem:[#allocation3 + $0x10] sm:$0xff] %v458
        %475 = vst [vmem:[#allocation3 + $0x58] sm:$0xff] %v459
        %476 = vst [vmem:[#allocation3 + $0xa0] sm:$0xff] %v460
        %477 = vst [vmem:[#allocation3 + $0xe8] sm:$0xff] %v461
        %478 = vst [vmem:[#allocation3 + $0x130] sm:$0xff] %v462
        %479 = vst [vmem:[#allocation3 + $0x178] sm:$0xff] %v463
        %480 = vst [vmem:[#allocation3 + $0x1c0] sm:$0xff] %v464
        %481 = vst [vmem:[#allocation3 + $0x208] sm:$0xff] %v465
        %482 = vst [vmem:[#allocation3 + $0x250] sm:$0xff] %v466
        %483 = vst [vmem:[#allocation3 + $0x298] sm:$0xff] %v467
        %484 = vst [vmem:[#allocation3 + $0x2e0] sm:$0xff] %v468
        %485 = vst [vmem:[#allocation3 + $0x328] sm:$0xff] %v469
        %486 = vst [vmem:[#allocation3 + $0x370] sm:$0xff] %v470
        %487 = vst [vmem:[#allocation3 + $0x3b8] sm:$0xff] %v471
        %488 = vst [vmem:[#allocation3 + $0x400] sm:$0xff] %v472
        %489 = vst [vmem:[#allocation3 + $0x448] sm:$0xff] %v473
        %v490 = vld [vmem:[#allocation2 + $0x17] sm:$0xff]
        %v491 = vld [vmem:[#allocation2 + $0x1f] sm:$0xff]
        %v492 = vld [vmem:[#allocation2 + $0x27] sm:$0xff]
        %v493 = vld [vmem:[#allocation2 + $0x2f] sm:$0xff]
        %v494 = vld [vmem:[#allocation2 + $0x37] sm:$0xff]
        %v495 = vld [vmem:[#allocation2 + $0x3f] sm:$0xff]
        %v496 = vld [vmem:[#allocation2 + $0x47] sm:$0xff]
        %v497 = vld [vmem:[#allocation2 + $0x4f] sm:$0xff]
        %v498 = vld [vmem:[#allocation2 + $0x57] sm:$0xff]
        %v499 = vld [vmem:[#allocation2 + $0x5f] sm:$0xff]
        %v500 = vld [vmem:[#allocation2 + $0x67] sm:$0xff]
        %v501 = vld [vmem:[#allocation2 + $0x6f] sm:$0xff]
        %v502 = vld [vmem:[#allocation2 + $0x77] sm:$0xff]
        %v503 = vld [vmem:[#allocation2 + $0x7f] sm:$0xff]
        %v504 = vld [vmem:[#allocation2 + $0x87] sm:$0xff]
        %v505 = vld [vmem:[#allocation2 + $0x8f] sm:$0xff]
        %v506 = vld [vmem:[%s1 + $0x18] sm:$0xff]
        %v507 = vld [vmem:[%s1 + $0x60] sm:$0xff]
        %v508 = vld [vmem:[%s1 + $0xa8] sm:$0xff]
        %v509 = vld [vmem:[%s1 + $0xf0] sm:$0xff]
        %v510 = vld [vmem:[%s1 + $0x138] sm:$0xff]
        %v511 = vld [vmem:[%s1 + $0x180] sm:$0xff]
        %v512 = vld [vmem:[%s1 + $0x1c8] sm:$0xff]
        %v513 = vld [vmem:[%s1 + $0x210] sm:$0xff]
        %v514 = vld [vmem:[%s1 + $0x258] sm:$0xff]
        %v515 = vld [vmem:[%s1 + $0x2a0] sm:$0xff]
        %v516 = vld [vmem:[%s1 + $0x2e8] sm:$0xff]
        %v517 = vld [vmem:[%s1 + $0x330] sm:$0xff]
        %v518 = vld [vmem:[%s1 + $0x378] sm:$0xff]
        %v519 = vld [vmem:[%s1 + $0x3c0] sm:$0xff]
        %v520 = vld [vmem:[%s1 + $0x408] sm:$0xff]
        %v521 = vld [vmem:[%s1 + $0x450] sm:$0xff]
        %v522 = vmul.f32 %v490, %v506
        %v523 = vmul.f32 %v491, %v507
        %v524 = vmul.f32 %v492, %v508
        %v525 = vmul.f32 %v493, %v509
        %v526 = vmul.f32 %v494, %v510
        %v527 = vmul.f32 %v495, %v511
        %v528 = vmul.f32 %v496, %v512
        %v529 = vmul.f32 %v497, %v513
        %v530 = vmul.f32 %v498, %v514
        %v531 = vmul.f32 %v499, %v515
        %v532 = vmul.f32 %v500, %v516
        %v533 = vmul.f32 %v501, %v517
        %v534 = vmul.f32 %v502, %v518
        %v535 = vmul.f32 %v503, %v519
        %v536 = vmul.f32 %v504, %v520
        %v537 = vmul.f32 %v505, %v521
        %538 = vst [vmem:[#allocation3 + $0x18] sm:$0xff] %v522
        %539 = vst [vmem:[#allocation3 + $0x60] sm:$0xff] %v523
        %540 = vst [vmem:[#allocation3 + $0xa8] sm:$0xff] %v524
        %541 = vst [vmem:[#allocation3 + $0xf0] sm:$0xff] %v525
        %542 = vst [vmem:[#allocation3 + $0x138] sm:$0xff] %v526
        %543 = vst [vmem:[#allocation3 + $0x180] sm:$0xff] %v527
        %544 = vst [vmem:[#allocation3 + $0x1c8] sm:$0xff] %v528
        %545 = vst [vmem:[#allocation3 + $0x210] sm:$0xff] %v529
        %546 = vst [vmem:[#allocation3 + $0x258] sm:$0xff] %v530
        %547 = vst [vmem:[#allocation3 + $0x2a0] sm:$0xff] %v531
        %548 = vst [vmem:[#allocation3 + $0x2e8] sm:$0xff] %v532
        %549 = vst [vmem:[#allocation3 + $0x330] sm:$0xff] %v533
        %550 = vst [vmem:[#allocation3 + $0x378] sm:$0xff] %v534
        %551 = vst [vmem:[#allocation3 + $0x3c0] sm:$0xff] %v535
        %552 = vst [vmem:[#allocation3 + $0x408] sm:$0xff] %v536
        %553 = vst [vmem:[#allocation3 + $0x450] sm:$0xff] %v537
        %v554 = vld [vmem:[#allocation2 + $0x18] sm:$0xff]
        %v555 = vld [vmem:[#allocation2 + $0x20] sm:$0xff]
        %v556 = vld [vmem:[#allocation2 + $0x28] sm:$0xff]
        %v557 = vld [vmem:[#allocation2 + $0x30] sm:$0xff]
        %v558 = vld [vmem:[#allocation2 + $0x38] sm:$0xff]
        %v559 = vld [vmem:[#allocation2 + $0x40] sm:$0xff]
        %v560 = vld [vmem:[#allocation2 + $0x48] sm:$0xff]
        %v561 = vld [vmem:[#allocation2 + $0x50] sm:$0xff]
        %v562 = vld [vmem:[#allocation2 + $0x58] sm:$0xff]
        %v563 = vld [vmem:[#allocation2 + $0x60] sm:$0xff]
        %v564 = vld [vmem:[#allocation2 + $0x68] sm:$0xff]
        %v565 = vld [vmem:[#allocation2 + $0x70] sm:$0xff]
        %v566 = vld [vmem:[#allocation2 + $0x78] sm:$0xff]
        %v567 = vld [vmem:[#allocation2 + $0x80] sm:$0xff]
        %v568 = vld [vmem:[#allocation2 + $0x88] sm:$0xff]
        %v569 = vld [vmem:[#allocation2 + $0x90] sm:$0xff]
        %v570 = vld [vmem:[%s1 + $0x20] sm:$0xff]
        %v571 = vld [vmem:[%s1 + $0x68] sm:$0xff]
        %v572 = vld [vmem:[%s1 + $0xb0] sm:$0xff]
        %v573 = vld [vmem:[%s1 + $0xf8] sm:$0xff]
        %v574 = vld [vmem:[%s1 + $0x140] sm:$0xff]
        %v575 = vld [vmem:[%s1 + $0x188] sm:$0xff]
        %v576 = vld [vmem:[%s1 + $0x1d0] sm:$0xff]
        %v577 = vld [vmem:[%s1 + $0x218] sm:$0xff]
        %v578 = vld [vmem:[%s1 + $0x260] sm:$0xff]
        %v579 = vld [vmem:[%s1 + $0x2a8] sm:$0xff]
        %v580 = vld [vmem:[%s1 + $0x2f0] sm:$0xff]
        %v581 = vld [vmem:[%s1 + $0x338] sm:$0xff]
        %v582 = vld [vmem:[%s1 + $0x380] sm:$0xff]
        %v583 = vld [vmem:[%s1 + $0x3c8] sm:$0xff]
        %v584 = vld [vmem:[%s1 + $0x410] sm:$0xff]
        %v585 = vld [vmem:[%s1 + $0x458] sm:$0xff]
        %v586 = vmul.f32 %v554, %v570
        %v587 = vmul.f32 %v555, %v571
        %v588 = vmul.f32 %v556, %v572
        %v589 = vmul.f32 %v557, %v573
        %v590 = vmul.f32 %v558, %v574
        %v591 = vmul.f32 %v559, %v575
        %v592 = vmul.f32 %v560, %v576
        %v593 = vmul.f32 %v561, %v577
        %v594 = vmul.f32 %v562, %v578
        %v595 = vmul.f32 %v563, %v579
        %v596 = vmul.f32 %v564, %v580
        %v597 = vmul.f32 %v565, %v581
        %v598 = vmul.f32 %v566, %v582
        %v599 = vmul.f32 %v567, %v583
        %v600 = vmul.f32 %v568, %v584
        %v601 = vmul.f32 %v569, %v585
        %602 = vst [vmem:[#allocation3 + $0x20] sm:$0xff] %v586
        %603 = vst [vmem:[#allocation3 + $0x68] sm:$0xff] %v587
        %604 = vst [vmem:[#allocation3 + $0xb0] sm:$0xff] %v588
        %605 = vst [vmem:[#allocation3 + $0xf8] sm:$0xff] %v589
        %606 = vst [vmem:[#allocation3 + $0x140] sm:$0xff] %v590
        %607 = vst [vmem:[#allocation3 + $0x188] sm:$0xff] %v591
        %608 = vst [vmem:[#allocation3 + $0x1d0] sm:$0xff] %v592
        %609 = vst [vmem:[#allocation3 + $0x218] sm:$0xff] %v593
        %610 = vst [vmem:[#allocation3 + $0x260] sm:$0xff] %v594
        %611 = vst [vmem:[#allocation3 + $0x2a8] sm:$0xff] %v595
        %612 = vst [vmem:[#allocation3 + $0x2f0] sm:$0xff] %v596
        %613 = vst [vmem:[#allocation3 + $0x338] sm:$0xff] %v597
        %614 = vst [vmem:[#allocation3 + $0x380] sm:$0xff] %v598
        %615 = vst [vmem:[#allocation3 + $0x3c8] sm:$0xff] %v599
        %616 = vst [vmem:[#allocation3 + $0x410] sm:$0xff] %v600
        %617 = vst [vmem:[#allocation3 + $0x458] sm:$0xff] %v601
        %v618 = vld [vmem:[#allocation2 + $0x19] sm:$0xff]
        %v619 = vld [vmem:[#allocation2 + $0x21] sm:$0xff]
        %v620 = vld [vmem:[#allocation2 + $0x29] sm:$0xff]
        %v621 = vld [vmem:[#allocation2 + $0x31] sm:$0xff]
        %v622 = vld [vmem:[#allocation2 + $0x39] sm:$0xff]
        %v623 = vld [vmem:[#allocation2 + $0x41] sm:$0xff]
        %v624 = vld [vmem:[#allocation2 + $0x49] sm:$0xff]
        %v625 = vld [vmem:[#allocation2 + $0x51] sm:$0xff]
        %v626 = vld [vmem:[#allocation2 + $0x59] sm:$0xff]
        %v627 = vld [vmem:[#allocation2 + $0x61] sm:$0xff]
        %v628 = vld [vmem:[#allocation2 + $0x69] sm:$0xff]
        %v629 = vld [vmem:[#allocation2 + $0x71] sm:$0xff]
        %v630 = vld [vmem:[#allocation2 + $0x79] sm:$0xff]
        %v631 = vld [vmem:[#allocation2 + $0x81] sm:$0xff]
        %v632 = vld [vmem:[#allocation2 + $0x89] sm:$0xff]
        %v633 = vld [vmem:[#allocation2 + $0x91] sm:$0xff]
        %v634 = vld [vmem:[%s1 + $0x28] sm:$0xff]
        %v635 = vld [vmem:[%s1 + $0x70] sm:$0xff]
        %v636 = vld [vmem:[%s1 + $0xb8] sm:$0xff]
        %v637 = vld [vmem:[%s1 + $0x100] sm:$0xff]
        %v638 = vld [vmem:[%s1 + $0x148] sm:$0xff]
        %v639 = vld [vmem:[%s1 + $0x190] sm:$0xff]
        %v640 = vld [vmem:[%s1 + $0x1d8] sm:$0xff]
        %v641 = vld [vmem:[%s1 + $0x220] sm:$0xff]
        %v642 = vld [vmem:[%s1 + $0x268] sm:$0xff]
        %v643 = vld [vmem:[%s1 + $0x2b0] sm:$0xff]
        %v644 = vld [vmem:[%s1 + $0x2f8] sm:$0xff]
        %v645 = vld [vmem:[%s1 + $0x340] sm:$0xff]
        %v646 = vld [vmem:[%s1 + $0x388] sm:$0xff]
        %v647 = vld [vmem:[%s1 + $0x3d0] sm:$0xff]
        %v648 = vld [vmem:[%s1 + $0x418] sm:$0xff]
        %v649 = vld [vmem:[%s1 + $0x460] sm:$0xff]
        %v650 = vmul.f32 %v618, %v634
        %v651 = vmul.f32 %v619, %v635
        %v652 = vmul.f32 %v620, %v636
        %v653 = vmul.f32 %v621, %v637
        %v654 = vmul.f32 %v622, %v638
        %v655 = vmul.f32 %v623, %v639
        %v656 = vmul.f32 %v624, %v640
        %v657 = vmul.f32 %v625, %v641
        %v658 = vmul.f32 %v626, %v642
        %v659 = vmul.f32 %v627, %v643
        %v660 = vmul.f32 %v628, %v644
        %v661 = vmul.f32 %v629, %v645
        %v662 = vmul.f32 %v630, %v646
        %v663 = vmul.f32 %v631, %v647
        %v664 = vmul.f32 %v632, %v648
        %v665 = vmul.f32 %v633, %v649
        %666 = vst [vmem:[#allocation3 + $0x28] sm:$0xff] %v650
        %667 = vst [vmem:[#allocation3 + $0x70] sm:$0xff] %v651
        %668 = vst [vmem:[#allocation3 + $0xb8] sm:$0xff] %v652
        %669 = vst [vmem:[#allocation3 + $0x100] sm:$0xff] %v653
        %670 = vst [vmem:[#allocation3 + $0x148] sm:$0xff] %v654
        %671 = vst [vmem:[#allocation3 + $0x190] sm:$0xff] %v655
        %672 = vst [vmem:[#allocation3 + $0x1d8] sm:$0xff] %v656
        %673 = vst [vmem:[#allocation3 + $0x220] sm:$0xff] %v657
        %674 = vst [vmem:[#allocation3 + $0x268] sm:$0xff] %v658
        %675 = vst [vmem:[#allocation3 + $0x2b0] sm:$0xff] %v659
        %676 = vst [vmem:[#allocation3 + $0x2f8] sm:$0xff] %v660
        %677 = vst [vmem:[#allocation3 + $0x340] sm:$0xff] %v661
        %678 = vst [vmem:[#allocation3 + $0x388] sm:$0xff] %v662
        %679 = vst [vmem:[#allocation3 + $0x3d0] sm:$0xff] %v663
        %680 = vst [vmem:[#allocation3 + $0x418] sm:$0xff] %v664
        %681 = vst [vmem:[#allocation3 + $0x460] sm:$0xff] %v665
        %v682 = vld [vmem:[#allocation2 + $0x27] sm:$0xff]
        %v683 = vld [vmem:[#allocation2 + $0x2f] sm:$0xff]
        %v684 = vld [vmem:[#allocation2 + $0x37] sm:$0xff]
        %v685 = vld [vmem:[#allocation2 + $0x3f] sm:$0xff]
        %v686 = vld [vmem:[#allocation2 + $0x47] sm:$0xff]
        %v687 = vld [vmem:[#allocation2 + $0x4f] sm:$0xff]
        %v688 = vld [vmem:[#allocation2 + $0x57] sm:$0xff]
        %v689 = vld [vmem:[#allocation2 + $0x5f] sm:$0xff]
        %v690 = vld [vmem:[#allocation2 + $0x67] sm:$0xff]
        %v691 = vld [vmem:[#allocation2 + $0x6f] sm:$0xff]
        %v692 = vld [vmem:[#allocation2 + $0x77] sm:$0xff]
        %v693 = vld [vmem:[#allocation2 + $0x7f] sm:$0xff]
        %v694 = vld [vmem:[#allocation2 + $0x87] sm:$0xff]
        %v695 = vld [vmem:[#allocation2 + $0x8f] sm:$0xff]
        %v696 = vld [vmem:[#allocation2 + $0x97] sm:$0xff]
        %v697 = vld [vmem:[#allocation2 + $0x9f] sm:$0xff]
        %v698 = vld [vmem:[%s1 + $0x30] sm:$0xff]
        %v699 = vld [vmem:[%s1 + $0x78] sm:$0xff]
        %v700 = vld [vmem:[%s1 + $0xc0] sm:$0xff]
        %v701 = vld [vmem:[%s1 + $0x108] sm:$0xff]
        %v702 = vld [vmem:[%s1 + $0x150] sm:$0xff]
        %v703 = vld [vmem:[%s1 + $0x198] sm:$0xff]
        %v704 = vld [vmem:[%s1 + $0x1e0] sm:$0xff]
        %v705 = vld [vmem:[%s1 + $0x228] sm:$0xff]
        %v706 = vld [vmem:[%s1 + $0x270] sm:$0xff]
        %v707 = vld [vmem:[%s1 + $0x2b8] sm:$0xff]
        %v708 = vld [vmem:[%s1 + $0x300] sm:$0xff]
        %v709 = vld [vmem:[%s1 + $0x348] sm:$0xff]
        %v710 = vld [vmem:[%s1 + $0x390] sm:$0xff]
        %v711 = vld [vmem:[%s1 + $0x3d8] sm:$0xff]
        %v712 = vld [vmem:[%s1 + $0x420] sm:$0xff]
        %v713 = vld [vmem:[%s1 + $0x468] sm:$0xff]
        %v714 = vmul.f32 %v682, %v698
        %v715 = vmul.f32 %v683, %v699
        %v716 = vmul.f32 %v684, %v700
        %v717 = vmul.f32 %v685, %v701
        %v718 = vmul.f32 %v686, %v702
        %v719 = vmul.f32 %v687, %v703
        %v720 = vmul.f32 %v688, %v704
        %v721 = vmul.f32 %v689, %v705
        %v722 = vmul.f32 %v690, %v706
        %v723 = vmul.f32 %v691, %v707
        %v724 = vmul.f32 %v692, %v708
        %v725 = vmul.f32 %v693, %v709
        %v726 = vmul.f32 %v694, %v710
        %v727 = vmul.f32 %v695, %v711
        %v728 = vmul.f32 %v696, %v712
        %v729 = vmul.f32 %v697, %v713
        %730 = vst [vmem:[#allocation3 + $0x30] sm:$0xff] %v714
        %731 = vst [vmem:[#allocation3 + $0x78] sm:$0xff] %v715
        %732 = vst [vmem:[#allocation3 + $0xc0] sm:$0xff] %v716
        %733 = vst [vmem:[#allocation3 + $0x108] sm:$0xff] %v717
        %734 = vst [vmem:[#allocation3 + $0x150] sm:$0xff] %v718
        %735 = vst [vmem:[#allocation3 + $0x198] sm:$0xff] %v719
        %736 = vst [vmem:[#allocation3 + $0x1e0] sm:$0xff] %v720
        %737 = vst [vmem:[#allocation3 + $0x228] sm:$0xff] %v721
        %738 = vst [vmem:[#allocation3 + $0x270] sm:$0xff] %v722
        %739 = vst [vmem:[#allocation3 + $0x2b8] sm:$0xff] %v723
        %740 = vst [vmem:[#allocation3 + $0x300] sm:$0xff] %v724
        %741 = vst [vmem:[#allocation3 + $0x348] sm:$0xff] %v725
        %742 = vst [vmem:[#allocation3 + $0x390] sm:$0xff] %v726
        %743 = vst [vmem:[#allocation3 + $0x3d8] sm:$0xff] %v727
        %744 = vst [vmem:[#allocation3 + $0x420] sm:$0xff] %v728
        %745 = vst [vmem:[#allocation3 + $0x468] sm:$0xff] %v729
        %v746 = vld [vmem:[#allocation2 + $0x28] sm:$0xff]
        %v747 = vld [vmem:[#allocation2 + $0x30] sm:$0xff]
        %v748 = vld [vmem:[#allocation2 + $0x38] sm:$0xff]
        %v749 = vld [vmem:[#allocation2 + $0x40] sm:$0xff]
        %v750 = vld [vmem:[#allocation2 + $0x48] sm:$0xff]
        %v751 = vld [vmem:[#allocation2 + $0x50] sm:$0xff]
        %v752 = vld [vmem:[#allocation2 + $0x58] sm:$0xff]
        %v753 = vld [vmem:[#allocation2 + $0x60] sm:$0xff]
        %v754 = vld [vmem:[#allocation2 + $0x68] sm:$0xff]
        %v755 = vld [vmem:[#allocation2 + $0x70] sm:$0xff]
        %v756 = vld [vmem:[#allocation2 + $0x78] sm:$0xff]
        %v757 = vld [vmem:[#allocation2 + $0x80] sm:$0xff]
        %v758 = vld [vmem:[#allocation2 + $0x88] sm:$0xff]
        %v759 = vld [vmem:[#allocation2 + $0x90] sm:$0xff]
        %v760 = vld [vmem:[#allocation2 + $0x98] sm:$0xff]
        %v761 = vld [vmem:[#allocation2 + $0xa0] sm:$0xff]
        %v762 = vld [vmem:[%s1 + $0x38] sm:$0xff]
        %v763 = vld [vmem:[%s1 + $0x80] sm:$0xff]
        %v764 = vld [vmem:[%s1 + $0xc8] sm:$0xff]
        %v765 = vld [vmem:[%s1 + $0x110] sm:$0xff]
        %v766 = vld [vmem:[%s1 + $0x158] sm:$0xff]
        %v767 = vld [vmem:[%s1 + $0x1a0] sm:$0xff]
        %v768 = vld [vmem:[%s1 + $0x1e8] sm:$0xff]
        %v769 = vld [vmem:[%s1 + $0x230] sm:$0xff]
        %v770 = vld [vmem:[%s1 + $0x278] sm:$0xff]
        %v771 = vld [vmem:[%s1 + $0x2c0] sm:$0xff]
        %v772 = vld [vmem:[%s1 + $0x308] sm:$0xff]
        %v773 = vld [vmem:[%s1 + $0x350] sm:$0xff]
        %v774 = vld [vmem:[%s1 + $0x398] sm:$0xff]
        %v775 = vld [vmem:[%s1 + $0x3e0] sm:$0xff]
        %v776 = vld [vmem:[%s1 + $0x428] sm:$0xff]
        %v777 = vld [vmem:[%s1 + $0x470] sm:$0xff]
        %v778 = vmul.f32 %v746, %v762
        %v779 = vmul.f32 %v747, %v763
        %v780 = vmul.f32 %v748, %v764
        %v781 = vmul.f32 %v749, %v765
        %v782 = vmul.f32 %v750, %v766
        %v783 = vmul.f32 %v751, %v767
        %v784 = vmul.f32 %v752, %v768
        %v785 = vmul.f32 %v753, %v769
        %v786 = vmul.f32 %v754, %v770
        %v787 = vmul.f32 %v755, %v771
        %v788 = vmul.f32 %v756, %v772
        %v789 = vmul.f32 %v757, %v773
        %v790 = vmul.f32 %v758, %v774
        %v791 = vmul.f32 %v759, %v775
        %v792 = vmul.f32 %v760, %v776
        %v793 = vmul.f32 %v761, %v777
        %794 = vst [vmem:[#allocation3 + $0x38] sm:$0xff] %v778
        %795 = vst [vmem:[#allocation3 + $0x80] sm:$0xff] %v779
        %796 = vst [vmem:[#allocation3 + $0xc8] sm:$0xff] %v780
        %797 = vst [vmem:[#allocation3 + $0x110] sm:$0xff] %v781
        %798 = vst [vmem:[#allocation3 + $0x158] sm:$0xff] %v782
        %799 = vst [vmem:[#allocation3 + $0x1a0] sm:$0xff] %v783
        %800 = vst [vmem:[#allocation3 + $0x1e8] sm:$0xff] %v784
        %801 = vst [vmem:[#allocation3 + $0x230] sm:$0xff] %v785
        %802 = vst [vmem:[#allocation3 + $0x278] sm:$0xff] %v786
        %803 = vst [vmem:[#allocation3 + $0x2c0] sm:$0xff] %v787
        %804 = vst [vmem:[#allocation3 + $0x308] sm:$0xff] %v788
        %805 = vst [vmem:[#allocation3 + $0x350] sm:$0xff] %v789
        %806 = vst [vmem:[#allocation3 + $0x398] sm:$0xff] %v790
        %807 = vst [vmem:[#allocation3 + $0x3e0] sm:$0xff] %v791
        %808 = vst [vmem:[#allocation3 + $0x428] sm:$0xff] %v792
        %809 = vst [vmem:[#allocation3 + $0x470] sm:$0xff] %v793
        %v810 = vld [vmem:[#allocation2 + $0x29] sm:$0xff]
        %v811 = vld [vmem:[#allocation2 + $0x31] sm:$0xff]
        %v812 = vld [vmem:[#allocation2 + $0x39] sm:$0xff]
        %v813 = vld [vmem:[#allocation2 + $0x41] sm:$0xff]
        %v814 = vld [vmem:[#allocation2 + $0x49] sm:$0xff]
        %v815 = vld [vmem:[#allocation2 + $0x51] sm:$0xff]
        %v816 = vld [vmem:[#allocation2 + $0x59] sm:$0xff]
        %v817 = vld [vmem:[#allocation2 + $0x61] sm:$0xff]
        %v818 = vld [vmem:[#allocation2 + $0x69] sm:$0xff]
        %v819 = vld [vmem:[#allocation2 + $0x71] sm:$0xff]
        %v820 = vld [vmem:[#allocation2 + $0x79] sm:$0xff]
        %v821 = vld [vmem:[#allocation2 + $0x81] sm:$0xff]
        %v822 = vld [vmem:[#allocation2 + $0x89] sm:$0xff]
        %v823 = vld [vmem:[#allocation2 + $0x91] sm:$0xff]
        %v824 = vld [vmem:[#allocation2 + $0x99] sm:$0xff]
        %v825 = vld [vmem:[#allocation2 + $0xa1] sm:$0xff]
        %v826 = vld [vmem:[%s1 + $0x40] sm:$0xff]
        %v827 = vld [vmem:[%s1 + $0x88] sm:$0xff]
        %v828 = vld [vmem:[%s1 + $0xd0] sm:$0xff]
        %v829 = vld [vmem:[%s1 + $0x118] sm:$0xff]
        %v830 = vld [vmem:[%s1 + $0x160] sm:$0xff]
        %v831 = vld [vmem:[%s1 + $0x1a8] sm:$0xff]
        %v832 = vld [vmem:[%s1 + $0x1f0] sm:$0xff]
        %v833 = vld [vmem:[%s1 + $0x238] sm:$0xff]
        %v834 = vld [vmem:[%s1 + $0x280] sm:$0xff]
        %v835 = vld [vmem:[%s1 + $0x2c8] sm:$0xff]
        %v836 = vld [vmem:[%s1 + $0x310] sm:$0xff]
        %v837 = vld [vmem:[%s1 + $0x358] sm:$0xff]
        %v838 = vld [vmem:[%s1 + $0x3a0] sm:$0xff]
        %v839 = vld [vmem:[%s1 + $0x3e8] sm:$0xff]
        %v840 = vld [vmem:[%s1 + $0x430] sm:$0xff]
        %v841 = vld [vmem:[%s1 + $0x478] sm:$0xff]
        %v842 = vmul.f32 %v810, %v826
        %v843 = vmul.f32 %v811, %v827
        %v844 = vmul.f32 %v812, %v828
        %v845 = vmul.f32 %v813, %v829
        %v846 = vmul.f32 %v814, %v830
        %v847 = vmul.f32 %v815, %v831
        %v848 = vmul.f32 %v816, %v832
        %v849 = vmul.f32 %v817, %v833
        %v850 = vmul.f32 %v818, %v834
        %v851 = vmul.f32 %v819, %v835
        %v852 = vmul.f32 %v820, %v836
        %v853 = vmul.f32 %v821, %v837
        %v854 = vmul.f32 %v822, %v838
        %v855 = vmul.f32 %v823, %v839
        %v856 = vmul.f32 %v824, %v840
        %v857 = vmul.f32 %v825, %v841
        %858 = vst [vmem:[#allocation3 + $0x40] sm:$0xff] %v842
        %859 = vst [vmem:[#allocation3 + $0x88] sm:$0xff] %v843
        %860 = vst [vmem:[#allocation3 + $0xd0] sm:$0xff] %v844
        %861 = vst [vmem:[#allocation3 + $0x118] sm:$0xff] %v845
        %862 = vst [vmem:[#allocation3 + $0x160] sm:$0xff] %v846
        %863 = vst [vmem:[#allocation3 + $0x1a8] sm:$0xff] %v847
        %864 = vst [vmem:[#allocation3 + $0x1f0] sm:$0xff] %v848
        %865 = vst [vmem:[#allocation3 + $0x238] sm:$0xff] %v849
        %866 = vst [vmem:[#allocation3 + $0x280] sm:$0xff] %v850
        %867 = vst [vmem:[#allocation3 + $0x2c8] sm:$0xff] %v851
        %868 = vst [vmem:[#allocation3 + $0x310] sm:$0xff] %v852
        %869 = vst [vmem:[#allocation3 + $0x358] sm:$0xff] %v853
        %870 = vst [vmem:[#allocation3 + $0x3a0] sm:$0xff] %v854
        %871 = vst [vmem:[#allocation3 + $0x3e8] sm:$0xff] %v855
        %872 = vst [vmem:[#allocation3 + $0x430] sm:$0xff] %v856
        %873 = vst [vmem:[#allocation3 + $0x478] sm:$0xff] %v857
        %v874 = vld [vmem:[#allocation2 + $0x87] sm:$0xff]
        %v875 = vld [vmem:[#allocation2 + $0x8f] sm:$0xff]
        %v876 = vld [vmem:[#allocation2 + $0x97] sm:$0xff]
        %v877 = vld [vmem:[#allocation2 + $0x9f] sm:$0xff]
        %v878 = vld [vmem:[#allocation2 + $0xa7] sm:$0xff]
        %v879 = vld [vmem:[#allocation2 + $0xaf] sm:$0xff]
        %v880 = vld [vmem:[#allocation2 + $0xb7] sm:$0xff]
        %v881 = vld [vmem:[#allocation2 + $0xbf] sm:$0xff]
        %v882 = vld [vmem:[#allocation2 + $0xc7] sm:$0xff]
        %v883 = vld [vmem:[#allocation2 + $0xcf] sm:$0xff]
        %v884 = vld [vmem:[#allocation2 + $0xd7] sm:$0xff]
        %v885 = vld [vmem:[#allocation2 + $0xdf] sm:$0xff]
        %v886 = vld [vmem:[#allocation2 + $0xe7] sm:$0xff]
        %v887 = vld [vmem:[#allocation2 + $0xef] sm:$0xff]
        %v888 = vld [vmem:[#allocation2 + $0xf7] sm:$0xff]
        %v889 = vld [vmem:[#allocation2 + $0xff] sm:$0xff]
        %v890 = vld [vmem:[%s1 + $0x480] sm:$0xff]
        %v891 = vld [vmem:[%s1 + $0x4c8] sm:$0xff]
        %v892 = vld [vmem:[%s1 + $0x510] sm:$0xff]
        %v893 = vld [vmem:[%s1 + $0x558] sm:$0xff]
        %v894 = vld [vmem:[%s1 + $0x5a0] sm:$0xff]
        %v895 = vld [vmem:[%s1 + $0x5e8] sm:$0xff]
        %v896 = vld [vmem:[%s1 + $0x630] sm:$0xff]
        %v897 = vld [vmem:[%s1 + $0x678] sm:$0xff]
        %v898 = vld [vmem:[%s1 + $0x6c0] sm:$0xff]
        %v899 = vld [vmem:[%s1 + $0x708] sm:$0xff]
        %v900 = vld [vmem:[%s1 + $0x750] sm:$0xff]
        %v901 = vld [vmem:[%s1 + $0x798] sm:$0xff]
        %v902 = vld [vmem:[%s1 + $0x7e0] sm:$0xff]
        %v903 = vld [vmem:[%s1 + $0x828] sm:$0xff]
        %v904 = vld [vmem:[%s1 + $0x870] sm:$0xff]
        %v905 = vld [vmem:[%s1 + $0x8b8] sm:$0xff]
        %v906 = vmul.f32 %v874, %v890
        %v907 = vmul.f32 %v875, %v891
        %v908 = vmul.f32 %v876, %v892
        %v909 = vmul.f32 %v877, %v893
        %v910 = vmul.f32 %v878, %v894
        %v911 = vmul.f32 %v879, %v895
        %v912 = vmul.f32 %v880, %v896
        %v913 = vmul.f32 %v881, %v897
        %v914 = vmul.f32 %v882, %v898
        %v915 = vmul.f32 %v883, %v899
        %v916 = vmul.f32 %v884, %v900
        %v917 = vmul.f32 %v885, %v901
        %v918 = vmul.f32 %v886, %v902
        %v919 = vmul.f32 %v887, %v903
        %v920 = vmul.f32 %v888, %v904
        %v921 = vmul.f32 %v889, %v905
        %922 = vst [vmem:[#allocation3 + $0x480] sm:$0xff] %v906
        %923 = vst [vmem:[#allocation3 + $0x4c8] sm:$0xff] %v907
        %924 = vst [vmem:[#allocation3 + $0x510] sm:$0xff] %v908
        %925 = vst [vmem:[#allocation3 + $0x558] sm:$0xff] %v909
        %926 = vst [vmem:[#allocation3 + $0x5a0] sm:$0xff] %v910
        %927 = vst [vmem:[#allocation3 + $0x5e8] sm:$0xff] %v911
        %928 = vst [vmem:[#allocation3 + $0x630] sm:$0xff] %v912
        %929 = vst [vmem:[#allocation3 + $0x678] sm:$0xff] %v913
        %930 = vst [vmem:[#allocation3 + $0x6c0] sm:$0xff] %v914
        %931 = vst [vmem:[#allocation3 + $0x708] sm:$0xff] %v915
        %932 = vst [vmem:[#allocation3 + $0x750] sm:$0xff] %v916
        %933 = vst [vmem:[#allocation3 + $0x798] sm:$0xff] %v917
        %934 = vst [vmem:[#allocation3 + $0x7e0] sm:$0xff] %v918
        %935 = vst [vmem:[#allocation3 + $0x828] sm:$0xff] %v919
        %936 = vst [vmem:[#allocation3 + $0x870] sm:$0xff] %v920
        %937 = vst [vmem:[#allocation3 + $0x8b8] sm:$0xff] %v921
        %v938 = vld [vmem:[#allocation2 + $0x88] sm:$0xff]
        %v939 = vld [vmem:[#allocation2 + $0x90] sm:$0xff]
        %v940 = vld [vmem:[#allocation2 + $0x98] sm:$0xff]
        %v941 = vld [vmem:[#allocation2 + $0xa0] sm:$0xff]
        %v942 = vld [vmem:[#allocation2 + $0xa8] sm:$0xff]
        %v943 = vld [vmem:[#allocation2 + $0xb0] sm:$0xff]
        %v944 = vld [vmem:[#allocation2 + $0xb8] sm:$0xff]
        %v945 = vld [vmem:[#allocation2 + $0xc0] sm:$0xff]
        %v946 = vld [vmem:[#allocation2 + $0xc8] sm:$0xff]
        %v947 = vld [vmem:[#allocation2 + $0xd0] sm:$0xff]
        %v948 = vld [vmem:[#allocation2 + $0xd8] sm:$0xff]
        %v949 = vld [vmem:[#allocation2 + $0xe0] sm:$0xff]
        %v950 = vld [vmem:[#allocation2 + $0xe8] sm:$0xff]
        %v951 = vld [vmem:[#allocation2 + $0xf0] sm:$0xff]
        %v952 = vld [vmem:[#allocation2 + $0xf8] sm:$0xff]
        %v953 = vld [vmem:[#allocation2 + $0x100] sm:$0xff]
        %v954 = vld [vmem:[%s1 + $0x488] sm:$0xff]
        %v955 = vld [vmem:[%s1 + $0x4d0] sm:$0xff]
        %v956 = vld [vmem:[%s1 + $0x518] sm:$0xff]
        %v957 = vld [vmem:[%s1 + $0x560] sm:$0xff]
        %v958 = vld [vmem:[%s1 + $0x5a8] sm:$0xff]
        %v959 = vld [vmem:[%s1 + $0x5f0] sm:$0xff]
        %v960 = vld [vmem:[%s1 + $0x638] sm:$0xff]
        %v961 = vld [vmem:[%s1 + $0x680] sm:$0xff]
        %v962 = vld [vmem:[%s1 + $0x6c8] sm:$0xff]
        %v963 = vld [vmem:[%s1 + $0x710] sm:$0xff]
        %v964 = vld [vmem:[%s1 + $0x758] sm:$0xff]
        %v965 = vld [vmem:[%s1 + $0x7a0] sm:$0xff]
        %v966 = vld [vmem:[%s1 + $0x7e8] sm:$0xff]
        %v967 = vld [vmem:[%s1 + $0x830] sm:$0xff]
        %v968 = vld [vmem:[%s1 + $0x878] sm:$0xff]
        %v969 = vld [vmem:[%s1 + $0x8c0] sm:$0xff]
        %v970 = vmul.f32 %v938, %v954
        %v971 = vmul.f32 %v939, %v955
        %v972 = vmul.f32 %v940, %v956
        %v973 = vmul.f32 %v941, %v957
        %v974 = vmul.f32 %v942, %v958
        %v975 = vmul.f32 %v943, %v959
        %v976 = vmul.f32 %v944, %v960
        %v977 = vmul.f32 %v945, %v961
        %v978 = vmul.f32 %v946, %v962
        %v979 = vmul.f32 %v947, %v963
        %v980 = vmul.f32 %v948, %v964
        %v981 = vmul.f32 %v949, %v965
        %v982 = vmul.f32 %v950, %v966
        %v983 = vmul.f32 %v951, %v967
        %v984 = vmul.f32 %v952, %v968
        %v985 = vmul.f32 %v953, %v969
        %986 = vst [vmem:[#allocation3 + $0x488] sm:$0xff] %v970
        %987 = vst [vmem:[#allocation3 + $0x4d0] sm:$0xff] %v971
        %988 = vst [vmem:[#allocation3 + $0x518] sm:$0xff] %v972
        %989 = vst [vmem:[#allocation3 + $0x560] sm:$0xff] %v973
        %990 = vst [vmem:[#allocation3 + $0x5a8] sm:$0xff] %v974
        %991 = vst [vmem:[#allocation3 + $0x5f0] sm:$0xff] %v975
        %992 = vst [vmem:[#allocation3 + $0x638] sm:$0xff] %v976
        %993 = vst [vmem:[#allocation3 + $0x680] sm:$0xff] %v977
        %994 = vst [vmem:[#allocation3 + $0x6c8] sm:$0xff] %v978
        %995 = vst [vmem:[#allocation3 + $0x710] sm:$0xff] %v979
        %996 = vst [vmem:[#allocation3 + $0x758] sm:$0xff] %v980
        %997 = vst [vmem:[#allocation3 + $0x7a0] sm:$0xff] %v981
        %998 = vst [vmem:[#allocation3 + $0x7e8] sm:$0xff] %v982
        %999 = vst [vmem:[#allocation3 + $0x830] sm:$0xff] %v983
        %1000 = vst [vmem:[#allocation3 + $0x878] sm:$0xff] %v984
        %1001 = vst [vmem:[#allocation3 + $0x8c0] sm:$0xff] %v985
        %v1002 = vld [vmem:[#allocation2 + $0x89] sm:$0xff]
        %v1003 = vld [vmem:[#allocation2 + $0x91] sm:$0xff]
        %v1004 = vld [vmem:[#allocation2 + $0x99] sm:$0xff]
        %v1005 = vld [vmem:[#allocation2 + $0xa1] sm:$0xff]
        %v1006 = vld [vmem:[#allocation2 + $0xa9] sm:$0xff]
        %v1007 = vld [vmem:[#allocation2 + $0xb1] sm:$0xff]
        %v1008 = vld [vmem:[#allocation2 + $0xb9] sm:$0xff]
        %v1009 = vld [vmem:[#allocation2 + $0xc1] sm:$0xff]
        %v1010 = vld [vmem:[#allocation2 + $0xc9] sm:$0xff]
        %v1011 = vld [vmem:[#allocation2 + $0xd1] sm:$0xff]
        %v1012 = vld [vmem:[#allocation2 + $0xd9] sm:$0xff]
        %v1013 = vld [vmem:[#allocation2 + $0xe1] sm:$0xff]
        %v1014 = vld [vmem:[#allocation2 + $0xe9] sm:$0xff]
        %v1015 = vld [vmem:[#allocation2 + $0xf1] sm:$0xff]
        %v1016 = vld [vmem:[#allocation2 + $0xf9] sm:$0xff]
        %v1017 = vld [vmem:[#allocation2 + $0x101] sm:$0xff]
        %v1018 = vld [vmem:[%s1 + $0x490] sm:$0xff]
        %v1019 = vld [vmem:[%s1 + $0x4d8] sm:$0xff]
        %v1020 = vld [vmem:[%s1 + $0x520] sm:$0xff]
        %v1021 = vld [vmem:[%s1 + $0x568] sm:$0xff]
        %v1022 = vld [vmem:[%s1 + $0x5b0] sm:$0xff]
        %v1023 = vld [vmem:[%s1 + $0x5f8] sm:$0xff]
        %v1024 = vld [vmem:[%s1 + $0x640] sm:$0xff]
        %v1025 = vld [vmem:[%s1 + $0x688] sm:$0xff]
        %v1026 = vld [vmem:[%s1 + $0x6d0] sm:$0xff]
        %v1027 = vld [vmem:[%s1 + $0x718] sm:$0xff]
        %v1028 = vld [vmem:[%s1 + $0x760] sm:$0xff]
        %v1029 = vld [vmem:[%s1 + $0x7a8] sm:$0xff]
        %v1030 = vld [vmem:[%s1 + $0x7f0] sm:$0xff]
        %v1031 = vld [vmem:[%s1 + $0x838] sm:$0xff]
        %v1032 = vld [vmem:[%s1 + $0x880] sm:$0xff]
        %v1033 = vld [vmem:[%s1 + $0x8c8] sm:$0xff]
        %v1034 = vmul.f32 %v1002, %v1018
        %v1035 = vmul.f32 %v1003, %v1019
        %v1036 = vmul.f32 %v1004, %v1020
        %v1037 = vmul.f32 %v1005, %v1021
        %v1038 = vmul.f32 %v1006, %v1022
        %v1039 = vmul.f32 %v1007, %v1023
        %v1040 = vmul.f32 %v1008, %v1024
        %v1041 = vmul.f32 %v1009, %v1025
        %v1042 = vmul.f32 %v1010, %v1026
        %v1043 = vmul.f32 %v1011, %v1027
        %v1044 = vmul.f32 %v1012, %v1028
        %v1045 = vmul.f32 %v1013, %v1029
        %v1046 = vmul.f32 %v1014, %v1030
        %v1047 = vmul.f32 %v1015, %v1031
        %v1048 = vmul.f32 %v1016, %v1032
        %v1049 = vmul.f32 %v1017, %v1033
        %1050 = vst [vmem:[#allocation3 + $0x490] sm:$0xff] %v1034
        %1051 = vst [vmem:[#allocation3 + $0x4d8] sm:$0xff] %v1035
        %1052 = vst [vmem:[#allocation3 + $0x520] sm:$0xff] %v1036
        %1053 = vst [vmem:[#allocation3 + $0x568] sm:$0xff] %v1037
        %1054 = vst [vmem:[#allocation3 + $0x5b0] sm:$0xff] %v1038
        %1055 = vst [vmem:[#allocation3 + $0x5f8] sm:$0xff] %v1039
        %1056 = vst [vmem:[#allocation3 + $0x640] sm:$0xff] %v1040
        %1057 = vst [vmem:[#allocation3 + $0x688] sm:$0xff] %v1041
        %1058 = vst [vmem:[#allocation3 + $0x6d0] sm:$0xff] %v1042
        %1059 = vst [vmem:[#allocation3 + $0x718] sm:$0xff] %v1043
        %1060 = vst [vmem:[#allocation3 + $0x760] sm:$0xff] %v1044
        %1061 = vst [vmem:[#allocation3 + $0x7a8] sm:$0xff] %v1045
        %1062 = vst [vmem:[#allocation3 + $0x7f0] sm:$0xff] %v1046
        %1063 = vst [vmem:[#allocation3 + $0x838] sm:$0xff] %v1047
        %1064 = vst [vmem:[#allocation3 + $0x880] sm:$0xff] %v1048
        %1065 = vst [vmem:[#allocation3 + $0x8c8] sm:$0xff] %v1049
        %v1066 = vld [vmem:[#allocation2 + $0x97] sm:$0xff]
        %v1067 = vld [vmem:[#allocation2 + $0x9f] sm:$0xff]
        %v1068 = vld [vmem:[#allocation2 + $0xa7] sm:$0xff]
        %v1069 = vld [vmem:[#allocation2 + $0xaf] sm:$0xff]
        %v1070 = vld [vmem:[#allocation2 + $0xb7] sm:$0xff]
        %v1071 = vld [vmem:[#allocation2 + $0xbf] sm:$0xff]
        %v1072 = vld [vmem:[#allocation2 + $0xc7] sm:$0xff]
        %v1073 = vld [vmem:[#allocation2 + $0xcf] sm:$0xff]
        %v1074 = vld [vmem:[#allocation2 + $0xd7] sm:$0xff]
        %v1075 = vld [vmem:[#allocation2 + $0xdf] sm:$0xff]
        %v1076 = vld [vmem:[#allocation2 + $0xe7] sm:$0xff]
        %v1077 = vld [vmem:[#allocation2 + $0xef] sm:$0xff]
        %v1078 = vld [vmem:[#allocation2 + $0xf7] sm:$0xff]
        %v1079 = vld [vmem:[#allocation2 + $0xff] sm:$0xff]
        %v1080 = vld [vmem:[#allocation2 + $0x107] sm:$0xff]
        %v1081 = vld [vmem:[#allocation2 + $0x10f] sm:$0xff]
        %v1082 = vld [vmem:[%s1 + $0x498] sm:$0xff]
        %v1083 = vld [vmem:[%s1 + $0x4e0] sm:$0xff]
        %v1084 = vld [vmem:[%s1 + $0x528] sm:$0xff]
        %v1085 = vld [vmem:[%s1 + $0x570] sm:$0xff]
        %v1086 = vld [vmem:[%s1 + $0x5b8] sm:$0xff]
        %v1087 = vld [vmem:[%s1 + $0x600] sm:$0xff]
        %v1088 = vld [vmem:[%s1 + $0x648] sm:$0xff]
        %v1089 = vld [vmem:[%s1 + $0x690] sm:$0xff]
        %v1090 = vld [vmem:[%s1 + $0x6d8] sm:$0xff]
        %v1091 = vld [vmem:[%s1 + $0x720] sm:$0xff]
        %v1092 = vld [vmem:[%s1 + $0x768] sm:$0xff]
        %v1093 = vld [vmem:[%s1 + $0x7b0] sm:$0xff]
        %v1094 = vld [vmem:[%s1 + $0x7f8] sm:$0xff]
        %v1095 = vld [vmem:[%s1 + $0x840] sm:$0xff]
        %v1096 = vld [vmem:[%s1 + $0x888] sm:$0xff]
        %v1097 = vld [vmem:[%s1 + $0x8d0] sm:$0xff]
        %v1098 = vmul.f32 %v1066, %v1082
        %v1099 = vmul.f32 %v1067, %v1083
        %v1100 = vmul.f32 %v1068, %v1084
        %v1101 = vmul.f32 %v1069, %v1085
        %v1102 = vmul.f32 %v1070, %v1086
        %v1103 = vmul.f32 %v1071, %v1087
        %v1104 = vmul.f32 %v1072, %v1088
        %v1105 = vmul.f32 %v1073, %v1089
        %v1106 = vmul.f32 %v1074, %v1090
        %v1107 = vmul.f32 %v1075, %v1091
        %v1108 = vmul.f32 %v1076, %v1092
        %v1109 = vmul.f32 %v1077, %v1093
        %v1110 = vmul.f32 %v1078, %v1094
        %v1111 = vmul.f32 %v1079, %v1095
        %v1112 = vmul.f32 %v1080, %v1096
        %v1113 = vmul.f32 %v1081, %v1097
        %1114 = vst [vmem:[#allocation3 + $0x498] sm:$0xff] %v1098
        %1115 = vst [vmem:[#allocation3 + $0x4e0] sm:$0xff] %v1099
        %1116 = vst [vmem:[#allocation3 + $0x528] sm:$0xff] %v1100
        %1117 = vst [vmem:[#allocation3 + $0x570] sm:$0xff] %v1101
        %1118 = vst [vmem:[#allocation3 + $0x5b8] sm:$0xff] %v1102
        %1119 = vst [vmem:[#allocation3 + $0x600] sm:$0xff] %v1103
        %1120 = vst [vmem:[#allocation3 + $0x648] sm:$0xff] %v1104
        %1121 = vst [vmem:[#allocation3 + $0x690] sm:$0xff] %v1105
        %1122 = vst [vmem:[#allocation3 + $0x6d8] sm:$0xff] %v1106
        %1123 = vst [vmem:[#allocation3 + $0x720] sm:$0xff] %v1107
        %1124 = vst [vmem:[#allocation3 + $0x768] sm:$0xff] %v1108
        %1125 = vst [vmem:[#allocation3 + $0x7b0] sm:$0xff] %v1109
        %1126 = vst [vmem:[#allocation3 + $0x7f8] sm:$0xff] %v1110
        %1127 = vst [vmem:[#allocation3 + $0x840] sm:$0xff] %v1111
        %1128 = vst [vmem:[#allocation3 + $0x888] sm:$0xff] %v1112
        %1129 = vst [vmem:[#allocation3 + $0x8d0] sm:$0xff] %v1113
        %v1130 = vld [vmem:[#allocation2 + $0x98] sm:$0xff]
        %v1131 = vld [vmem:[#allocation2 + $0xa0] sm:$0xff]
        %v1132 = vld [vmem:[#allocation2 + $0xa8] sm:$0xff]
        %v1133 = vld [vmem:[#allocation2 + $0xb0] sm:$0xff]
        %v1134 = vld [vmem:[#allocation2 + $0xb8] sm:$0xff]
        %v1135 = vld [vmem:[#allocation2 + $0xc0] sm:$0xff]
        %v1136 = vld [vmem:[#allocation2 + $0xc8] sm:$0xff]
        %v1137 = vld [vmem:[#allocation2 + $0xd0] sm:$0xff]
        %v1138 = vld [vmem:[#allocation2 + $0xd8] sm:$0xff]
        %v1139 = vld [vmem:[#allocation2 + $0xe0] sm:$0xff]
        %v1140 = vld [vmem:[#allocation2 + $0xe8] sm:$0xff]
        %v1141 = vld [vmem:[#allocation2 + $0xf0] sm:$0xff]
        %v1142 = vld [vmem:[#allocation2 + $0xf8] sm:$0xff]
        %v1143 = vld [vmem:[#allocation2 + $0x100] sm:$0xff]
        %v1144 = vld [vmem:[#allocation2 + $0x108] sm:$0xff]
        %v1145 = vld [vmem:[#allocation2 + $0x110] sm:$0xff]
        %v1146 = vld [vmem:[%s1 + $0x4a0] sm:$0xff]
        %v1147 = vld [vmem:[%s1 + $0x4e8] sm:$0xff]
        %v1148 = vld [vmem:[%s1 + $0x530] sm:$0xff]
        %v1149 = vld [vmem:[%s1 + $0x578] sm:$0xff]
        %v1150 = vld [vmem:[%s1 + $0x5c0] sm:$0xff]
        %v1151 = vld [vmem:[%s1 + $0x608] sm:$0xff]
        %v1152 = vld [vmem:[%s1 + $0x650] sm:$0xff]
        %v1153 = vld [vmem:[%s1 + $0x698] sm:$0xff]
        %v1154 = vld [vmem:[%s1 + $0x6e0] sm:$0xff]
        %v1155 = vld [vmem:[%s1 + $0x728] sm:$0xff]
        %v1156 = vld [vmem:[%s1 + $0x770] sm:$0xff]
        %v1157 = vld [vmem:[%s1 + $0x7b8] sm:$0xff]
        %v1158 = vld [vmem:[%s1 + $0x800] sm:$0xff]
        %v1159 = vld [vmem:[%s1 + $0x848] sm:$0xff]
        %v1160 = vld [vmem:[%s1 + $0x890] sm:$0xff]
        %v1161 = vld [vmem:[%s1 + $0x8d8] sm:$0xff]
        %v1162 = vmul.f32 %v1130, %v1146
        %v1163 = vmul.f32 %v1131, %v1147
        %v1164 = vmul.f32 %v1132, %v1148
        %v1165 = vmul.f32 %v1133, %v1149
        %v1166 = vmul.f32 %v1134, %v1150
        %v1167 = vmul.f32 %v1135, %v1151
        %v1168 = vmul.f32 %v1136, %v1152
        %v1169 = vmul.f32 %v1137, %v1153
        %v1170 = vmul.f32 %v1138, %v1154
        %v1171 = vmul.f32 %v1139, %v1155
        %v1172 = vmul.f32 %v1140, %v1156
        %v1173 = vmul.f32 %v1141, %v1157
        %v1174 = vmul.f32 %v1142, %v1158
        %v1175 = vmul.f32 %v1143, %v1159
        %v1176 = vmul.f32 %v1144, %v1160
        %v1177 = vmul.f32 %v1145, %v1161
        %1178 = vst [vmem:[#allocation3 + $0x4a0] sm:$0xff] %v1162
        %1179 = vst [vmem:[#allocation3 + $0x4e8] sm:$0xff] %v1163
        %1180 = vst [vmem:[#allocation3 + $0x530] sm:$0xff] %v1164
        %1181 = vst [vmem:[#allocation3 + $0x578] sm:$0xff] %v1165
        %1182 = vst [vmem:[#allocation3 + $0x5c0] sm:$0xff] %v1166
        %1183 = vst [vmem:[#allocation3 + $0x608] sm:$0xff] %v1167
        %1184 = vst [vmem:[#allocation3 + $0x650] sm:$0xff] %v1168
        %1185 = vst [vmem:[#allocation3 + $0x698] sm:$0xff] %v1169
        %1186 = vst [vmem:[#allocation3 + $0x6e0] sm:$0xff] %v1170
        %1187 = vst [vmem:[#allocation3 + $0x728] sm:$0xff] %v1171
        %1188 = vst [vmem:[#allocation3 + $0x770] sm:$0xff] %v1172
        %1189 = vst [vmem:[#allocation3 + $0x7b8] sm:$0xff] %v1173
        %1190 = vst [vmem:[#allocation3 + $0x800] sm:$0xff] %v1174
        %1191 = vst [vmem:[#allocation3 + $0x848] sm:$0xff] %v1175
        %1192 = vst [vmem:[#allocation3 + $0x890] sm:$0xff] %v1176
        %1193 = vst [vmem:[#allocation3 + $0x8d8] sm:$0xff] %v1177
        %v1194 = vld [vmem:[#allocation2 + $0x99] sm:$0xff]
        %v1195 = vld [vmem:[#allocation2 + $0xa1] sm:$0xff]
        %v1196 = vld [vmem:[#allocation2 + $0xa9] sm:$0xff]
        %v1197 = vld [vmem:[#allocation2 + $0xb1] sm:$0xff]
        %v1198 = vld [vmem:[#allocation2 + $0xb9] sm:$0xff]
        %v1199 = vld [vmem:[#allocation2 + $0xc1] sm:$0xff]
        %v1200 = vld [vmem:[#allocation2 + $0xc9] sm:$0xff]
        %v1201 = vld [vmem:[#allocation2 + $0xd1] sm:$0xff]
        %v1202 = vld [vmem:[#allocation2 + $0xd9] sm:$0xff]
        %v1203 = vld [vmem:[#allocation2 + $0xe1] sm:$0xff]
        %v1204 = vld [vmem:[#allocation2 + $0xe9] sm:$0xff]
        %v1205 = vld [vmem:[#allocation2 + $0xf1] sm:$0xff]
        %v1206 = vld [vmem:[#allocation2 + $0xf9] sm:$0xff]
        %v1207 = vld [vmem:[#allocation2 + $0x101] sm:$0xff]
        %v1208 = vld [vmem:[#allocation2 + $0x109] sm:$0xff]
        %v1209 = vld [vmem:[#allocation2 + $0x111] sm:$0xff]
        %v1210 = vld [vmem:[%s1 + $0x4a8] sm:$0xff]
        %v1211 = vld [vmem:[%s1 + $0x4f0] sm:$0xff]
        %v1212 = vld [vmem:[%s1 + $0x538] sm:$0xff]
        %v1213 = vld [vmem:[%s1 + $0x580] sm:$0xff]
        %v1214 = vld [vmem:[%s1 + $0x5c8] sm:$0xff]
        %v1215 = vld [vmem:[%s1 + $0x610] sm:$0xff]
        %v1216 = vld [vmem:[%s1 + $0x658] sm:$0xff]
        %v1217 = vld [vmem:[%s1 + $0x6a0] sm:$0xff]
        %v1218 = vld [vmem:[%s1 + $0x6e8] sm:$0xff]
        %v1219 = vld [vmem:[%s1 + $0x730] sm:$0xff]
        %v1220 = vld [vmem:[%s1 + $0x778] sm:$0xff]
        %v1221 = vld [vmem:[%s1 + $0x7c0] sm:$0xff]
        %v1222 = vld [vmem:[%s1 + $0x808] sm:$0xff]
        %v1223 = vld [vmem:[%s1 + $0x850] sm:$0xff]
        %v1224 = vld [vmem:[%s1 + $0x898] sm:$0xff]
        %v1225 = vld [vmem:[%s1 + $0x8e0] sm:$0xff]
        %v1226 = vmul.f32 %v1194, %v1210
        %v1227 = vmul.f32 %v1195, %v1211
        %v1228 = vmul.f32 %v1196, %v1212
        %v1229 = vmul.f32 %v1197, %v1213
        %v1230 = vmul.f32 %v1198, %v1214
        %v1231 = vmul.f32 %v1199, %v1215
        %v1232 = vmul.f32 %v1200, %v1216
        %v1233 = vmul.f32 %v1201, %v1217
        %v1234 = vmul.f32 %v1202, %v1218
        %v1235 = vmul.f32 %v1203, %v1219
        %v1236 = vmul.f32 %v1204, %v1220
        %v1237 = vmul.f32 %v1205, %v1221
        %v1238 = vmul.f32 %v1206, %v1222
        %v1239 = vmul.f32 %v1207, %v1223
        %v1240 = vmul.f32 %v1208, %v1224
        %v1241 = vmul.f32 %v1209, %v1225
        %1242 = vst [vmem:[#allocation3 + $0x4a8] sm:$0xff] %v1226
        %1243 = vst [vmem:[#allocation3 + $0x4f0] sm:$0xff] %v1227
        %1244 = vst [vmem:[#allocation3 + $0x538] sm:$0xff] %v1228
        %1245 = vst [vmem:[#allocation3 + $0x580] sm:$0xff] %v1229
        %1246 = vst [vmem:[#allocation3 + $0x5c8] sm:$0xff] %v1230
        %1247 = vst [vmem:[#allocation3 + $0x610] sm:$0xff] %v1231
        %1248 = vst [vmem:[#allocation3 + $0x658] sm:$0xff] %v1232
        %1249 = vst [vmem:[#allocation3 + $0x6a0] sm:$0xff] %v1233
        %1250 = vst [vmem:[#allocation3 + $0x6e8] sm:$0xff] %v1234
        %1251 = vst [vmem:[#allocation3 + $0x730] sm:$0xff] %v1235
        %1252 = vst [vmem:[#allocation3 + $0x778] sm:$0xff] %v1236
        %1253 = vst [vmem:[#allocation3 + $0x7c0] sm:$0xff] %v1237
        %1254 = vst [vmem:[#allocation3 + $0x808] sm:$0xff] %v1238
        %1255 = vst [vmem:[#allocation3 + $0x850] sm:$0xff] %v1239
        %1256 = vst [vmem:[#allocation3 + $0x898] sm:$0xff] %v1240
        %1257 = vst [vmem:[#allocation3 + $0x8e0] sm:$0xff] %v1241
        %v1258 = vld [vmem:[#allocation2 + $0xa7] sm:$0xff]
        %v1259 = vld [vmem:[#allocation2 + $0xaf] sm:$0xff]
        %v1260 = vld [vmem:[#allocation2 + $0xb7] sm:$0xff]
        %v1261 = vld [vmem:[#allocation2 + $0xbf] sm:$0xff]
        %v1262 = vld [vmem:[#allocation2 + $0xc7] sm:$0xff]
        %v1263 = vld [vmem:[#allocation2 + $0xcf] sm:$0xff]
        %v1264 = vld [vmem:[#allocation2 + $0xd7] sm:$0xff]
        %v1265 = vld [vmem:[#allocation2 + $0xdf] sm:$0xff]
        %v1266 = vld [vmem:[#allocation2 + $0xe7] sm:$0xff]
        %v1267 = vld [vmem:[#allocation2 + $0xef] sm:$0xff]
        %v1268 = vld [vmem:[#allocation2 + $0xf7] sm:$0xff]
        %v1269 = vld [vmem:[#allocation2 + $0xff] sm:$0xff]
        %v1270 = vld [vmem:[#allocation2 + $0x107] sm:$0xff]
        %v1271 = vld [vmem:[#allocation2 + $0x10f] sm:$0xff]
        %v1272 = vld [vmem:[#allocation2 + $0x117] sm:$0xff]
        %v1273 = vld [vmem:[#allocation2 + $0x11f] sm:$0xff]
        %v1274 = vld [vmem:[%s1 + $0x4b0] sm:$0xff]
        %v1275 = vld [vmem:[%s1 + $0x4f8] sm:$0xff]
        %v1276 = vld [vmem:[%s1 + $0x540] sm:$0xff]
        %v1277 = vld [vmem:[%s1 + $0x588] sm:$0xff]
        %v1278 = vld [vmem:[%s1 + $0x5d0] sm:$0xff]
        %v1279 = vld [vmem:[%s1 + $0x618] sm:$0xff]
        %v1280 = vld [vmem:[%s1 + $0x660] sm:$0xff]
        %v1281 = vld [vmem:[%s1 + $0x6a8] sm:$0xff]
        %v1282 = vld [vmem:[%s1 + $0x6f0] sm:$0xff]
        %v1283 = vld [vmem:[%s1 + $0x738] sm:$0xff]
        %v1284 = vld [vmem:[%s1 + $0x780] sm:$0xff]
        %v1285 = vld [vmem:[%s1 + $0x7c8] sm:$0xff]
        %v1286 = vld [vmem:[%s1 + $0x810] sm:$0xff]
        %v1287 = vld [vmem:[%s1 + $0x858] sm:$0xff]
        %v1288 = vld [vmem:[%s1 + $0x8a0] sm:$0xff]
        %v1289 = vld [vmem:[%s1 + $0x8e8] sm:$0xff]
        %v1290 = vmul.f32 %v1258, %v1274
        %v1291 = vmul.f32 %v1259, %v1275
        %v1292 = vmul.f32 %v1260, %v1276
        %v1293 = vmul.f32 %v1261, %v1277
        %v1294 = vmul.f32 %v1262, %v1278
        %v1295 = vmul.f32 %v1263, %v1279
        %v1296 = vmul.f32 %v1264, %v1280
        %v1297 = vmul.f32 %v1265, %v1281
        %v1298 = vmul.f32 %v1266, %v1282
        %v1299 = vmul.f32 %v1267, %v1283
        %v1300 = vmul.f32 %v1268, %v1284
        %v1301 = vmul.f32 %v1269, %v1285
        %v1302 = vmul.f32 %v1270, %v1286
        %v1303 = vmul.f32 %v1271, %v1287
        %v1304 = vmul.f32 %v1272, %v1288
        %v1305 = vmul.f32 %v1273, %v1289
        %1306 = vst [vmem:[#allocation3 + $0x4b0] sm:$0xff] %v1290
        %1307 = vst [vmem:[#allocation3 + $0x4f8] sm:$0xff] %v1291
        %1308 = vst [vmem:[#allocation3 + $0x540] sm:$0xff] %v1292
        %1309 = vst [vmem:[#allocation3 + $0x588] sm:$0xff] %v1293
        %1310 = vst [vmem:[#allocation3 + $0x5d0] sm:$0xff] %v1294
        %1311 = vst [vmem:[#allocation3 + $0x618] sm:$0xff] %v1295
        %1312 = vst [vmem:[#allocation3 + $0x660] sm:$0xff] %v1296
        %1313 = vst [vmem:[#allocation3 + $0x6a8] sm:$0xff] %v1297
        %1314 = vst [vmem:[#allocation3 + $0x6f0] sm:$0xff] %v1298
        %1315 = vst [vmem:[#allocation3 + $0x738] sm:$0xff] %v1299
        %1316 = vst [vmem:[#allocation3 + $0x780] sm:$0xff] %v1300
        %1317 = vst [vmem:[#allocation3 + $0x7c8] sm:$0xff] %v1301
        %1318 = vst [vmem:[#allocation3 + $0x810] sm:$0xff] %v1302
        %1319 = vst [vmem:[#allocation3 + $0x858] sm:$0xff] %v1303
        %1320 = vst [vmem:[#allocation3 + $0x8a0] sm:$0xff] %v1304
        %1321 = vst [vmem:[#allocation3 + $0x8e8] sm:$0xff] %v1305
        %v1322 = vld [vmem:[#allocation2 + $0xa8] sm:$0xff]
        %v1323 = vld [vmem:[#allocation2 + $0xb0] sm:$0xff]
        %v1324 = vld [vmem:[#allocation2 + $0xb8] sm:$0xff]
        %v1325 = vld [vmem:[#allocation2 + $0xc0] sm:$0xff]
        %v1326 = vld [vmem:[#allocation2 + $0xc8] sm:$0xff]
        %v1327 = vld [vmem:[#allocation2 + $0xd0] sm:$0xff]
        %v1328 = vld [vmem:[#allocation2 + $0xd8] sm:$0xff]
        %v1329 = vld [vmem:[#allocation2 + $0xe0] sm:$0xff]
        %v1330 = vld [vmem:[#allocation2 + $0xe8] sm:$0xff]
        %v1331 = vld [vmem:[#allocation2 + $0xf0] sm:$0xff]
        %v1332 = vld [vmem:[#allocation2 + $0xf8] sm:$0xff]
        %v1333 = vld [vmem:[#allocation2 + $0x100] sm:$0xff]
        %v1334 = vld [vmem:[#allocation2 + $0x108] sm:$0xff]
        %v1335 = vld [vmem:[#allocation2 + $0x110] sm:$0xff]
        %v1336 = vld [vmem:[#allocation2 + $0x118] sm:$0xff]
        %v1337 = vld [vmem:[#allocation2 + $0x120] sm:$0xff]
        %v1338 = vld [vmem:[%s1 + $0x4b8] sm:$0xff]
        %v1339 = vld [vmem:[%s1 + $0x500] sm:$0xff]
        %v1340 = vld [vmem:[%s1 + $0x548] sm:$0xff]
        %v1341 = vld [vmem:[%s1 + $0x590] sm:$0xff]
        %v1342 = vld [vmem:[%s1 + $0x5d8] sm:$0xff]
        %v1343 = vld [vmem:[%s1 + $0x620] sm:$0xff]
        %v1344 = vld [vmem:[%s1 + $0x668] sm:$0xff]
        %v1345 = vld [vmem:[%s1 + $0x6b0] sm:$0xff]
        %v1346 = vld [vmem:[%s1 + $0x6f8] sm:$0xff]
        %v1347 = vld [vmem:[%s1 + $0x740] sm:$0xff]
        %v1348 = vld [vmem:[%s1 + $0x788] sm:$0xff]
        %v1349 = vld [vmem:[%s1 + $0x7d0] sm:$0xff]
        %v1350 = vld [vmem:[%s1 + $0x818] sm:$0xff]
        %v1351 = vld [vmem:[%s1 + $0x860] sm:$0xff]
        %v1352 = vld [vmem:[%s1 + $0x8a8] sm:$0xff]
        %v1353 = vld [vmem:[%s1 + $0x8f0] sm:$0xff]
        %v1354 = vmul.f32 %v1322, %v1338
        %v1355 = vmul.f32 %v1323, %v1339
        %v1356 = vmul.f32 %v1324, %v1340
        %v1357 = vmul.f32 %v1325, %v1341
        %v1358 = vmul.f32 %v1326, %v1342
        %v1359 = vmul.f32 %v1327, %v1343
        %v1360 = vmul.f32 %v1328, %v1344
        %v1361 = vmul.f32 %v1329, %v1345
        %v1362 = vmul.f32 %v1330, %v1346
        %v1363 = vmul.f32 %v1331, %v1347
        %v1364 = vmul.f32 %v1332, %v1348
        %v1365 = vmul.f32 %v1333, %v1349
        %v1366 = vmul.f32 %v1334, %v1350
        %v1367 = vmul.f32 %v1335, %v1351
        %v1368 = vmul.f32 %v1336, %v1352
        %v1369 = vmul.f32 %v1337, %v1353
        %1370 = vst [vmem:[#allocation3 + $0x4b8] sm:$0xff] %v1354
        %1371 = vst [vmem:[#allocation3 + $0x500] sm:$0xff] %v1355
        %1372 = vst [vmem:[#allocation3 + $0x548] sm:$0xff] %v1356
        %1373 = vst [vmem:[#allocation3 + $0x590] sm:$0xff] %v1357
        %1374 = vst [vmem:[#allocation3 + $0x5d8] sm:$0xff] %v1358
        %1375 = vst [vmem:[#allocation3 + $0x620] sm:$0xff] %v1359
        %1376 = vst [vmem:[#allocation3 + $0x668] sm:$0xff] %v1360
        %1377 = vst [vmem:[#allocation3 + $0x6b0] sm:$0xff] %v1361
        %1378 = vst [vmem:[#allocation3 + $0x6f8] sm:$0xff] %v1362
        %1379 = vst [vmem:[#allocation3 + $0x740] sm:$0xff] %v1363
        %1380 = vst [vmem:[#allocation3 + $0x788] sm:$0xff] %v1364
        %1381 = vst [vmem:[#allocation3 + $0x7d0] sm:$0xff] %v1365
        %1382 = vst [vmem:[#allocation3 + $0x818] sm:$0xff] %v1366
        %1383 = vst [vmem:[#allocation3 + $0x860] sm:$0xff] %v1367
        %1384 = vst [vmem:[#allocation3 + $0x8a8] sm:$0xff] %v1368
        %1385 = vst [vmem:[#allocation3 + $0x8f0] sm:$0xff] %v1369
        %v1386 = vld [vmem:[#allocation2 + $0xa9] sm:$0xff]
        %v1387 = vld [vmem:[#allocation2 + $0xb1] sm:$0xff]
        %v1388 = vld [vmem:[#allocation2 + $0xb9] sm:$0xff]
        %v1389 = vld [vmem:[#allocation2 + $0xc1] sm:$0xff]
        %v1390 = vld [vmem:[#allocation2 + $0xc9] sm:$0xff]
        %v1391 = vld [vmem:[#allocation2 + $0xd1] sm:$0xff]
        %v1392 = vld [vmem:[#allocation2 + $0xd9] sm:$0xff]
        %v1393 = vld [vmem:[#allocation2 + $0xe1] sm:$0xff]
        %v1394 = vld [vmem:[#allocation2 + $0xe9] sm:$0xff]
        %v1395 = vld [vmem:[#allocation2 + $0xf1] sm:$0xff]
        %v1396 = vld [vmem:[#allocation2 + $0xf9] sm:$0xff]
        %v1397 = vld [vmem:[#allocation2 + $0x101] sm:$0xff]
        %v1398 = vld [vmem:[#allocation2 + $0x109] sm:$0xff]
        %v1399 = vld [vmem:[#allocation2 + $0x111] sm:$0xff]
        %v1400 = vld [vmem:[#allocation2 + $0x119] sm:$0xff]
        %v1401 = vld [vmem:[#allocation2 + $0x121] sm:$0xff]
        %v1402 = vld [vmem:[%s1 + $0x4c0] sm:$0xff]
        %v1403 = vld [vmem:[%s1 + $0x508] sm:$0xff]
        %v1404 = vld [vmem:[%s1 + $0x550] sm:$0xff]
        %v1405 = vld [vmem:[%s1 + $0x598] sm:$0xff]
        %v1406 = vld [vmem:[%s1 + $0x5e0] sm:$0xff]
        %v1407 = vld [vmem:[%s1 + $0x628] sm:$0xff]
        %v1408 = vld [vmem:[%s1 + $0x670] sm:$0xff]
        %v1409 = vld [vmem:[%s1 + $0x6b8] sm:$0xff]
        %v1410 = vld [vmem:[%s1 + $0x700] sm:$0xff]
        %v1411 = vld [vmem:[%s1 + $0x748] sm:$0xff]
        %v1412 = vld [vmem:[%s1 + $0x790] sm:$0xff]
        %v1413 = vld [vmem:[%s1 + $0x7d8] sm:$0xff]
        %v1414 = vld [vmem:[%s1 + $0x820] sm:$0xff]
        %v1415 = vld [vmem:[%s1 + $0x868] sm:$0xff]
        %v1416 = vld [vmem:[%s1 + $0x8b0] sm:$0xff]
        %v1417 = vld [vmem:[%s1 + $0x8f8] sm:$0xff]
        %v1418 = vmul.f32 %v1386, %v1402
        %v1419 = vmul.f32 %v1387, %v1403
        %v1420 = vmul.f32 %v1388, %v1404
        %v1421 = vmul.f32 %v1389, %v1405
        %v1422 = vmul.f32 %v1390, %v1406
        %v1423 = vmul.f32 %v1391, %v1407
        %v1424 = vmul.f32 %v1392, %v1408
        %v1425 = vmul.f32 %v1393, %v1409
        %v1426 = vmul.f32 %v1394, %v1410
        %v1427 = vmul.f32 %v1395, %v1411
        %v1428 = vmul.f32 %v1396, %v1412
        %v1429 = vmul.f32 %v1397, %v1413
        %v1430 = vmul.f32 %v1398, %v1414
        %v1431 = vmul.f32 %v1399, %v1415
        %v1432 = vmul.f32 %v1400, %v1416
        %v1433 = vmul.f32 %v1401, %v1417
        %1434 = vst [vmem:[#allocation3 + $0x4c0] sm:$0xff] %v1418
        %1435 = vst [vmem:[#allocation3 + $0x508] sm:$0xff] %v1419
        %1436 = vst [vmem:[#allocation3 + $0x550] sm:$0xff] %v1420
        %1437 = vst [vmem:[#allocation3 + $0x598] sm:$0xff] %v1421
        %1438 = vst [vmem:[#allocation3 + $0x5e0] sm:$0xff] %v1422
        %1439 = vst [vmem:[#allocation3 + $0x628] sm:$0xff] %v1423
        %1440 = vst [vmem:[#allocation3 + $0x670] sm:$0xff] %v1424
        %1441 = vst [vmem:[#allocation3 + $0x6b8] sm:$0xff] %v1425
        %1442 = vst [vmem:[#allocation3 + $0x700] sm:$0xff] %v1426
        %1443 = vst [vmem:[#allocation3 + $0x748] sm:$0xff] %v1427
        %1444 = vst [vmem:[#allocation3 + $0x790] sm:$0xff] %v1428
        %1445 = vst [vmem:[#allocation3 + $0x7d8] sm:$0xff] %v1429
        %1446 = vst [vmem:[#allocation3 + $0x820] sm:$0xff] %v1430
        %1447 = vst [vmem:[#allocation3 + $0x868] sm:$0xff] %v1431
        %1448 = vst [vmem:[#allocation3 + $0x8b0] sm:$0xff] %v1432
        %1449 = vst [vmem:[#allocation3 + $0x8f8] sm:$0xff] %v1433
        %v1450 = vld [vmem:[#allocation2 + $0x10f] sm:$0xff]
        %v1451 = vld [vmem:[#allocation2 + $0x117] sm:$0xff]
        %v1452 = vld [vmem:[#allocation2 + $0x11f] sm:$0xff]
        %v1453 = vld [vmem:[#allocation2 + $0x127] sm:$0xff]
        %v1454 = vld [vmem:[#allocation2 + $0x12f] sm:$0xff]
        %v1455 = vld [vmem:[#allocation2 + $0x137] sm:$0xff]
        %v1456 = vld [vmem:[#allocation2 + $0x13f] sm:$0xff]
        %v1457 = vld [vmem:[#allocation2 + $0x147] sm:$0xff]
        %v1458 = vld [vmem:[%s1 + $0x900] sm:$0xff]
        %v1459 = vld [vmem:[%s1 + $0x948] sm:$0xff]
        %v1460 = vld [vmem:[%s1 + $0x990] sm:$0xff]
        %v1461 = vld [vmem:[%s1 + $0x9d8] sm:$0xff]
        %v1462 = vld [vmem:[%s1 + $0xa20] sm:$0xff]
        %v1463 = vld [vmem:[%s1 + $0xa68] sm:$0xff]
        %v1464 = vld [vmem:[%s1 + $0xab0] sm:$0xff]
        %v1465 = vld [vmem:[%s1 + $0xaf8] sm:$0xff]
        %v1466 = vmul.f32 %v1450, %v1458
        %v1467 = vmul.f32 %v1451, %v1459
        %v1468 = vmul.f32 %v1452, %v1460
        %v1469 = vmul.f32 %v1453, %v1461
        %v1470 = vmul.f32 %v1454, %v1462
        %v1471 = vmul.f32 %v1455, %v1463
        %v1472 = vmul.f32 %v1456, %v1464
        %v1473 = vmul.f32 %v1457, %v1465
        %1474 = vst [vmem:[#allocation3 + $0x900] sm:$0xff] %v1466
        %1475 = vst [vmem:[#allocation3 + $0x948] sm:$0xff] %v1467
        %1476 = vst [vmem:[#allocation3 + $0x990] sm:$0xff] %v1468
        %1477 = vst [vmem:[#allocation3 + $0x9d8] sm:$0xff] %v1469
        %1478 = vst [vmem:[#allocation3 + $0xa20] sm:$0xff] %v1470
        %1479 = vst [vmem:[#allocation3 + $0xa68] sm:$0xff] %v1471
        %1480 = vst [vmem:[#allocation3 + $0xab0] sm:$0xff] %v1472
        %1481 = vst [vmem:[#allocation3 + $0xaf8] sm:$0xff] %v1473
        %v1482 = vld [vmem:[#allocation2 + $0x110] sm:$0xff]
        %v1483 = vld [vmem:[#allocation2 + $0x118] sm:$0xff]
        %v1484 = vld [vmem:[#allocation2 + $0x120] sm:$0xff]
        %v1485 = vld [vmem:[#allocation2 + $0x128] sm:$0xff]
        %v1486 = vld [vmem:[#allocation2 + $0x130] sm:$0xff]
        %v1487 = vld [vmem:[#allocation2 + $0x138] sm:$0xff]
        %v1488 = vld [vmem:[#allocation2 + $0x140] sm:$0xff]
        %v1489 = vld [vmem:[#allocation2 + $0x148] sm:$0xff]
        %v1490 = vld [vmem:[%s1 + $0x908] sm:$0xff]
        %v1491 = vld [vmem:[%s1 + $0x950] sm:$0xff]
        %v1492 = vld [vmem:[%s1 + $0x998] sm:$0xff]
        %v1493 = vld [vmem:[%s1 + $0x9e0] sm:$0xff]
        %v1494 = vld [vmem:[%s1 + $0xa28] sm:$0xff]
        %v1495 = vld [vmem:[%s1 + $0xa70] sm:$0xff]
        %v1496 = vld [vmem:[%s1 + $0xab8] sm:$0xff]
        %v1497 = vld [vmem:[%s1 + $0xb00] sm:$0xff]
        %v1498 = vmul.f32 %v1482, %v1490
        %v1499 = vmul.f32 %v1483, %v1491
        %v1500 = vmul.f32 %v1484, %v1492
        %v1501 = vmul.f32 %v1485, %v1493
        %v1502 = vmul.f32 %v1486, %v1494
        %v1503 = vmul.f32 %v1487, %v1495
        %v1504 = vmul.f32 %v1488, %v1496
        %v1505 = vmul.f32 %v1489, %v1497
        %1506 = vst [vmem:[#allocation3 + $0x908] sm:$0xff] %v1498
        %1507 = vst [vmem:[#allocation3 + $0x950] sm:$0xff] %v1499
        %1508 = vst [vmem:[#allocation3 + $0x998] sm:$0xff] %v1500
        %1509 = vst [vmem:[#allocation3 + $0x9e0] sm:$0xff] %v1501
        %1510 = vst [vmem:[#allocation3 + $0xa28] sm:$0xff] %v1502
        %1511 = vst [vmem:[#allocation3 + $0xa70] sm:$0xff] %v1503
        %1512 = vst [vmem:[#allocation3 + $0xab8] sm:$0xff] %v1504
        %1513 = vst [vmem:[#allocation3 + $0xb00] sm:$0xff] %v1505
        %v1514 = vld [vmem:[#allocation2 + $0x111] sm:$0xff]
        %v1515 = vld [vmem:[#allocation2 + $0x119] sm:$0xff]
        %v1516 = vld [vmem:[#allocation2 + $0x121] sm:$0xff]
        %v1517 = vld [vmem:[#allocation2 + $0x129] sm:$0xff]
        %v1518 = vld [vmem:[#allocation2 + $0x131] sm:$0xff]
        %v1519 = vld [vmem:[#allocation2 + $0x139] sm:$0xff]
        %v1520 = vld [vmem:[#allocation2 + $0x141] sm:$0xff]
        %v1521 = vld [vmem:[#allocation2 + $0x149] sm:$0xff]
        %v1522 = vld [vmem:[%s1 + $0x910] sm:$0xff]
        %v1523 = vld [vmem:[%s1 + $0x958] sm:$0xff]
        %v1524 = vld [vmem:[%s1 + $0x9a0] sm:$0xff]
        %v1525 = vld [vmem:[%s1 + $0x9e8] sm:$0xff]
        %v1526 = vld [vmem:[%s1 + $0xa30] sm:$0xff]
        %v1527 = vld [vmem:[%s1 + $0xa78] sm:$0xff]
        %v1528 = vld [vmem:[%s1 + $0xac0] sm:$0xff]
        %v1529 = vld [vmem:[%s1 + $0xb08] sm:$0xff]
        %v1530 = vmul.f32 %v1514, %v1522
        %v1531 = vmul.f32 %v1515, %v1523
        %v1532 = vmul.f32 %v1516, %v1524
        %v1533 = vmul.f32 %v1517, %v1525
        %v1534 = vmul.f32 %v1518, %v1526
        %v1535 = vmul.f32 %v1519, %v1527
        %v1536 = vmul.f32 %v1520, %v1528
        %v1537 = vmul.f32 %v1521, %v1529
        %1538 = vst [vmem:[#allocation3 + $0x910] sm:$0xff] %v1530
        %1539 = vst [vmem:[#allocation3 + $0x958] sm:$0xff] %v1531
        %1540 = vst [vmem:[#allocation3 + $0x9a0] sm:$0xff] %v1532
        %1541 = vst [vmem:[#allocation3 + $0x9e8] sm:$0xff] %v1533
        %1542 = vst [vmem:[#allocation3 + $0xa30] sm:$0xff] %v1534
        %1543 = vst [vmem:[#allocation3 + $0xa78] sm:$0xff] %v1535
        %1544 = vst [vmem:[#allocation3 + $0xac0] sm:$0xff] %v1536
        %1545 = vst [vmem:[#allocation3 + $0xb08] sm:$0xff] %v1537
        %v1546 = vld [vmem:[#allocation2 + $0x117] sm:$0xff]
        %v1547 = vld [vmem:[#allocation2 + $0x11f] sm:$0xff]
        %v1548 = vld [vmem:[#allocation2 + $0x127] sm:$0xff]
        %v1549 = vld [vmem:[#allocation2 + $0x12f] sm:$0xff]
        %v1550 = vld [vmem:[#allocation2 + $0x137] sm:$0xff]
        %v1551 = vld [vmem:[#allocation2 + $0x13f] sm:$0xff]
        %v1552 = vld [vmem:[#allocation2 + $0x147] sm:$0xff]
        %v1553 = vld [vmem:[#allocation2 + $0x14f] sm:$0xff]
        %v1554 = vld [vmem:[%s1 + $0x918] sm:$0xff]
        %v1555 = vld [vmem:[%s1 + $0x960] sm:$0xff]
        %v1556 = vld [vmem:[%s1 + $0x9a8] sm:$0xff]
        %v1557 = vld [vmem:[%s1 + $0x9f0] sm:$0xff]
        %v1558 = vld [vmem:[%s1 + $0xa38] sm:$0xff]
        %v1559 = vld [vmem:[%s1 + $0xa80] sm:$0xff]
        %v1560 = vld [vmem:[%s1 + $0xac8] sm:$0xff]
        %v1561 = vld [vmem:[%s1 + $0xb10] sm:$0xff]
        %v1562 = vmul.f32 %v1546, %v1554
        %v1563 = vmul.f32 %v1547, %v1555
        %v1564 = vmul.f32 %v1548, %v1556
        %v1565 = vmul.f32 %v1549, %v1557
        %v1566 = vmul.f32 %v1550, %v1558
        %v1567 = vmul.f32 %v1551, %v1559
        %v1568 = vmul.f32 %v1552, %v1560
        %v1569 = vmul.f32 %v1553, %v1561
        %1570 = vst [vmem:[#allocation3 + $0x918] sm:$0xff] %v1562
        %1571 = vst [vmem:[#allocation3 + $0x960] sm:$0xff] %v1563
        %1572 = vst [vmem:[#allocation3 + $0x9a8] sm:$0xff] %v1564
        %1573 = vst [vmem:[#allocation3 + $0x9f0] sm:$0xff] %v1565
        %1574 = vst [vmem:[#allocation3 + $0xa38] sm:$0xff] %v1566
        %1575 = vst [vmem:[#allocation3 + $0xa80] sm:$0xff] %v1567
        %1576 = vst [vmem:[#allocation3 + $0xac8] sm:$0xff] %v1568
        %1577 = vst [vmem:[#allocation3 + $0xb10] sm:$0xff] %v1569
        %v1578 = vld [vmem:[#allocation2 + $0x118] sm:$0xff]
        %v1579 = vld [vmem:[#allocation2 + $0x120] sm:$0xff]
        %v1580 = vld [vmem:[#allocation2 + $0x128] sm:$0xff]
        %v1581 = vld [vmem:[#allocation2 + $0x130] sm:$0xff]
        %v1582 = vld [vmem:[#allocation2 + $0x138] sm:$0xff]
        %v1583 = vld [vmem:[#allocation2 + $0x140] sm:$0xff]
        %v1584 = vld [vmem:[#allocation2 + $0x148] sm:$0xff]
        %v1585 = vld [vmem:[#allocation2 + $0x150] sm:$0xff]
        %v1586 = vld [vmem:[%s1 + $0x920] sm:$0xff]
        %v1587 = vld [vmem:[%s1 + $0x968] sm:$0xff]
        %v1588 = vld [vmem:[%s1 + $0x9b0] sm:$0xff]
        %v1589 = vld [vmem:[%s1 + $0x9f8] sm:$0xff]
        %v1590 = vld [vmem:[%s1 + $0xa40] sm:$0xff]
        %v1591 = vld [vmem:[%s1 + $0xa88] sm:$0xff]
        %v1592 = vld [vmem:[%s1 + $0xad0] sm:$0xff]
        %v1593 = vld [vmem:[%s1 + $0xb18] sm:$0xff]
        %v1594 = vmul.f32 %v1578, %v1586
        %v1595 = vmul.f32 %v1579, %v1587
        %v1596 = vmul.f32 %v1580, %v1588
        %v1597 = vmul.f32 %v1581, %v1589
        %v1598 = vmul.f32 %v1582, %v1590
        %v1599 = vmul.f32 %v1583, %v1591
        %v1600 = vmul.f32 %v1584, %v1592
        %v1601 = vmul.f32 %v1585, %v1593
        %1602 = vst [vmem:[#allocation3 + $0x920] sm:$0xff] %v1594
        %1603 = vst [vmem:[#allocation3 + $0x968] sm:$0xff] %v1595
        %1604 = vst [vmem:[#allocation3 + $0x9b0] sm:$0xff] %v1596
        %1605 = vst [vmem:[#allocation3 + $0x9f8] sm:$0xff] %v1597
        %1606 = vst [vmem:[#allocation3 + $0xa40] sm:$0xff] %v1598
        %1607 = vst [vmem:[#allocation3 + $0xa88] sm:$0xff] %v1599
        %1608 = vst [vmem:[#allocation3 + $0xad0] sm:$0xff] %v1600
        %1609 = vst [vmem:[#allocation3 + $0xb18] sm:$0xff] %v1601
        %v1610 = vld [vmem:[#allocation2 + $0x119] sm:$0xff]
        %v1611 = vld [vmem:[#allocation2 + $0x121] sm:$0xff]
        %v1612 = vld [vmem:[#allocation2 + $0x129] sm:$0xff]
        %v1613 = vld [vmem:[#allocation2 + $0x131] sm:$0xff]
        %v1614 = vld [vmem:[#allocation2 + $0x139] sm:$0xff]
        %v1615 = vld [vmem:[#allocation2 + $0x141] sm:$0xff]
        %v1616 = vld [vmem:[#allocation2 + $0x149] sm:$0xff]
        %v1617 = vld [vmem:[#allocation2 + $0x151] sm:$0xff]
        %v1618 = vld [vmem:[%s1 + $0x928] sm:$0xff]
        %v1619 = vld [vmem:[%s1 + $0x970] sm:$0xff]
        %v1620 = vld [vmem:[%s1 + $0x9b8] sm:$0xff]
        %v1621 = vld [vmem:[%s1 + $0xa00] sm:$0xff]
        %v1622 = vld [vmem:[%s1 + $0xa48] sm:$0xff]
        %v1623 = vld [vmem:[%s1 + $0xa90] sm:$0xff]
        %v1624 = vld [vmem:[%s1 + $0xad8] sm:$0xff]
        %v1625 = vld [vmem:[%s1 + $0xb20] sm:$0xff]
        %v1626 = vmul.f32 %v1610, %v1618
        %v1627 = vmul.f32 %v1611, %v1619
        %v1628 = vmul.f32 %v1612, %v1620
        %v1629 = vmul.f32 %v1613, %v1621
        %v1630 = vmul.f32 %v1614, %v1622
        %v1631 = vmul.f32 %v1615, %v1623
        %v1632 = vmul.f32 %v1616, %v1624
        %v1633 = vmul.f32 %v1617, %v1625
        %1634 = vst [vmem:[#allocation3 + $0x928] sm:$0xff] %v1626
        %1635 = vst [vmem:[#allocation3 + $0x970] sm:$0xff] %v1627
        %1636 = vst [vmem:[#allocation3 + $0x9b8] sm:$0xff] %v1628
        %1637 = vst [vmem:[#allocation3 + $0xa00] sm:$0xff] %v1629
        %1638 = vst [vmem:[#allocation3 + $0xa48] sm:$0xff] %v1630
        %1639 = vst [vmem:[#allocation3 + $0xa90] sm:$0xff] %v1631
        %1640 = vst [vmem:[#allocation3 + $0xad8] sm:$0xff] %v1632
        %1641 = vst [vmem:[#allocation3 + $0xb20] sm:$0xff] %v1633
        %v1642 = vld [vmem:[#allocation2 + $0x11f] sm:$0xff]
        %v1643 = vld [vmem:[#allocation2 + $0x127] sm:$0xff]
        %v1644 = vld [vmem:[#allocation2 + $0x12f] sm:$0xff]
        %v1645 = vld [vmem:[#allocation2 + $0x137] sm:$0xff]
        %v1646 = vld [vmem:[#allocation2 + $0x13f] sm:$0xff]
        %v1647 = vld [vmem:[#allocation2 + $0x147] sm:$0xff]
        %v1648 = vld [vmem:[#allocation2 + $0x14f] sm:$0xff]
        %v1649 = vld [vmem:[#allocation2 + $0x157] sm:$0xff]
        %v1650 = vld [vmem:[%s1 + $0x930] sm:$0xff]
        %v1651 = vld [vmem:[%s1 + $0x978] sm:$0xff]
        %v1652 = vld [vmem:[%s1 + $0x9c0] sm:$0xff]
        %v1653 = vld [vmem:[%s1 + $0xa08] sm:$0xff]
        %v1654 = vld [vmem:[%s1 + $0xa50] sm:$0xff]
        %v1655 = vld [vmem:[%s1 + $0xa98] sm:$0xff]
        %v1656 = vld [vmem:[%s1 + $0xae0] sm:$0xff]
        %v1657 = vld [vmem:[%s1 + $0xb28] sm:$0xff]
        %v1658 = vmul.f32 %v1642, %v1650
        %v1659 = vmul.f32 %v1643, %v1651
        %v1660 = vmul.f32 %v1644, %v1652
        %v1661 = vmul.f32 %v1645, %v1653
        %v1662 = vmul.f32 %v1646, %v1654
        %v1663 = vmul.f32 %v1647, %v1655
        %v1664 = vmul.f32 %v1648, %v1656
        %v1665 = vmul.f32 %v1649, %v1657
        %1666 = vst [vmem:[#allocation3 + $0x930] sm:$0xff] %v1658
        %1667 = vst [vmem:[#allocation3 + $0x978] sm:$0xff] %v1659
        %1668 = vst [vmem:[#allocation3 + $0x9c0] sm:$0xff] %v1660
        %1669 = vst [vmem:[#allocation3 + $0xa08] sm:$0xff] %v1661
        %1670 = vst [vmem:[#allocation3 + $0xa50] sm:$0xff] %v1662
        %1671 = vst [vmem:[#allocation3 + $0xa98] sm:$0xff] %v1663
        %1672 = vst [vmem:[#allocation3 + $0xae0] sm:$0xff] %v1664
        %1673 = vst [vmem:[#allocation3 + $0xb28] sm:$0xff] %v1665
        %v1674 = vld [vmem:[#allocation2 + $0x120] sm:$0xff]
        %v1675 = vld [vmem:[#allocation2 + $0x128] sm:$0xff]
        %v1676 = vld [vmem:[#allocation2 + $0x130] sm:$0xff]
        %v1677 = vld [vmem:[#allocation2 + $0x138] sm:$0xff]
        %v1678 = vld [vmem:[#allocation2 + $0x140] sm:$0xff]
        %v1679 = vld [vmem:[#allocation2 + $0x148] sm:$0xff]
        %v1680 = vld [vmem:[#allocation2 + $0x150] sm:$0xff]
        %v1681 = vld [vmem:[#allocation2 + $0x158] sm:$0xff]
        %v1682 = vld [vmem:[%s1 + $0x938] sm:$0xff]
        %v1683 = vld [vmem:[%s1 + $0x980] sm:$0xff]
        %v1684 = vld [vmem:[%s1 + $0x9c8] sm:$0xff]
        %v1685 = vld [vmem:[%s1 + $0xa10] sm:$0xff]
        %v1686 = vld [vmem:[%s1 + $0xa58] sm:$0xff]
        %v1687 = vld [vmem:[%s1 + $0xaa0] sm:$0xff]
        %v1688 = vld [vmem:[%s1 + $0xae8] sm:$0xff]
        %v1689 = vld [vmem:[%s1 + $0xb30] sm:$0xff]
        %v1690 = vmul.f32 %v1674, %v1682
        %v1691 = vmul.f32 %v1675, %v1683
        %v1692 = vmul.f32 %v1676, %v1684
        %v1693 = vmul.f32 %v1677, %v1685
        %v1694 = vmul.f32 %v1678, %v1686
        %v1695 = vmul.f32 %v1679, %v1687
        %v1696 = vmul.f32 %v1680, %v1688
        %v1697 = vmul.f32 %v1681, %v1689
        %1698 = vst [vmem:[#allocation3 + $0x938] sm:$0xff] %v1690
        %1699 = vst [vmem:[#allocation3 + $0x980] sm:$0xff] %v1691
        %1700 = vst [vmem:[#allocation3 + $0x9c8] sm:$0xff] %v1692
        %1701 = vst [vmem:[#allocation3 + $0xa10] sm:$0xff] %v1693
        %1702 = vst [vmem:[#allocation3 + $0xa58] sm:$0xff] %v1694
        %1703 = vst [vmem:[#allocation3 + $0xaa0] sm:$0xff] %v1695
        %1704 = vst [vmem:[#allocation3 + $0xae8] sm:$0xff] %v1696
        %1705 = vst [vmem:[#allocation3 + $0xb30] sm:$0xff] %v1697
        %v1706 = vld [vmem:[#allocation2 + $0x121] sm:$0xff]
        %v1707 = vld [vmem:[#allocation2 + $0x129] sm:$0xff]
        %v1708 = vld [vmem:[#allocation2 + $0x131] sm:$0xff]
        %v1709 = vld [vmem:[#allocation2 + $0x139] sm:$0xff]
        %v1710 = vld [vmem:[#allocation2 + $0x141] sm:$0xff]
        %v1711 = vld [vmem:[#allocation2 + $0x149] sm:$0xff]
        %v1712 = vld [vmem:[#allocation2 + $0x151] sm:$0xff]
        %v1713 = vld [vmem:[#allocation2 + $0x159] sm:$0xff]
        %v1714 = vld [vmem:[%s1 + $0x940] sm:$0xff]
        %v1715 = vld [vmem:[%s1 + $0x988] sm:$0xff]
        %v1716 = vld [vmem:[%s1 + $0x9d0] sm:$0xff]
        %v1717 = vld [vmem:[%s1 + $0xa18] sm:$0xff]
        %v1718 = vld [vmem:[%s1 + $0xa60] sm:$0xff]
        %v1719 = vld [vmem:[%s1 + $0xaa8] sm:$0xff]
        %v1720 = vld [vmem:[%s1 + $0xaf0] sm:$0xff]
        %v1721 = vld [vmem:[%s1 + $0xb38] sm:$0xff]
        %v1722 = vmul.f32 %v1706, %v1714
        %v1723 = vmul.f32 %v1707, %v1715
        %v1724 = vmul.f32 %v1708, %v1716
        %v1725 = vmul.f32 %v1709, %v1717
        %v1726 = vmul.f32 %v1710, %v1718
        %v1727 = vmul.f32 %v1711, %v1719
        %v1728 = vmul.f32 %v1712, %v1720
        %v1729 = vmul.f32 %v1713, %v1721
        %1730 = vst [vmem:[#allocation3 + $0x940] sm:$0xff] %v1722
        %1731 = vst [vmem:[#allocation3 + $0x988] sm:$0xff] %v1723
        %1732 = vst [vmem:[#allocation3 + $0x9d0] sm:$0xff] %v1724
        %1733 = vst [vmem:[#allocation3 + $0xa18] sm:$0xff] %v1725
        %1734 = vst [vmem:[#allocation3 + $0xa60] sm:$0xff] %v1726
        %1735 = vst [vmem:[#allocation3 + $0xaa8] sm:$0xff] %v1727
        %1736 = vst [vmem:[#allocation3 + $0xaf0] sm:$0xff] %v1728
        %1737 = vst [vmem:[#allocation3 + $0xb38] sm:$0xff] %v1729
        %v1738 = vld [vmem:[#allocation2 + $0x153] sm:$0xff]
        %v1739 = vld [vmem:[#allocation2 + $0x15b] sm:$0xff]
        %v1740 = vld [vmem:[%s1 + $0xb40] sm:$0xff]
        %v1741 = vld [vmem:[%s1 + $0xb88] sm:$0xff]
        %v1742 = vmul.f32 %v1738, %v1740
        %v1743 = vmul.f32 %v1739, %v1741
        %1744 = vst [vmem:[#allocation3 + $0xb40] sm:$0xff] %v1742
        %1745 = vst [vmem:[#allocation3 + $0xb88] sm:$0xff] %v1743
        %v1746 = vld [vmem:[#allocation2 + $0x154] sm:$0xff]
        %v1747 = vld [vmem:[#allocation2 + $0x15c] sm:$0xff]
        %v1748 = vld [vmem:[%s1 + $0xb48] sm:$0xff]
        %v1749 = vld [vmem:[%s1 + $0xb90] sm:$0xff]
        %v1750 = vmul.f32 %v1746, %v1748
        %v1751 = vmul.f32 %v1747, %v1749
        %1752 = vst [vmem:[#allocation3 + $0xb48] sm:$0xff] %v1750
        %1753 = vst [vmem:[#allocation3 + $0xb90] sm:$0xff] %v1751
        %v1754 = vld [vmem:[#allocation2 + $0x155] sm:$0xff]
        %v1755 = vld [vmem:[#allocation2 + $0x15d] sm:$0xff]
        %v1756 = vld [vmem:[%s1 + $0xb50] sm:$0xff]
        %v1757 = vld [vmem:[%s1 + $0xb98] sm:$0xff]
        %v1758 = vmul.f32 %v1754, %v1756
        %v1759 = vmul.f32 %v1755, %v1757
        %1760 = vst [vmem:[#allocation3 + $0xb50] sm:$0xff] %v1758
        %1761 = vst [vmem:[#allocation3 + $0xb98] sm:$0xff] %v1759
        %v1762 = vld [vmem:[#allocation2 + $0x157] sm:$0xff]
        %v1763 = vld [vmem:[#allocation2 + $0x15f] sm:$0xff]
        %v1764 = vld [vmem:[%s1 + $0xb58] sm:$0xff]
        %v1765 = vld [vmem:[%s1 + $0xba0] sm:$0xff]
        %v1766 = vmul.f32 %v1762, %v1764
        %v1767 = vmul.f32 %v1763, %v1765
        %1768 = vst [vmem:[#allocation3 + $0xb58] sm:$0xff] %v1766
        %1769 = vst [vmem:[#allocation3 + $0xba0] sm:$0xff] %v1767
        %v1770 = vld [vmem:[#allocation2 + $0x158] sm:$0xff]
        %v1771 = vld [vmem:[#allocation2 + $0x160] sm:$0xff]
        %v1772 = vld [vmem:[%s1 + $0xb60] sm:$0xff]
        %v1773 = vld [vmem:[%s1 + $0xba8] sm:$0xff]
        %v1774 = vmul.f32 %v1770, %v1772
        %v1775 = vmul.f32 %v1771, %v1773
        %1776 = vst [vmem:[#allocation3 + $0xb60] sm:$0xff] %v1774
        %1777 = vst [vmem:[#allocation3 + $0xba8] sm:$0xff] %v1775
        %v1778 = vld [vmem:[#allocation2 + $0x159] sm:$0xff]
        %v1779 = vld [vmem:[#allocation2 + $0x161] sm:$0xff]
        %v1780 = vld [vmem:[%s1 + $0xb68] sm:$0xff]
        %v1781 = vld [vmem:[%s1 + $0xbb0] sm:$0xff]
        %v1782 = vmul.f32 %v1778, %v1780
        %v1783 = vmul.f32 %v1779, %v1781
        %1784 = vst [vmem:[#allocation3 + $0xb68] sm:$0xff] %v1782
        %1785 = vst [vmem:[#allocation3 + $0xbb0] sm:$0xff] %v1783
        %v1786 = vld [vmem:[#allocation2 + $0x15b] sm:$0xff]
        %v1787 = vld [vmem:[#allocation2 + $0x163] sm:$0xff]
        %v1788 = vld [vmem:[%s1 + $0xb70] sm:$0xff]
        %v1789 = vld [vmem:[%s1 + $0xbb8] sm:$0xff]
        %v1790 = vmul.f32 %v1786, %v1788
        %v1791 = vmul.f32 %v1787, %v1789
        %1792 = vst [vmem:[#allocation3 + $0xb70] sm:$0xff] %v1790
        %1793 = vst [vmem:[#allocation3 + $0xbb8] sm:$0xff] %v1791
        %v1794 = vld [vmem:[#allocation2 + $0x15c] sm:$0xff]
        %v1795 = vld [vmem:[#allocation2 + $0x164] sm:$0xff]
        %v1796 = vld [vmem:[%s1 + $0xb78] sm:$0xff]
        %v1797 = vld [vmem:[%s1 + $0xbc0] sm:$0xff]
        %v1798 = vmul.f32 %v1794, %v1796
        %v1799 = vmul.f32 %v1795, %v1797
        %1800 = vst [vmem:[#allocation3 + $0xb78] sm:$0xff] %v1798
        %1801 = vst [vmem:[#allocation3 + $0xbc0] sm:$0xff] %v1799
        %v1802 = vld [vmem:[#allocation2 + $0x15d] sm:$0xff]
        %v1803 = vld [vmem:[#allocation2 + $0x165] sm:$0xff]
        %v1804 = vld [vmem:[%s1 + $0xb80] sm:$0xff]
        %v1805 = vld [vmem:[%s1 + $0xbc8] sm:$0xff]
        %v1806 = vmul.f32 %v1802, %v1804
        %v1807 = vmul.f32 %v1803, %v1805
        %1808 = vst [vmem:[#allocation3 + $0xb80] sm:$0xff] %v1806
        %1809 = vst [vmem:[#allocation3 + $0xbc8] sm:$0xff] %v1807
        %v1810 = vld [vmem:[#allocation2 + $0x165] sm:$0xff]
        %v1811 = vld [vmem:[%s1 + $0xbd0] sm:$0xff]
        %v1812 = vmul.f32 %v1810, %v1811
        %1813 = vst [vmem:[#allocation3 + $0xbd0] sm:$0xff] %v1812
        %v1814 = vld [vmem:[#allocation2 + $0x166] sm:$0xff]
        %v1815 = vld [vmem:[%s1 + $0xbd8] sm:$0xff]
        %v1816 = vmul.f32 %v1814, %v1815
        %1817 = vst [vmem:[#allocation3 + $0xbd8] sm:$0xff] %v1816
        %v1818 = vld [vmem:[#allocation2 + $0x167] sm:$0xff]
        %v1819 = vld [vmem:[%s1 + $0xbe0] sm:$0xff]
        %v1820 = vmul.f32 %v1818, %v1819
        %1821 = vst [vmem:[#allocation3 + $0xbe0] sm:$0xff] %v1820
        %v1822 = vld [vmem:[#allocation2 + $0x167] sm:$0xff]
        %v1823 = vld [vmem:[%s1 + $0xbe8] sm:$0xff]
        %v1824 = vmul.f32 %v1822, %v1823
        %1825 = vst [vmem:[#allocation3 + $0xbe8] sm:$0xff] %v1824
        %v1826 = vld [vmem:[#allocation2 + $0x168] sm:$0xff]
        %v1827 = vld [vmem:[%s1 + $0xbf0] sm:$0xff]
        %v1828 = vmul.f32 %v1826, %v1827
        %1829 = vst [vmem:[#allocation3 + $0xbf0] sm:$0xff] %v1828
        %v1830 = vld [vmem:[#allocation2 + $0x169] sm:$0xff]
        %v1831 = vld [vmem:[%s1 + $0xbf8] sm:$0xff]
        %v1832 = vmul.f32 %v1830, %v1831
        %1833 = vst [vmem:[#allocation3 + $0xbf8] sm:$0xff] %v1832
        %v1834 = vld [vmem:[#allocation2 + $0x169] sm:$0xff]
        %v1835 = vld [vmem:[%s1 + $0xc00] sm:$0xff]
        %v1836 = vmul.f32 %v1834, %v1835
        %1837 = vst [vmem:[#allocation3 + $0xc00] sm:$0xff] %v1836
        %v1838 = vld [vmem:[#allocation2 + $0x16a] sm:$0xff]
        %v1839 = vld [vmem:[%s1 + $0xc08] sm:$0xff]
        %v1840 = vmul.f32 %v1838, %v1839
        %1841 = vst [vmem:[#allocation3 + $0xc08] sm:$0xff] %v1840
        %v1842 = vld [vmem:[#allocation2 + $0x16b] sm:$0xff]
        %v1843 = vld [vmem:[%s1 + $0xc10] sm:$0xff]
        %v1844 = vmul.f32 %v1842, %v1843
        %1845 = vst [vmem:[#allocation3 + $0xc10] sm:$0xff] %v1844
        %v1846 = vld [vmem:[#allocation2 + $0x16e] sm:$0xff]
        %v1847 = vld [vmem:[%s1 + $0xc18] sm:$0xff]
        %v1848 = vmul.f32 %v1846, %v1847
        %1849 = vst [vmem:[#allocation3 + $0xc18] sm:$0xff] %v1848
        %v1850 = vld [vmem:[#allocation2 + $0x16f] sm:$0xff]
        %v1851 = vld [vmem:[%s1 + $0xc20] sm:$0xff]
        %v1852 = vmul.f32 %v1850, %v1851
        %1853 = vst [vmem:[#allocation3 + $0xc20] sm:$0xff] %v1852
        %v1854 = vld [vmem:[#allocation2 + $0x170] sm:$0xff]
        %v1855 = vld [vmem:[%s1 + $0xc28] sm:$0xff]
        %v1856 = vmul.f32 %v1854, %v1855
        %1857 = vst [vmem:[#allocation3 + $0xc28] sm:$0xff] %v1856
        %v1858 = vld [vmem:[#allocation2 + $0x16f] sm:$0xff]
        %v1859 = vld [vmem:[%s1 + $0xc30] sm:$0xff]
        %v1860 = vmul.f32 %v1858, %v1859
        %1861 = vst [vmem:[#allocation3 + $0xc30] sm:$0xff] %v1860
        %v1862 = vld [vmem:[#allocation2 + $0x170] sm:$0xff]
        %v1863 = vld [vmem:[%s1 + $0xc38] sm:$0xff]
        %v1864 = vmul.f32 %v1862, %v1863
        %1865 = vst [vmem:[#allocation3 + $0xc38] sm:$0xff] %v1864
        %v1866 = vld [vmem:[#allocation2 + $0x171] sm:$0xff]
        %v1867 = vld [vmem:[%s1 + $0xc40] sm:$0xff]
        %v1868 = vmul.f32 %v1866, %v1867
        %1869 = vst [vmem:[#allocation3 + $0xc40] sm:$0xff] %v1868
        %v1870 = vld [vmem:[#allocation2 + $0x170] sm:$0xff]
        %v1871 = vld [vmem:[%s1 + $0xc48] sm:$0xff]
        %v1872 = vmul.f32 %v1870, %v1871
        %1873 = vst [vmem:[#allocation3 + $0xc48] sm:$0xff] %v1872
        %v1874 = vld [vmem:[#allocation2 + $0x171] sm:$0xff]
        %v1875 = vld [vmem:[%s1 + $0xc50] sm:$0xff]
        %v1876 = vmul.f32 %v1874, %v1875
        %1877 = vst [vmem:[#allocation3 + $0xc50] sm:$0xff] %v1876
        %v1878 = vld [vmem:[#allocation2 + $0x172] sm:$0xff]
        %v1879 = vld [vmem:[%s1 + $0xc58] sm:$0xff]
        %v1880 = vmul.f32 %v1878, %v1879
        %1881 = vst [vmem:[#allocation3 + $0xc58] sm:$0xff] %v1880
        %v1882 = vld [vmem:[#allocation3] sm:$0xff]
        %v1883 = vld [vmem:[#allocation3 + $0x8] sm:$0xff]
        %v1884 = vld [vmem:[#allocation3 + $0x10] sm:$0xff]
        %v1885 = vld [vmem:[#allocation3 + $0x18] sm:$0xff]
        %v1886 = vld [vmem:[#allocation3 + $0x20] sm:$0xff]
        %v1887 = vld [vmem:[#allocation3 + $0x28] sm:$0xff]
        %v1888 = vld [vmem:[#allocation3 + $0x30] sm:$0xff]
        %v1889 = vld [vmem:[#allocation3 + $0x38] sm:$0xff]
        %v1890 = vld [vmem:[#allocation3 + $0x40] sm:$0xff]
        %v1891 = vld [vmem:[#allocation3 + $0x48] sm:$0xff]
        %v1892 = vld [vmem:[#allocation3 + $0x50] sm:$0xff]
        %v1893 = vld [vmem:[#allocation3 + $0x58] sm:$0xff]
        %v1894 = vld [vmem:[#allocation3 + $0x60] sm:$0xff]
        %v1895 = vld [vmem:[#allocation3 + $0x68] sm:$0xff]
        %v1896 = vld [vmem:[#allocation3 + $0x70] sm:$0xff]
        %v1897 = vld [vmem:[#allocation3 + $0x78] sm:$0xff]
        %v1898 = vld [vmem:[#allocation3 + $0x80] sm:$0xff]
        %v1899 = vld [vmem:[#allocation3 + $0x88] sm:$0xff]
        %v1900 = vld [vmem:[#allocation3 + $0x90] sm:$0xff]
        %v1901 = vld [vmem:[#allocation3 + $0x98] sm:$0xff]
        %v1902 = vld [vmem:[#allocation3 + $0xa0] sm:$0xff]
        %v1903 = vld [vmem:[#allocation3 + $0xa8] sm:$0xff]
        %v1904 = vld [vmem:[#allocation3 + $0xb0] sm:$0xff]
        %v1905 = vld [vmem:[#allocation3 + $0xb8] sm:$0xff]
        %v1906 = vld [vmem:[#allocation3 + $0xc0] sm:$0xff]
        %v1907 = vld [vmem:[#allocation3 + $0xc8] sm:$0xff]
        %v1908 = vld [vmem:[#allocation3 + $0xd0] sm:$0xff]
        %v1909 = vld [vmem:[#allocation3 + $0xd8] sm:$0xff]
        %v1910 = vld [vmem:[#allocation3 + $0xe0] sm:$0xff]
        %v1911 = vld [vmem:[#allocation3 + $0xe8] sm:$0xff]
        %v1912 = vld [vmem:[#allocation3 + $0xf0] sm:$0xff]
        %v1913 = vld [vmem:[#allocation3 + $0xf8] sm:$0xff]
        %v1914 = vld [vmem:[#allocation3 + $0x100] sm:$0xff]
        %v1915 = vld [vmem:[#allocation3 + $0x108] sm:$0xff]
        %v1916 = vld [vmem:[#allocation3 + $0x110] sm:$0xff]
        %v1917 = vld [vmem:[#allocation3 + $0x118] sm:$0xff]
        %v1918 = vld [vmem:[#allocation3 + $0x120] sm:$0xff]
        %v1919 = vld [vmem:[#allocation3 + $0x128] sm:$0xff]
        %v1920 = vld [vmem:[#allocation3 + $0x130] sm:$0xff]
        %v1921 = vld [vmem:[#allocation3 + $0x138] sm:$0xff]
        %v1922 = vld [vmem:[#allocation3 + $0x140] sm:$0xff]
        %v1923 = vld [vmem:[#allocation3 + $0x148] sm:$0xff]
        %v1924 = vld [vmem:[#allocation3 + $0x150] sm:$0xff]
        %v1925 = vld [vmem:[#allocation3 + $0x158] sm:$0xff]
        %v1926 = vld [vmem:[#allocation3 + $0x160] sm:$0xff]
        %v1927 = vld [vmem:[#allocation3 + $0x168] sm:$0xff]
        %v1928 = vld [vmem:[#allocation3 + $0x170] sm:$0xff]
        %v1929 = vld [vmem:[#allocation3 + $0x178] sm:$0xff]
        %v1930 = vld [vmem:[#allocation3 + $0x180] sm:$0xff]
        %v1931 = vld [vmem:[#allocation3 + $0x188] sm:$0xff]
        %v1932 = vld [vmem:[#allocation3 + $0x190] sm:$0xff]
        %v1933 = vld [vmem:[#allocation3 + $0x198] sm:$0xff]
        %v1934 = vld [vmem:[#allocation3 + $0x1a0] sm:$0xff]
        %v1935 = vld [vmem:[#allocation3 + $0x1a8] sm:$0xff]
        %v1936 = vld [vmem:[#allocation3 + $0x1b0] sm:$0xff]
        %v1937 = vld [vmem:[#allocation3 + $0x1b8] sm:$0xff]
        %v1938 = vld [vmem:[#allocation3 + $0x1c0] sm:$0xff]
        %v1939 = vld [vmem:[#allocation3 + $0x1c8] sm:$0xff]
        %v1940 = vld [vmem:[#allocation3 + $0x1d0] sm:$0xff]
        %v1941 = vld [vmem:[#allocation3 + $0x1d8] sm:$0xff]
        %v1942 = vld [vmem:[#allocation3 + $0x1e0] sm:$0xff]
        %v1943 = vld [vmem:[#allocation3 + $0x1e8] sm:$0xff]
        %v1944 = vld [vmem:[#allocation3 + $0x1f0] sm:$0xff]
        %v1945 = vld [vmem:[#allocation3 + $0x1f8] sm:$0xff]
        %v1946 = vld [vmem:[#allocation3 + $0x200] sm:$0xff]
        %v1947 = vld [vmem:[#allocation3 + $0x208] sm:$0xff]
        %v1948 = vld [vmem:[#allocation3 + $0x210] sm:$0xff]
        %v1949 = vld [vmem:[#allocation3 + $0x218] sm:$0xff]
        %v1950 = vld [vmem:[#allocation3 + $0x220] sm:$0xff]
        %v1951 = vld [vmem:[#allocation3 + $0x228] sm:$0xff]
        %v1952 = vld [vmem:[#allocation3 + $0x230] sm:$0xff]
        %v1953 = vld [vmem:[#allocation3 + $0x238] sm:$0xff]
        %v1954 = vld [vmem:[#allocation3 + $0x240] sm:$0xff]
        %v1955 = vld [vmem:[#allocation3 + $0x248] sm:$0xff]
        %v1956 = vld [vmem:[#allocation3 + $0x250] sm:$0xff]
        %v1957 = vld [vmem:[#allocation3 + $0x258] sm:$0xff]
        %v1958 = vld [vmem:[#allocation3 + $0x260] sm:$0xff]
        %v1959 = vld [vmem:[#allocation3 + $0x268] sm:$0xff]
        %v1960 = vld [vmem:[#allocation3 + $0x270] sm:$0xff]
        %v1961 = vld [vmem:[#allocation3 + $0x278] sm:$0xff]
        %v1962 = vld [vmem:[#allocation3 + $0x280] sm:$0xff]
        %v1963 = vld [vmem:[#allocation3 + $0x288] sm:$0xff]
        %v1964 = vld [vmem:[#allocation3 + $0x290] sm:$0xff]
        %v1965 = vld [vmem:[#allocation3 + $0x298] sm:$0xff]
        %v1966 = vld [vmem:[#allocation3 + $0x2a0] sm:$0xff]
        %v1967 = vld [vmem:[#allocation3 + $0x2a8] sm:$0xff]
        %v1968 = vld [vmem:[#allocation3 + $0x2b0] sm:$0xff]
        %v1969 = vld [vmem:[#allocation3 + $0x2b8] sm:$0xff]
        %v1970 = vld [vmem:[#allocation3 + $0x2c0] sm:$0xff]
        %v1971 = vld [vmem:[#allocation3 + $0x2c8] sm:$0xff]
        %v1972 = vld [vmem:[#allocation3 + $0x2d0] sm:$0xff]
        %v1973 = vld [vmem:[#allocation3 + $0x2d8] sm:$0xff]
        %v1974 = vld [vmem:[#allocation3 + $0x2e0] sm:$0xff]
        %v1975 = vld [vmem:[#allocation3 + $0x2e8] sm:$0xff]
        %v1976 = vld [vmem:[#allocation3 + $0x2f0] sm:$0xff]
        %v1977 = vld [vmem:[#allocation3 + $0x2f8] sm:$0xff]
        %v1978 = vld [vmem:[#allocation3 + $0x300] sm:$0xff]
        %v1979 = vld [vmem:[#allocation3 + $0x308] sm:$0xff]
        %v1980 = vld [vmem:[#allocation3 + $0x310] sm:$0xff]
        %v1981 = vld [vmem:[#allocation3 + $0x318] sm:$0xff]
        %v1982 = vld [vmem:[#allocation3 + $0x320] sm:$0xff]
        %v1983 = vld [vmem:[#allocation3 + $0x328] sm:$0xff]
        %v1984 = vld [vmem:[#allocation3 + $0x330] sm:$0xff]
        %v1985 = vld [vmem:[#allocation3 + $0x338] sm:$0xff]
        %v1986 = vld [vmem:[#allocation3 + $0x340] sm:$0xff]
        %v1987 = vld [vmem:[#allocation3 + $0x348] sm:$0xff]
        %v1988 = vld [vmem:[#allocation3 + $0x350] sm:$0xff]
        %v1989 = vld [vmem:[#allocation3 + $0x358] sm:$0xff]
        %v1990 = vld [vmem:[#allocation3 + $0x360] sm:$0xff]
        %v1991 = vld [vmem:[#allocation3 + $0x368] sm:$0xff]
        %v1992 = vld [vmem:[#allocation3 + $0x370] sm:$0xff]
        %v1993 = vld [vmem:[#allocation3 + $0x378] sm:$0xff]
        %v1994 = vld [vmem:[#allocation3 + $0x380] sm:$0xff]
        %v1995 = vld [vmem:[#allocation3 + $0x388] sm:$0xff]
        %v1996 = vld [vmem:[#allocation3 + $0x390] sm:$0xff]
        %v1997 = vld [vmem:[#allocation3 + $0x398] sm:$0xff]
        %v1998 = vld [vmem:[#allocation3 + $0x3a0] sm:$0xff]
        %v1999 = vld [vmem:[#allocation3 + $0x3a8] sm:$0xff]
        %v2000 = vld [vmem:[#allocation3 + $0x3b0] sm:$0xff]
        %v2001 = vld [vmem:[#allocation3 + $0x3b8] sm:$0xff]
        %v2002 = vld [vmem:[#allocation3 + $0x3c0] sm:$0xff]
        %v2003 = vld [vmem:[#allocation3 + $0x3c8] sm:$0xff]
        %v2004 = vld [vmem:[#allocation3 + $0x3d0] sm:$0xff]
        %v2005 = vld [vmem:[#allocation3 + $0x3d8] sm:$0xff]
        %v2006 = vld [vmem:[#allocation3 + $0x3e0] sm:$0xff]
        %v2007 = vld [vmem:[#allocation3 + $0x3e8] sm:$0xff]
        %v2008 = vld [vmem:[#allocation3 + $0x3f0] sm:$0xff]
        %v2009 = vld [vmem:[#allocation3 + $0x3f8] sm:$0xff]
        %v2010 = vld [vmem:[#allocation3 + $0x400] sm:$0xff]
        %v2011 = vld [vmem:[#allocation3 + $0x408] sm:$0xff]
        %v2012 = vld [vmem:[#allocation3 + $0x410] sm:$0xff]
        %v2013 = vld [vmem:[#allocation3 + $0x418] sm:$0xff]
        %v2014 = vld [vmem:[#allocation3 + $0x420] sm:$0xff]
        %v2015 = vld [vmem:[#allocation3 + $0x428] sm:$0xff]
        %v2016 = vld [vmem:[#allocation3 + $0x430] sm:$0xff]
        %v2017 = vld [vmem:[#allocation3 + $0x438] sm:$0xff]
        %v2018 = vld [vmem:[#allocation3 + $0x440] sm:$0xff]
        %v2019 = vld [vmem:[#allocation3 + $0x448] sm:$0xff]
        %v2020 = vld [vmem:[#allocation3 + $0x450] sm:$0xff]
        %v2021 = vld [vmem:[#allocation3 + $0x458] sm:$0xff]
        %v2022 = vld [vmem:[#allocation3 + $0x460] sm:$0xff]
        %v2023 = vld [vmem:[#allocation3 + $0x468] sm:$0xff]
        %v2024 = vld [vmem:[#allocation3 + $0x470] sm:$0xff]
        %v2025 = vld [vmem:[#allocation3 + $0x478] sm:$0xff]
        %v2026 = vld [vmem:[#allocation3 + $0x480] sm:$0xff]
        %v2027 = vld [vmem:[#allocation3 + $0x488] sm:$0xff]
        %v2028 = vld [vmem:[#allocation3 + $0x490] sm:$0xff]
        %v2029 = vld [vmem:[#allocation3 + $0x498] sm:$0xff]
        %v2030 = vld [vmem:[#allocation3 + $0x4a0] sm:$0xff]
        %v2031 = vld [vmem:[#allocation3 + $0x4a8] sm:$0xff]
        %v2032 = vld [vmem:[#allocation3 + $0x4b0] sm:$0xff]
        %v2033 = vld [vmem:[#allocation3 + $0x4b8] sm:$0xff]
        %v2034 = vld [vmem:[#allocation3 + $0x4c0] sm:$0xff]
        %v2035 = vld [vmem:[#allocation3 + $0x4c8] sm:$0xff]
        %v2036 = vld [vmem:[#allocation3 + $0x4d0] sm:$0xff]
        %v2037 = vld [vmem:[#allocation3 + $0x4d8] sm:$0xff]
        %v2038 = vld [vmem:[#allocation3 + $0x4e0] sm:$0xff]
        %v2039 = vld [vmem:[#allocation3 + $0x4e8] sm:$0xff]
        %v2040 = vld [vmem:[#allocation3 + $0x4f0] sm:$0xff]
        %v2041 = vld [vmem:[#allocation3 + $0x4f8] sm:$0xff]
        %v2042 = vld [vmem:[#allocation3 + $0x500] sm:$0xff]
        %v2043 = vld [vmem:[#allocation3 + $0x508] sm:$0xff]
        %v2044 = vld [vmem:[#allocation3 + $0x510] sm:$0xff]
        %v2045 = vld [vmem:[#allocation3 + $0x518] sm:$0xff]
        %v2046 = vld [vmem:[#allocation3 + $0x520] sm:$0xff]
        %v2047 = vld [vmem:[#allocation3 + $0x528] sm:$0xff]
        %v2048 = vld [vmem:[#allocation3 + $0x530] sm:$0xff]
        %v2049 = vld [vmem:[#allocation3 + $0x538] sm:$0xff]
        %v2050 = vld [vmem:[#allocation3 + $0x540] sm:$0xff]
        %v2051 = vld [vmem:[#allocation3 + $0x548] sm:$0xff]
        %v2052 = vld [vmem:[#allocation3 + $0x550] sm:$0xff]
        %v2053 = vld [vmem:[#allocation3 + $0x558] sm:$0xff]
        %v2054 = vld [vmem:[#allocation3 + $0x560] sm:$0xff]
        %v2055 = vld [vmem:[#allocation3 + $0x568] sm:$0xff]
        %v2056 = vld [vmem:[#allocation3 + $0x570] sm:$0xff]
        %v2057 = vld [vmem:[#allocation3 + $0x578] sm:$0xff]
        %v2058 = vld [vmem:[#allocation3 + $0x580] sm:$0xff]
        %v2059 = vld [vmem:[#allocation3 + $0x588] sm:$0xff]
        %v2060 = vld [vmem:[#allocation3 + $0x590] sm:$0xff]
        %v2061 = vld [vmem:[#allocation3 + $0x598] sm:$0xff]
        %v2062 = vld [vmem:[#allocation3 + $0x5a0] sm:$0xff]
        %v2063 = vld [vmem:[#allocation3 + $0x5a8] sm:$0xff]
        %v2064 = vld [vmem:[#allocation3 + $0x5b0] sm:$0xff]
        %v2065 = vld [vmem:[#allocation3 + $0x5b8] sm:$0xff]
        %v2066 = vld [vmem:[#allocation3 + $0x5c0] sm:$0xff]
        %v2067 = vld [vmem:[#allocation3 + $0x5c8] sm:$0xff]
        %v2068 = vld [vmem:[#allocation3 + $0x5d0] sm:$0xff]
        %v2069 = vld [vmem:[#allocation3 + $0x5d8] sm:$0xff]
        %v2070 = vld [vmem:[#allocation3 + $0x5e0] sm:$0xff]
        %v2071 = vld [vmem:[#allocation3 + $0x5e8] sm:$0xff]
        %v2072 = vld [vmem:[#allocation3 + $0x5f0] sm:$0xff]
        %v2073 = vld [vmem:[#allocation3 + $0x5f8] sm:$0xff]
        %v2074 = vld [vmem:[#allocation3 + $0x600] sm:$0xff]
        %v2075 = vld [vmem:[#allocation3 + $0x608] sm:$0xff]
        %v2076 = vld [vmem:[#allocation3 + $0x610] sm:$0xff]
        %v2077 = vld [vmem:[#allocation3 + $0x618] sm:$0xff]
        %v2078 = vld [vmem:[#allocation3 + $0x620] sm:$0xff]
        %v2079 = vld [vmem:[#allocation3 + $0x628] sm:$0xff]
        %v2080 = vld [vmem:[#allocation3 + $0x630] sm:$0xff]
        %v2081 = vld [vmem:[#allocation3 + $0x638] sm:$0xff]
        %v2082 = vld [vmem:[#allocation3 + $0x640] sm:$0xff]
        %v2083 = vld [vmem:[#allocation3 + $0x648] sm:$0xff]
        %v2084 = vld [vmem:[#allocation3 + $0x650] sm:$0xff]
        %v2085 = vld [vmem:[#allocation3 + $0x658] sm:$0xff]
        %v2086 = vld [vmem:[#allocation3 + $0x660] sm:$0xff]
        %v2087 = vld [vmem:[#allocation3 + $0x668] sm:$0xff]
        %v2088 = vld [vmem:[#allocation3 + $0x670] sm:$0xff]
        %v2089 = vld [vmem:[#allocation3 + $0x678] sm:$0xff]
        %v2090 = vld [vmem:[#allocation3 + $0x680] sm:$0xff]
        %v2091 = vld [vmem:[#allocation3 + $0x688] sm:$0xff]
        %v2092 = vld [vmem:[#allocation3 + $0x690] sm:$0xff]
        %v2093 = vld [vmem:[#allocation3 + $0x698] sm:$0xff]
        %v2094 = vld [vmem:[#allocation3 + $0x6a0] sm:$0xff]
        %v2095 = vld [vmem:[#allocation3 + $0x6a8] sm:$0xff]
        %v2096 = vld [vmem:[#allocation3 + $0x6b0] sm:$0xff]
        %v2097 = vld [vmem:[#allocation3 + $0x6b8] sm:$0xff]
        %v2098 = vld [vmem:[#allocation3 + $0x6c0] sm:$0xff]
        %v2099 = vld [vmem:[#allocation3 + $0x6c8] sm:$0xff]
        %v2100 = vld [vmem:[#allocation3 + $0x6d0] sm:$0xff]
        %v2101 = vld [vmem:[#allocation3 + $0x6d8] sm:$0xff]
        %v2102 = vld [vmem:[#allocation3 + $0x6e0] sm:$0xff]
        %v2103 = vld [vmem:[#allocation3 + $0x6e8] sm:$0xff]
        %v2104 = vld [vmem:[#allocation3 + $0x6f0] sm:$0xff]
        %v2105 = vld [vmem:[#allocation3 + $0x6f8] sm:$0xff]
        %v2106 = vld [vmem:[#allocation3 + $0x700] sm:$0xff]
        %v2107 = vld [vmem:[#allocation3 + $0x708] sm:$0xff]
        %v2108 = vld [vmem:[#allocation3 + $0x710] sm:$0xff]
        %v2109 = vld [vmem:[#allocation3 + $0x718] sm:$0xff]
        %v2110 = vld [vmem:[#allocation3 + $0x720] sm:$0xff]
        %v2111 = vld [vmem:[#allocation3 + $0x728] sm:$0xff]
        %v2112 = vld [vmem:[#allocation3 + $0x730] sm:$0xff]
        %v2113 = vld [vmem:[#allocation3 + $0x738] sm:$0xff]
        %v2114 = vld [vmem:[#allocation3 + $0x740] sm:$0xff]
        %v2115 = vld [vmem:[#allocation3 + $0x748] sm:$0xff]
        %v2116 = vld [vmem:[#allocation3 + $0x750] sm:$0xff]
        %v2117 = vld [vmem:[#allocation3 + $0x758] sm:$0xff]
        %v2118 = vld [vmem:[#allocation3 + $0x760] sm:$0xff]
        %v2119 = vld [vmem:[#allocation3 + $0x768] sm:$0xff]
        %v2120 = vld [vmem:[#allocation3 + $0x770] sm:$0xff]
        %v2121 = vld [vmem:[#allocation3 + $0x778] sm:$0xff]
        %v2122 = vld [vmem:[#allocation3 + $0x780] sm:$0xff]
        %v2123 = vld [vmem:[#allocation3 + $0x788] sm:$0xff]
        %v2124 = vld [vmem:[#allocation3 + $0x790] sm:$0xff]
        %v2125 = vld [vmem:[#allocation3 + $0x798] sm:$0xff]
        %v2126 = vld [vmem:[#allocation3 + $0x7a0] sm:$0xff]
        %v2127 = vld [vmem:[#allocation3 + $0x7a8] sm:$0xff]
        %v2128 = vld [vmem:[#allocation3 + $0x7b0] sm:$0xff]
        %v2129 = vld [vmem:[#allocation3 + $0x7b8] sm:$0xff]
        %v2130 = vld [vmem:[#allocation3 + $0x7c0] sm:$0xff]
        %v2131 = vld [vmem:[#allocation3 + $0x7c8] sm:$0xff]
        %v2132 = vld [vmem:[#allocation3 + $0x7d0] sm:$0xff]
        %v2133 = vld [vmem:[#allocation3 + $0x7d8] sm:$0xff]
        %v2134 = vld [vmem:[#allocation3 + $0x7e0] sm:$0xff]
        %v2135 = vld [vmem:[#allocation3 + $0x7e8] sm:$0xff]
        %v2136 = vld [vmem:[#allocation3 + $0x7f0] sm:$0xff]
        %v2137 = vld [vmem:[#allocation3 + $0x7f8] sm:$0xff]
        %v2138 = vld [vmem:[#allocation3 + $0x800] sm:$0xff]
        %v2139 = vld [vmem:[#allocation3 + $0x808] sm:$0xff]
        %v2140 = vld [vmem:[#allocation3 + $0x810] sm:$0xff]
        %v2141 = vld [vmem:[#allocation3 + $0x818] sm:$0xff]
        %v2142 = vld [vmem:[#allocation3 + $0x820] sm:$0xff]
        %v2143 = vld [vmem:[#allocation3 + $0x828] sm:$0xff]
        %v2144 = vld [vmem:[#allocation3 + $0x830] sm:$0xff]
        %v2145 = vld [vmem:[#allocation3 + $0x838] sm:$0xff]
        %v2146 = vld [vmem:[#allocation3 + $0x840] sm:$0xff]
        %v2147 = vld [vmem:[#allocation3 + $0x848] sm:$0xff]
        %v2148 = vld [vmem:[#allocation3 + $0x850] sm:$0xff]
        %v2149 = vld [vmem:[#allocation3 + $0x858] sm:$0xff]
        %v2150 = vld [vmem:[#allocation3 + $0x860] sm:$0xff]
        %v2151 = vld [vmem:[#allocation3 + $0x868] sm:$0xff]
        %v2152 = vld [vmem:[#allocation3 + $0x870] sm:$0xff]
        %v2153 = vld [vmem:[#allocation3 + $0x878] sm:$0xff]
        %v2154 = vld [vmem:[#allocation3 + $0x880] sm:$0xff]
        %v2155 = vld [vmem:[#allocation3 + $0x888] sm:$0xff]
        %v2156 = vld [vmem:[#allocation3 + $0x890] sm:$0xff]
        %v2157 = vld [vmem:[#allocation3 + $0x898] sm:$0xff]
        %v2158 = vld [vmem:[#allocation3 + $0x8a0] sm:$0xff]
        %v2159 = vld [vmem:[#allocation3 + $0x8a8] sm:$0xff]
        %v2160 = vld [vmem:[#allocation3 + $0x8b0] sm:$0xff]
        %v2161 = vld [vmem:[#allocation3 + $0x8b8] sm:$0xff]
        %v2162 = vld [vmem:[#allocation3 + $0x8c0] sm:$0xff]
        %v2163 = vld [vmem:[#allocation3 + $0x8c8] sm:$0xff]
        %v2164 = vld [vmem:[#allocation3 + $0x8d0] sm:$0xff]
        %v2165 = vld [vmem:[#allocation3 + $0x8d8] sm:$0xff]
        %v2166 = vld [vmem:[#allocation3 + $0x8e0] sm:$0xff]
        %v2167 = vld [vmem:[#allocation3 + $0x8e8] sm:$0xff]
        %v2168 = vld [vmem:[#allocation3 + $0x8f0] sm:$0xff]
        %v2169 = vld [vmem:[#allocation3 + $0x8f8] sm:$0xff]
        %v2170 = vld [vmem:[#allocation3 + $0x900] sm:$0xff]
        %v2171 = vld [vmem:[#allocation3 + $0x908] sm:$0xff]
        %v2172 = vld [vmem:[#allocation3 + $0x910] sm:$0xff]
        %v2173 = vld [vmem:[#allocation3 + $0x918] sm:$0xff]
        %v2174 = vld [vmem:[#allocation3 + $0x920] sm:$0xff]
        %v2175 = vld [vmem:[#allocation3 + $0x928] sm:$0xff]
        %v2176 = vld [vmem:[#allocation3 + $0x930] sm:$0xff]
        %v2177 = vld [vmem:[#allocation3 + $0x938] sm:$0xff]
        %v2178 = vld [vmem:[#allocation3 + $0x940] sm:$0xff]
        %v2179 = vld [vmem:[#allocation3 + $0x948] sm:$0xff]
        %v2180 = vld [vmem:[#allocation3 + $0x950] sm:$0xff]
        %v2181 = vld [vmem:[#allocation3 + $0x958] sm:$0xff]
        %v2182 = vld [vmem:[#allocation3 + $0x960] sm:$0xff]
        %v2183 = vld [vmem:[#allocation3 + $0x968] sm:$0xff]
        %v2184 = vld [vmem:[#allocation3 + $0x970] sm:$0xff]
        %v2185 = vld [vmem:[#allocation3 + $0x978] sm:$0xff]
        %v2186 = vld [vmem:[#allocation3 + $0x980] sm:$0xff]
        %v2187 = vld [vmem:[#allocation3 + $0x988] sm:$0xff]
        %v2188 = vld [vmem:[#allocation3 + $0x990] sm:$0xff]
        %v2189 = vld [vmem:[#allocation3 + $0x998] sm:$0xff]
        %v2190 = vld [vmem:[#allocation3 + $0x9a0] sm:$0xff]
        %v2191 = vld [vmem:[#allocation3 + $0x9a8] sm:$0xff]
        %v2192 = vld [vmem:[#allocation3 + $0x9b0] sm:$0xff]
        %v2193 = vld [vmem:[#allocation3 + $0x9b8] sm:$0xff]
        %v2194 = vld [vmem:[#allocation3 + $0x9c0] sm:$0xff]
        %v2195 = vld [vmem:[#allocation3 + $0x9c8] sm:$0xff]
        %v2196 = vld [vmem:[#allocation3 + $0x9d0] sm:$0xff]
        %v2197 = vld [vmem:[#allocation3 + $0x9d8] sm:$0xff]
        %v2198 = vld [vmem:[#allocation3 + $0x9e0] sm:$0xff]
        %v2199 = vld [vmem:[#allocation3 + $0x9e8] sm:$0xff]
        %v2200 = vld [vmem:[#allocation3 + $0x9f0] sm:$0xff]
        %v2201 = vld [vmem:[#allocation3 + $0x9f8] sm:$0xff]
        %v2202 = vld [vmem:[#allocation3 + $0xa00] sm:$0xff]
        %v2203 = vld [vmem:[#allocation3 + $0xa08] sm:$0xff]
        %v2204 = vld [vmem:[#allocation3 + $0xa10] sm:$0xff]
        %v2205 = vld [vmem:[#allocation3 + $0xa18] sm:$0xff]
        %v2206 = vld [vmem:[#allocation3 + $0xa20] sm:$0xff]
        %v2207 = vld [vmem:[#allocation3 + $0xa28] sm:$0xff]
        %v2208 = vld [vmem:[#allocation3 + $0xa30] sm:$0xff]
        %v2209 = vld [vmem:[#allocation3 + $0xa38] sm:$0xff]
        %v2210 = vld [vmem:[#allocation3 + $0xa40] sm:$0xff]
        %v2211 = vld [vmem:[#allocation3 + $0xa48] sm:$0xff]
        %v2212 = vld [vmem:[#allocation3 + $0xa50] sm:$0xff]
        %v2213 = vld [vmem:[#allocation3 + $0xa58] sm:$0xff]
        %v2214 = vld [vmem:[#allocation3 + $0xa60] sm:$0xff]
        %v2215 = vld [vmem:[#allocation3 + $0xa68] sm:$0xff]
        %v2216 = vld [vmem:[#allocation3 + $0xa70] sm:$0xff]
        %v2217 = vld [vmem:[#allocation3 + $0xa78] sm:$0xff]
        %v2218 = vld [vmem:[#allocation3 + $0xa80] sm:$0xff]
        %v2219 = vld [vmem:[#allocation3 + $0xa88] sm:$0xff]
        %v2220 = vld [vmem:[#allocation3 + $0xa90] sm:$0xff]
        %v2221 = vld [vmem:[#allocation3 + $0xa98] sm:$0xff]
        %v2222 = vld [vmem:[#allocation3 + $0xaa0] sm:$0xff]
        %v2223 = vld [vmem:[#allocation3 + $0xaa8] sm:$0xff]
        %v2224 = vld [vmem:[#allocation3 + $0xab0] sm:$0xff]
        %v2225 = vld [vmem:[#allocation3 + $0xab8] sm:$0xff]
        %v2226 = vld [vmem:[#allocation3 + $0xac0] sm:$0xff]
        %v2227 = vld [vmem:[#allocation3 + $0xac8] sm:$0xff]
        %v2228 = vld [vmem:[#allocation3 + $0xad0] sm:$0xff]
        %v2229 = vld [vmem:[#allocation3 + $0xad8] sm:$0xff]
        %v2230 = vld [vmem:[#allocation3 + $0xae0] sm:$0xff]
        %v2231 = vld [vmem:[#allocation3 + $0xae8] sm:$0xff]
        %v2232 = vld [vmem:[#allocation3 + $0xaf0] sm:$0xff]
        %v2233 = vld [vmem:[#allocation3 + $0xaf8] sm:$0xff]
        %v2234 = vld [vmem:[#allocation3 + $0xb00] sm:$0xff]
        %v2235 = vld [vmem:[#allocation3 + $0xb08] sm:$0xff]
        %v2236 = vld [vmem:[#allocation3 + $0xb10] sm:$0xff]
        %v2237 = vld [vmem:[#allocation3 + $0xb18] sm:$0xff]
        %v2238 = vld [vmem:[#allocation3 + $0xb20] sm:$0xff]
        %v2239 = vld [vmem:[#allocation3 + $0xb28] sm:$0xff]
        %v2240 = vld [vmem:[#allocation3 + $0xb30] sm:$0xff]
        %v2241 = vld [vmem:[#allocation3 + $0xb38] sm:$0xff]
        %v2242 = vld [vmem:[#allocation3 + $0xb40] sm:$0xff]
        %v2243 = vld [vmem:[#allocation3 + $0xb48] sm:$0xff]
        %v2244 = vld [vmem:[#allocation3 + $0xb50] sm:$0xff]
        %v2245 = vld [vmem:[#allocation3 + $0xb58] sm:$0xff]
        %v2246 = vld [vmem:[#allocation3 + $0xb60] sm:$0xff]
        %v2247 = vld [vmem:[#allocation3 + $0xb68] sm:$0xff]
        %v2248 = vld [vmem:[#allocation3 + $0xb70] sm:$0xff]
        %v2249 = vld [vmem:[#allocation3 + $0xb78] sm:$0xff]
        %v2250 = vld [vmem:[#allocation3 + $0xb80] sm:$0xff]
        %v2251 = vld [vmem:[#allocation3 + $0xb88] sm:$0xff]
        %v2252 = vld [vmem:[#allocation3 + $0xb90] sm:$0xff]
        %v2253 = vld [vmem:[#allocation3 + $0xb98] sm:$0xff]
        %v2254 = vld [vmem:[#allocation3 + $0xba0] sm:$0xff]
        %v2255 = vld [vmem:[#allocation3 + $0xba8] sm:$0xff]
        %v2256 = vld [vmem:[#allocation3 + $0xbb0] sm:$0xff]
        %v2257 = vld [vmem:[#allocation3 + $0xbb8] sm:$0xff]
        %v2258 = vld [vmem:[#allocation3 + $0xbc0] sm:$0xff]
        %v2259 = vld [vmem:[#allocation3 + $0xbc8] sm:$0xff]
        %v2260 = vld [vmem:[#allocation3 + $0xbd0] sm:$0xff]
        %v2261 = vld [vmem:[#allocation3 + $0xbd8] sm:$0xff]
        %v2262 = vld [vmem:[#allocation3 + $0xbe0] sm:$0xff]
        %v2263 = vld [vmem:[#allocation3 + $0xbe8] sm:$0xff]
        %v2264 = vld [vmem:[#allocation3 + $0xbf0] sm:$0xff]
        %v2265 = vld [vmem:[#allocation3 + $0xbf8] sm:$0xff]
        %v2266 = vld [vmem:[#allocation3 + $0xc00] sm:$0xff]
        %v2267 = vld [vmem:[#allocation3 + $0xc08] sm:$0xff]
        %v2268 = vld [vmem:[#allocation3 + $0xc10] sm:$0xff]
        %v2269 = vld [vmem:[#allocation3 + $0xc18] sm:$0xff]
        %v2270 = vld [vmem:[#allocation3 + $0xc20] sm:$0xff]
        %v2271 = vld [vmem:[#allocation3 + $0xc28] sm:$0xff]
        %v2272 = vld [vmem:[#allocation3 + $0xc30] sm:$0xff]
        %v2273 = vld [vmem:[#allocation3 + $0xc38] sm:$0xff]
        %v2274 = vld [vmem:[#allocation3 + $0xc40] sm:$0xff]
        %v2275 = vld [vmem:[#allocation3 + $0xc48] sm:$0xff]
        %v2276 = vld [vmem:[#allocation3 + $0xc50] sm:$0xff]
        %v2277 = vld [vmem:[#allocation3 + $0xc58] sm:$0xff]
        %s2278 = smul.u32 %s293, 1152
        %s2279 = scalar_lea.vmem %s2, %s2278
        %v2280 = vld [vmem:[%s2279] sm:$0xff]
        %v2281 = vld [vmem:[%s2279 + $0x8] sm:$0xff]
        %v2282 = vld [vmem:[%s2279 + $0x10] sm:$0xff]
        %v2283 = vld [vmem:[%s2279 + $0x18] sm:$0xff]
        %v2284 = vld [vmem:[%s2279 + $0x20] sm:$0xff]
        %v2285 = vld [vmem:[%s2279 + $0x28] sm:$0xff]
        %v2286 = vld [vmem:[%s2279 + $0x30] sm:$0xff]
        %v2287 = vld [vmem:[%s2279 + $0x38] sm:$0xff]
        %v2288 = vld [vmem:[%s2279 + $0x40] sm:$0xff]
        %v2289 = vld [vmem:[%s2279 + $0x48] sm:$0xff]
        %v2290 = vld [vmem:[%s2279 + $0x50] sm:$0xff]
        %v2291 = vld [vmem:[%s2279 + $0x58] sm:$0xff]
        %v2292 = vld [vmem:[%s2279 + $0x60] sm:$0xff]
        %v2293 = vld [vmem:[%s2279 + $0x68] sm:$0xff]
        %v2294 = vld [vmem:[%s2279 + $0x70] sm:$0xff]
        %v2295 = vld [vmem:[%s2279 + $0x78] sm:$0xff]
        %v2296 = vld [vmem:[%s2279 + $0x80] sm:$0xff]
        %v2297 = vld [vmem:[%s2279 + $0x88] sm:$0xff]
        %v2298 = vld [vmem:[%s2279 + $0x90] sm:$0xff]
        %v2299 = vld [vmem:[%s2279 + $0x98] sm:$0xff]
        %v2300 = vld [vmem:[%s2279 + $0xa0] sm:$0xff]
        %v2301 = vld [vmem:[%s2279 + $0xa8] sm:$0xff]
        %v2302 = vld [vmem:[%s2279 + $0xb0] sm:$0xff]
        %v2303 = vld [vmem:[%s2279 + $0xb8] sm:$0xff]
        %v2304 = vld [vmem:[%s2279 + $0xc0] sm:$0xff]
        %v2305 = vld [vmem:[%s2279 + $0xc8] sm:$0xff]
        %v2306 = vld [vmem:[%s2279 + $0xd0] sm:$0xff]
        %v2307 = vld [vmem:[%s2279 + $0xd8] sm:$0xff]
        %v2308 = vld [vmem:[%s2279 + $0xe0] sm:$0xff]
        %v2309 = vld [vmem:[%s2279 + $0xe8] sm:$0xff]
        %v2310 = vld [vmem:[%s2279 + $0xf0] sm:$0xff]
        %v2311 = vld [vmem:[%s2279 + $0xf8] sm:$0xff]
        %v2312 = vld [vmem:[%s2279 + $0x100] sm:$0xff]
        %v2313 = vld [vmem:[%s2279 + $0x108] sm:$0xff]
        %v2314 = vld [vmem:[%s2279 + $0x110] sm:$0xff]
        %v2315 = vld [vmem:[%s2279 + $0x118] sm:$0xff]
        %v2316 = vld [vmem:[%s2279 + $0x120] sm:$0xff]
        %v2317 = vld [vmem:[%s2279 + $0x128] sm:$0xff]
        %v2318 = vld [vmem:[%s2279 + $0x130] sm:$0xff]
        %v2319 = vld [vmem:[%s2279 + $0x138] sm:$0xff]
        %v2320 = vld [vmem:[%s2279 + $0x140] sm:$0xff]
        %v2321 = vld [vmem:[%s2279 + $0x148] sm:$0xff]
        %v2322 = vld [vmem:[%s2279 + $0x150] sm:$0xff]
        %v2323 = vld [vmem:[%s2279 + $0x158] sm:$0xff]
        %v2324 = vld [vmem:[%s2279 + $0x160] sm:$0xff]
        %v2325 = vld [vmem:[%s2279 + $0x168] sm:$0xff]
        %v2326 = vld [vmem:[%s2279 + $0x170] sm:$0xff]
        %v2327 = vld [vmem:[%s2279 + $0x178] sm:$0xff]
        %v2328 = vld [vmem:[%s2279 + $0x180] sm:$0xff]
        %v2329 = vld [vmem:[%s2279 + $0x188] sm:$0xff]
        %v2330 = vld [vmem:[%s2279 + $0x190] sm:$0xff]
        %v2331 = vld [vmem:[%s2279 + $0x198] sm:$0xff]
        %v2332 = vld [vmem:[%s2279 + $0x1a0] sm:$0xff]
        %v2333 = vld [vmem:[%s2279 + $0x1a8] sm:$0xff]
        %v2334 = vld [vmem:[%s2279 + $0x1b0] sm:$0xff]
        %v2335 = vld [vmem:[%s2279 + $0x1b8] sm:$0xff]
        %v2336 = vld [vmem:[%s2279 + $0x1c0] sm:$0xff]
        %v2337 = vld [vmem:[%s2279 + $0x1c8] sm:$0xff]
        %v2338 = vld [vmem:[%s2279 + $0x1d0] sm:$0xff]
        %v2339 = vld [vmem:[%s2279 + $0x1d8] sm:$0xff]
        %v2340 = vld [vmem:[%s2279 + $0x1e0] sm:$0xff]
        %v2341 = vld [vmem:[%s2279 + $0x1e8] sm:$0xff]
        %v2342 = vld [vmem:[%s2279 + $0x1f0] sm:$0xff]
        %v2343 = vld [vmem:[%s2279 + $0x1f8] sm:$0xff]
        %v2344 = vld [vmem:[%s2279 + $0x200] sm:$0xff]
        %v2345 = vld [vmem:[%s2279 + $0x208] sm:$0xff]
        %v2346 = vld [vmem:[%s2279 + $0x210] sm:$0xff]
        %v2347 = vld [vmem:[%s2279 + $0x218] sm:$0xff]
        %v2348 = vld [vmem:[%s2279 + $0x220] sm:$0xff]
        %v2349 = vld [vmem:[%s2279 + $0x228] sm:$0xff]
        %v2350 = vld [vmem:[%s2279 + $0x230] sm:$0xff]
        %v2351 = vld [vmem:[%s2279 + $0x238] sm:$0xff]
        %v2352 = vld [vmem:[%s2279 + $0x240] sm:$0xff]
        %v2353 = vld [vmem:[%s2279 + $0x248] sm:$0xff]
        %v2354 = vld [vmem:[%s2279 + $0x250] sm:$0xff]
        %v2355 = vld [vmem:[%s2279 + $0x258] sm:$0xff]
        %v2356 = vld [vmem:[%s2279 + $0x260] sm:$0xff]
        %v2357 = vld [vmem:[%s2279 + $0x268] sm:$0xff]
        %v2358 = vld [vmem:[%s2279 + $0x270] sm:$0xff]
        %v2359 = vld [vmem:[%s2279 + $0x278] sm:$0xff]
        %v2360 = vld [vmem:[%s2279 + $0x280] sm:$0xff]
        %v2361 = vld [vmem:[%s2279 + $0x288] sm:$0xff]
        %v2362 = vld [vmem:[%s2279 + $0x290] sm:$0xff]
        %v2363 = vld [vmem:[%s2279 + $0x298] sm:$0xff]
        %v2364 = vld [vmem:[%s2279 + $0x2a0] sm:$0xff]
        %v2365 = vld [vmem:[%s2279 + $0x2a8] sm:$0xff]
        %v2366 = vld [vmem:[%s2279 + $0x2b0] sm:$0xff]
        %v2367 = vld [vmem:[%s2279 + $0x2b8] sm:$0xff]
        %v2368 = vld [vmem:[%s2279 + $0x2c0] sm:$0xff]
        %v2369 = vld [vmem:[%s2279 + $0x2c8] sm:$0xff]
        %v2370 = vld [vmem:[%s2279 + $0x2d0] sm:$0xff]
        %v2371 = vld [vmem:[%s2279 + $0x2d8] sm:$0xff]
        %v2372 = vld [vmem:[%s2279 + $0x2e0] sm:$0xff]
        %v2373 = vld [vmem:[%s2279 + $0x2e8] sm:$0xff]
        %v2374 = vld [vmem:[%s2279 + $0x2f0] sm:$0xff]
        %v2375 = vld [vmem:[%s2279 + $0x2f8] sm:$0xff]
        %v2376 = vld [vmem:[%s2279 + $0x300] sm:$0xff]
        %v2377 = vld [vmem:[%s2279 + $0x308] sm:$0xff]
        %v2378 = vld [vmem:[%s2279 + $0x310] sm:$0xff]
        %v2379 = vld [vmem:[%s2279 + $0x318] sm:$0xff]
        %v2380 = vld [vmem:[%s2279 + $0x320] sm:$0xff]
        %v2381 = vld [vmem:[%s2279 + $0x328] sm:$0xff]
        %v2382 = vld [vmem:[%s2279 + $0x330] sm:$0xff]
        %v2383 = vld [vmem:[%s2279 + $0x338] sm:$0xff]
        %v2384 = vld [vmem:[%s2279 + $0x340] sm:$0xff]
        %v2385 = vld [vmem:[%s2279 + $0x348] sm:$0xff]
        %v2386 = vld [vmem:[%s2279 + $0x350] sm:$0xff]
        %v2387 = vld [vmem:[%s2279 + $0x358] sm:$0xff]
        %v2388 = vld [vmem:[%s2279 + $0x360] sm:$0xff]
        %v2389 = vld [vmem:[%s2279 + $0x368] sm:$0xff]
        %v2390 = vld [vmem:[%s2279 + $0x370] sm:$0xff]
        %v2391 = vld [vmem:[%s2279 + $0x378] sm:$0xff]
        %v2392 = vld [vmem:[%s2279 + $0x380] sm:$0xff]
        %v2393 = vld [vmem:[%s2279 + $0x388] sm:$0xff]
        %v2394 = vld [vmem:[%s2279 + $0x390] sm:$0xff]
        %v2395 = vld [vmem:[%s2279 + $0x398] sm:$0xff]
        %v2396 = vld [vmem:[%s2279 + $0x3a0] sm:$0xff]
        %v2397 = vld [vmem:[%s2279 + $0x3a8] sm:$0xff]
        %v2398 = vld [vmem:[%s2279 + $0x3b0] sm:$0xff]
        %v2399 = vld [vmem:[%s2279 + $0x3b8] sm:$0xff]
        %v2400 = vld [vmem:[%s2279 + $0x3c0] sm:$0xff]
        %v2401 = vld [vmem:[%s2279 + $0x3c8] sm:$0xff]
        %v2402 = vld [vmem:[%s2279 + $0x3d0] sm:$0xff]
        %v2403 = vld [vmem:[%s2279 + $0x3d8] sm:$0xff]
        %v2404 = vld [vmem:[%s2279 + $0x3e0] sm:$0xff]
        %v2405 = vld [vmem:[%s2279 + $0x3e8] sm:$0xff]
        %v2406 = vld [vmem:[%s2279 + $0x3f0] sm:$0xff]
        %v2407 = vld [vmem:[%s2279 + $0x3f8] sm:$0xff]
        %v2408 = vld [vmem:[%s2279 + $0x400] sm:$0xff]
        %v2409 = vld [vmem:[%s2279 + $0x408] sm:$0xff]
        %v2410 = vld [vmem:[%s2279 + $0x410] sm:$0xff]
        %v2411 = vld [vmem:[%s2279 + $0x418] sm:$0xff]
        %v2412 = vld [vmem:[%s2279 + $0x420] sm:$0xff]
        %v2413 = vld [vmem:[%s2279 + $0x428] sm:$0xff]
        %v2414 = vld [vmem:[%s2279 + $0x430] sm:$0xff]
        %v2415 = vld [vmem:[%s2279 + $0x438] sm:$0xff]
        %v2416 = vld [vmem:[%s2279 + $0x440] sm:$0xff]
        %v2417 = vld [vmem:[%s2279 + $0x448] sm:$0xff]
        %v2418 = vld [vmem:[%s2279 + $0x450] sm:$0xff]
        %v2419 = vld [vmem:[%s2279 + $0x458] sm:$0xff]
        %v2420 = vld [vmem:[%s2279 + $0x460] sm:$0xff]
        %v2421 = vld [vmem:[%s2279 + $0x468] sm:$0xff]
        %v2422 = vld [vmem:[%s2279 + $0x470] sm:$0xff]
        %v2423 = vld [vmem:[%s2279 + $0x478] sm:$0xff]
        %s2424 = scalar_lea.vmem %s3, %s293
        %v2425 = vld [vmem:[%s2424] sm:$0x1]
        %v2427 = vlaneseq
        %v2428 = vshrl.u32 %v2427, 7
        %v2429 = vsub.s32 0, %v2428
        %v2430 = vrot.slane %v2425, %v2429
        %2432 = vmatprep.subr.mxu0 0.0
        %2433 = vmatpush1.msra.mxu0 %v2280
        %2434 = vmatprep.subr.mxu0 0.0
        %2435 = vmatpush1.msra.mxu0 %v2281
        %2436 = vmatprep.subr.mxu0 0.0
        %2437 = vmatpush1.msra.mxu0 %v2282
        %2438 = vmatprep.subr.mxu0 0.0
        %2439 = vmatpush1.msra.mxu0 %v2283
        %2440 = vmatprep.subr.mxu0 0.0
        %2441 = vmatpush1.msra.mxu0 %v2284
        %2442 = vmatprep.subr.mxu0 0.0
        %2443 = vmatpush1.msra.mxu0 %v2285
        %2444 = vmatprep.subr.mxu0 0.0
        %2445 = vmatpush1.msra.mxu0 %v2286
        %2446 = vmatprep.subr.mxu0 0.0
        %2447 = vmatpush1.msra.mxu0 %v2287
        %2448 = vmatprep.subr.mxu0 0.0
        %2449 = vmatpush1.msra.mxu0 %v2288
        %2450 = vmatprep.subr.mxu0 0.0
        %2451 = vmatpush1.msra.mxu0 %v2289
        %2452 = vmatprep.subr.mxu0 0.0
        %2453 = vmatpush1.msra.mxu0 %v2290
        %2454 = vmatprep.subr.mxu0 0.0
        %2455 = vmatpush1.msra.mxu0 %v2291
        %2456 = vmatprep.subr.mxu0 0.0
        %2457 = vmatpush1.msra.mxu0 %v2292
        %2458 = vmatprep.subr.mxu0 0.0
        %2459 = vmatpush1.msra.mxu0 %v2293
        %2460 = vmatprep.subr.mxu0 0.0
        %2461 = vmatpush1.msra.mxu0 %v2294
        %2462 = vmatprep.subr.mxu0 0.0
        %2463 = vmatpush1.msra.mxu0 %v2295
        %2464 = vmatprep.subr.mxu0 0.0
        %2465 = vmatpush1.msra.mxu0 %v2296
        %2466 = vmatprep.subr.mxu0 0.0
        %2467 = vmatpush1.msra.mxu0 %v2297
        %2468 = vmatprep.subr.mxu0 0.0
        %2469 = vmatpush1.msra.mxu0 %v2298
        %2470 = vmatprep.subr.mxu0 0.0
        %2471 = vmatpush1.msra.mxu0 %v2299
        %2472 = vmatprep.subr.mxu0 0.0
        %2473 = vmatpush1.msra.mxu0 %v2300
        %2474 = vmatprep.subr.mxu0 0.0
        %2475 = vmatpush1.msra.mxu0 %v2301
        %2476 = vmatprep.subr.mxu0 0.0
        %2477 = vmatpush1.msra.mxu0 %v2302
        %2478 = vmatprep.subr.mxu0 0.0
        %2479 = vmatpush1.msra.mxu0 %v2303
        %2480 = vmatprep.subr.mxu0 0.0
        %2481 = vmatpush1.msra.mxu0 %v2304
        %2482 = vmatprep.subr.mxu0 0.0
        %2483 = vmatpush1.msra.mxu0 %v2305
        %2484 = vmatprep.subr.mxu0 0.0
        %2485 = vmatpush1.msra.mxu0 %v2306
        %2486 = vmatprep.subr.mxu0 0.0
        %2487 = vmatpush1.msra.mxu0 %v2307
        %2488 = vmatprep.subr.mxu0 0.0
        %2489 = vmatpush1.msra.mxu0 %v2308
        %2490 = vmatprep.subr.mxu0 0.0
        %2491 = vmatpush1.msra.mxu0 %v2309
        %2492 = vmatprep.subr.mxu0 0.0
        %2493 = vmatpush1.msra.mxu0 %v2310
        %2494 = vmatprep.subr.mxu0 0.0
        %2495 = vmatpush1.msra.mxu0 %v2311
        %2496 = vmatprep.mubr.f32.mxu0 %v1883
        %2497 = vmatmul.mubr.f32.gmra.mrb[0].mxu0 %v1882
        %v2498 = vpop.f32.mrb[0].mxu0
        %v2499 = vadd.f32 %v2430, %v2498
        %v2500 = vpop.f32.mrb[0].mxu0
        %2501 = vmatprep.mubr.f32.mxu0 %v1892
        %2502 = vmatmul.mubr.f32.gmra.mrb[0].mxu0 %v1891
        %v2503 = vpop.f32.mrb[0].mxu0
        %v2504 = vadd.f32 %v2430, %v2503
        %v2505 = vpop.f32.mrb[0].mxu0
        %2506 = vmatprep.mubr.f32.mxu0 %v1901
        %2507 = vmatmul.mubr.f32.gmra.mrb[0].mxu0 %v1900
        %v2508 = vpop.f32.mrb[0].mxu0
        %v2509 = vadd.f32 %v2430, %v2508
        %v2510 = vpop.f32.mrb[0].mxu0
        %2511 = vmatprep.mubr.f32.mxu0 %v1910
        %2512 = vmatmul.mubr.f32.gmra.mrb[0].mxu0 %v1909
        %v2513 = vpop.f32.mrb[0].mxu0
        %v2514 = vadd.f32 %v2430, %v2513
        %v2515 = vpop.f32.mrb[0].mxu0
        %2516 = vmatprep.mubr.f32.mxu0 %v1919
        %2517 = vmatmul.mubr.f32.gmra.mrb[0].mxu0 %v1918
        %v2518 = vpop.f32.mrb[0].mxu0
        %v2519 = vadd.f32 %v2430, %v2518
        %v2520 = vpop.f32.mrb[0].mxu0
        %2521 = vmatprep.mubr.f32.mxu0 %v1928
        %2522 = vmatmul.mubr.f32.gmra.mrb[0].mxu0 %v1927
        %v2523 = vpop.f32.mrb[0].mxu0
        %v2524 = vadd.f32 %v2430, %v2523
        %v2525 = vpop.f32.mrb[0].mxu0
        %2526 = vmatprep.mubr.f32.mxu0 %v1937
        %2527 = vmatmul.mubr.f32.gmra.mrb[0].mxu0 %v1936
        %v2528 = vpop.f32.mrb[0].mxu0
        %v2529 = vadd.f32 %v2430, %v2528
        %v2530 = vpop.f32.mrb[0].mxu0
        %2531 = vmatprep.mubr.f32.mxu0 %v1946
        %2532 = vmatmul.mubr.f32.gmra.mrb[0].mxu0 %v1945
        %v2533 = vpop.f32.mrb[0].mxu0
        %v2534 = vadd.f32 %v2430, %v2533
        %v2535 = vpop.f32.mrb[0].mxu0
        %2536 = vmatprep.mubr.f32.mxu0 %v1955
        %2537 = vmatmul.mubr.f32.gmra.mrb[0].mxu0 %v1954
        %v2538 = vpop.f32.mrb[0].mxu0
        %v2539 = vadd.f32 %v2430, %v2538
        %v2540 = vpop.f32.mrb[0].mxu0
        %2541 = vmatprep.mubr.f32.mxu0 %v1964
        %2542 = vmatmul.mubr.f32.gmra.mrb[0].mxu0 %v1963
        %v2543 = vpop.f32.mrb[0].mxu0
        %v2544 = vadd.f32 %v2430, %v2543
        %v2545 = vpop.f32.mrb[0].mxu0
        %2546 = vmatprep.mubr.f32.mxu0 %v1973
        %2547 = vmatmul.mubr.f32.gmra.mrb[0].mxu0 %v1972
        %v2548 = vpop.f32.mrb[0].mxu0
        %v2549 = vadd.f32 %v2430, %v2548
        %v2550 = vpop.f32.mrb[0].mxu0
        %2551 = vmatprep.mubr.f32.mxu0 %v1982
        %2552 = vmatmul.mubr.f32.gmra.mrb[0].mxu0 %v1981
        %v2553 = vpop.f32.mrb[0].mxu0
        %v2554 = vadd.f32 %v2430, %v2553
        %v2555 = vpop.f32.mrb[0].mxu0
        %2556 = vmatprep.mubr.f32.mxu0 %v1991
        %2557 = vmatmul.mubr.f32.gmra.mrb[0].mxu0 %v1990
        %v2558 = vpop.f32.mrb[0].mxu0
        %v2559 = vadd.f32 %v2430, %v2558
        %v2560 = vpop.f32.mrb[0].mxu0
        %2561 = vmatprep.mubr.f32.mxu0 %v2000
        %2562 = vmatmul.mubr.f32.gmra.mrb[0].mxu0 %v1999
        %v2563 = vpop.f32.mrb[0].mxu0
        %v2564 = vadd.f32 %v2430, %v2563
        %v2565 = vpop.f32.mrb[0].mxu0
        %2566 = vmatprep.mubr.f32.mxu0 %v2009
        %2567 = vmatmul.mubr.f32.gmra.mrb[0].mxu0 %v2008
        %v2568 = vpop.f32.mrb[0].mxu0
        %v2569 = vadd.f32 %v2430, %v2568
        %v2570 = vpop.f32.mrb[0].mxu0
        %2571 = vmatprep.mubr.f32.mxu0 %v2018
        %2572 = vmatmul.mubr.f32.gmra.mrb[0].mxu0 %v2017
        %v2573 = vpop.f32.mrb[0].mxu0
        %v2574 = vadd.f32 %v2430, %v2573
        %v2575 = vpop.f32.mrb[0].mxu0
        %2576 = vmatprep.mubr.f32.mxu0 %v2027
        %2577 = vmatmul.mubr.f32.gmra.mrb[0].mxu0 %v2026
        %v2578 = vpop.f32.mrb[0].mxu0
        %v2579 = vadd.f32 %v2430, %v2578
        %v2580 = vpop.f32.mrb[0].mxu0
        %2581 = vmatprep.mubr.f32.mxu0 %v2036
        %2582 = vmatmul.mubr.f32.gmra.mrb[0].mxu0 %v2035
        %v2583 = vpop.f32.mrb[0].mxu0
        %v2584 = vadd.f32 %v2430, %v2583
        %v2585 = vpop.f32.mrb[0].mxu0
        %2586 = vmatprep.mubr.f32.mxu0 %v2045
        %2587 = vmatmul.mubr.f32.gmra.mrb[0].mxu0 %v2044
        %v2588 = vpop.f32.mrb[0].mxu0
        %v2589 = vadd.f32 %v2430, %v2588
        %v2590 = vpop.f32.mrb[0].mxu0
        %2591 = vmatprep.mubr.f32.mxu0 %v2054
        %2592 = vmatmul.mubr.f32.gmra.mrb[0].mxu0 %v2053
        %v2593 = vpop.f32.mrb[0].mxu0
        %v2594 = vadd.f32 %v2430, %v2593
        %v2595 = vpop.f32.mrb[0].mxu0
        %2596 = vmatprep.mubr.f32.mxu0 %v2063
        %2597 = vmatmul.mubr.f32.gmra.mrb[0].mxu0 %v2062
        %v2598 = vpop.f32.mrb[0].mxu0
        %v2599 = vadd.f32 %v2430, %v2598
        %v2600 = vpop.f32.mrb[0].mxu0
        %2601 = vmatprep.mubr.f32.mxu0 %v2072
        %2602 = vmatmul.mubr.f32.gmra.mrb[0].mxu0 %v2071
        %v2603 = vpop.f32.mrb[0].mxu0
        %v2604 = vadd.f32 %v2430, %v2603
        %v2605 = vpop.f32.mrb[0].mxu0
        %2606 = vmatprep.mubr.f32.mxu0 %v2081
        %2607 = vmatmul.mubr.f32.gmra.mrb[0].mxu0 %v2080
        %v2608 = vpop.f32.mrb[0].mxu0
        %v2609 = vadd.f32 %v2430, %v2608
        %v2610 = vpop.f32.mrb[0].mxu0
        %2611 = vmatprep.mubr.f32.mxu0 %v2090
        %2612 = vmatmul.mubr.f32.gmra.mrb[0].mxu0 %v2089
        %v2613 = vpop.f32.mrb[0].mxu0
        %v2614 = vadd.f32 %v2430, %v2613
        %v2615 = vpop.f32.mrb[0].mxu0
        %2616 = vmatprep.mubr.f32.mxu0 %v2099
        %2617 = vmatmul.mubr.f32.gmra.mrb[0].mxu0 %v2098
        %v2618 = vpop.f32.mrb[0].mxu0
        %v2619 = vadd.f32 %v2430, %v2618
        %v2620 = vpop.f32.mrb[0].mxu0
        %2621 = vmatprep.mubr.f32.mxu0 %v2108
        %2622 = vmatmul.mubr.f32.gmra.mrb[0].mxu0 %v2107
        %v2623 = vpop.f32.mrb[0].mxu0
        %v2624 = vadd.f32 %v2430, %v2623
        %v2625 = vpop.f32.mrb[0].mxu0
        %2626 = vmatprep.mubr.f32.mxu0 %v2117
        %2627 = vmatmul.mubr.f32.gmra.mrb[0].mxu0 %v2116
        %v2628 = vpop.f32.mrb[0].mxu0
        %v2629 = vadd.f32 %v2430, %v2628
        %v2630 = vpop.f32.mrb[0].mxu0
        %2631 = vmatprep.mubr.f32.mxu0 %v2126
        %2632 = vmatmul.mubr.f32.gmra.mrb[0].mxu0 %v2125
        %v2633 = vpop.f32.mrb[0].mxu0
        %v2634 = vadd.f32 %v2430, %v2633
        %v2635 = vpop.f32.mrb[0].mxu0
        %2636 = vmatprep.mubr.f32.mxu0 %v2135
        %2637 = vmatmul.mubr.f32.gmra.mrb[0].mxu0 %v2134
        %v2638 = vpop.f32.mrb[0].mxu0
        %v2639 = vadd.f32 %v2430, %v2638
        %v2640 = vpop.f32.mrb[0].mxu0
        %2641 = vmatprep.mubr.f32.mxu0 %v2144
        %2642 = vmatmul.mubr.f32.gmra.mrb[0].mxu0 %v2143
        %v2643 = vpop.f32.mrb[0].mxu0
        %v2644 = vadd.f32 %v2430, %v2643
        %v2645 = vpop.f32.mrb[0].mxu0
        %2646 = vmatprep.mubr.f32.mxu0 %v2153
        %2647 = vmatmul.mubr.f32.gmra.mrb[0].mxu0 %v2152
        %v2648 = vpop.f32.mrb[0].mxu0
        %v2649 = vadd.f32 %v2430, %v2648
        %v2650 = vpop.f32.mrb[0].mxu0
        %2651 = vmatprep.mubr.f32.mxu0 %v2162
        %2652 = vmatmul.mubr.f32.gmra.mrb[0].mxu0 %v2161
        %v2653 = vpop.f32.mrb[0].mxu0
        %v2654 = vadd.f32 %v2430, %v2653
        %v2655 = vpop.f32.mrb[0].mxu0
        %2656 = vmatprep.mubr.f32.mxu0 %v2171
        %2657 = vmatmul.mubr.f32.gmra.mrb[0].mxu0 %v2170
        %v2658 = vpop.f32.mrb[0].mxu0
        %v2659 = vadd.f32 %v2430, %v2658
        %v2660 = vpop.f32.mrb[0].mxu0
        %2661 = vmatprep.mubr.f32.mxu0 %v2180
        %2662 = vmatmul.mubr.f32.gmra.mrb[0].mxu0 %v2179
        %v2663 = vpop.f32.mrb[0].mxu0
        %v2664 = vadd.f32 %v2430, %v2663
        %v2665 = vpop.f32.mrb[0].mxu0
        %2666 = vmatprep.mubr.f32.mxu0 %v2189
        %2667 = vmatmul.mubr.f32.gmra.mrb[0].mxu0 %v2188
        %v2668 = vpop.f32.mrb[0].mxu0
        %v2669 = vadd.f32 %v2430, %v2668
        %v2670 = vpop.f32.mrb[0].mxu0
        %2671 = vmatprep.mubr.f32.mxu0 %v2198
        %2672 = vmatmul.mubr.f32.gmra.mrb[0].mxu0 %v2197
        %v2673 = vpop.f32.mrb[0].mxu0
        %v2674 = vadd.f32 %v2430, %v2673
        %v2675 = vpop.f32.mrb[0].mxu0
        %2676 = vmatprep.mubr.f32.mxu0 %v2207
        %2677 = vmatmul.mubr.f32.gmra.mrb[0].mxu0 %v2206
        %v2678 = vpop.f32.mrb[0].mxu0
        %v2679 = vadd.f32 %v2430, %v2678
        %v2680 = vpop.f32.mrb[0].mxu0
        %2681 = vmatprep.mubr.f32.mxu0 %v2216
        %2682 = vmatmul.mubr.f32.gmra.mrb[0].mxu0 %v2215
        %v2683 = vpop.f32.mrb[0].mxu0
        %v2684 = vadd.f32 %v2430, %v2683
        %v2685 = vpop.f32.mrb[0].mxu0
        %2686 = vmatprep.mubr.f32.mxu0 %v2225
        %2687 = vmatmul.mubr.f32.gmra.mrb[0].mxu0 %v2224
        %v2688 = vpop.f32.mrb[0].mxu0
        %v2689 = vadd.f32 %v2430, %v2688
        %v2690 = vpop.f32.mrb[0].mxu0
        %2691 = vmatprep.mubr.f32.mxu0 %v2234
        %2692 = vmatmul.mubr.f32.gmra.mrb[0].mxu0 %v2233
        %v2693 = vpop.f32.mrb[0].mxu0
        %v2694 = vadd.f32 %v2430, %v2693
        %v2695 = vpop.f32.mrb[0].mxu0
        %2696 = vmatprep.mubr.f32.mxu0 %v2243
        %2697 = vmatmul.mubr.f32.gmra.mrb[0].mxu0 %v2242
        %v2698 = vpop.f32.mrb[0].mxu0
        %v2699 = vadd.f32 %v2430, %v2698
        %v2700 = vpop.f32.mrb[0].mxu0
        %2701 = vmatprep.mubr.f32.mxu0 %v2252
        %2702 = vmatmul.mubr.f32.gmra.mrb[0].mxu0 %v2251
        %v2703 = vpop.f32.mrb[0].mxu0
        %v2704 = vadd.f32 %v2430, %v2703
        %v2705 = vpop.f32.mrb[0].mxu0
        %2706 = vmatprep.mubr.f32.mxu0 %v2261
        %2707 = vmatmul.mubr.f32.gmra.mrb[0].mxu0 %v2260
        %v2708 = vpop.f32.mrb[0].mxu0
        %v2709 = vadd.f32 %v2430, %v2708
        %v2710 = vpop.f32.mrb[0].mxu0
        %2711 = vmatprep.mubr.f32.mxu0 %v2270
        %2712 = vmatmul.mubr.f32.gmra.mrb[0].mxu0 %v2269
        %v2713 = vpop.f32.mrb[0].mxu0
        %v2714 = vadd.f32 %v2430, %v2713
        %v2715 = vpop.f32.mrb[0].mxu0
        %2716 = vdwg.mxu0
        %2717 = vmatprep.subr.mxu0 0.0
        %2718 = vmatpush1.msra.mxu0 %v2312
        %2719 = vmatprep.subr.mxu0 0.0
        %2720 = vmatpush1.msra.mxu0 %v2313
        %2721 = vmatprep.subr.mxu0 0.0
        %2722 = vmatpush1.msra.mxu0 %v2314
        %2723 = vmatprep.subr.mxu0 0.0
        %2724 = vmatpush1.msra.mxu0 %v2315
        %2725 = vmatprep.subr.mxu0 0.0
        %2726 = vmatpush1.msra.mxu0 %v2316
        %2727 = vmatprep.subr.mxu0 0.0
        %2728 = vmatpush1.msra.mxu0 %v2317
        %2729 = vmatprep.subr.mxu0 0.0
        %2730 = vmatpush1.msra.mxu0 %v2318
        %2731 = vmatprep.subr.mxu0 0.0
        %2732 = vmatpush1.msra.mxu0 %v2319
        %2733 = vmatprep.subr.mxu0 0.0
        %2734 = vmatpush1.msra.mxu0 %v2320
        %2735 = vmatprep.subr.mxu0 0.0
        %2736 = vmatpush1.msra.mxu0 %v2321
        %2737 = vmatprep.subr.mxu0 0.0
        %2738 = vmatpush1.msra.mxu0 %v2322
        %2739 = vmatprep.subr.mxu0 0.0
        %2740 = vmatpush1.msra.mxu0 %v2323
        %2741 = vmatprep.subr.mxu0 0.0
        %2742 = vmatpush1.msra.mxu0 %v2324
        %2743 = vmatprep.subr.mxu0 0.0
        %2744 = vmatpush1.msra.mxu0 %v2325
        %2745 = vmatprep.subr.mxu0 0.0
        %2746 = vmatpush1.msra.mxu0 %v2326
        %2747 = vmatprep.subr.mxu0 0.0
        %2748 = vmatpush1.msra.mxu0 %v2327
        %2749 = vmatprep.subr.mxu0 0.0
        %2750 = vmatpush1.msra.mxu0 %v2328
        %2751 = vmatprep.subr.mxu0 0.0
        %2752 = vmatpush1.msra.mxu0 %v2329
        %2753 = vmatprep.subr.mxu0 0.0
        %2754 = vmatpush1.msra.mxu0 %v2330
        %2755 = vmatprep.subr.mxu0 0.0
        %2756 = vmatpush1.msra.mxu0 %v2331
        %2757 = vmatprep.subr.mxu0 0.0
        %2758 = vmatpush1.msra.mxu0 %v2332
        %2759 = vmatprep.subr.mxu0 0.0
        %2760 = vmatpush1.msra.mxu0 %v2333
        %2761 = vmatprep.subr.mxu0 0.0
        %2762 = vmatpush1.msra.mxu0 %v2334
        %2763 = vmatprep.subr.mxu0 0.0
        %2764 = vmatpush1.msra.mxu0 %v2335
        %2765 = vmatprep.subr.mxu0 0.0
        %2766 = vmatpush1.msra.mxu0 %v2336
        %2767 = vmatprep.subr.mxu0 0.0
        %2768 = vmatpush1.msra.mxu0 %v2337
        %2769 = vmatprep.subr.mxu0 0.0
        %2770 = vmatpush1.msra.mxu0 %v2338
        %2771 = vmatprep.subr.mxu0 0.0
        %2772 = vmatpush1.msra.mxu0 %v2339
        %2773 = vmatprep.subr.mxu0 0.0
        %2774 = vmatpush1.msra.mxu0 %v2340
        %2775 = vmatprep.subr.mxu0 0.0
        %2776 = vmatpush1.msra.mxu0 %v2341
        %2777 = vmatprep.subr.mxu0 0.0
        %2778 = vmatpush1.msra.mxu0 %v2342
        %2779 = vmatprep.subr.mxu0 0.0
        %2780 = vmatpush1.msra.mxu0 %v2343
        %2781 = vmatprep.mubr.f32.mxu0 %v1885
        %2782 = vmatmul.mubr.f32.gmra.mrb[0].mxu0 %v1884
        %v2783 = vpop.f32.mrb[0].mxu0
        %v2784 = vadd.f32 %v2499, %v2783
        %v2785 = vpop.f32.mrb[0].mxu0
        %2786 = vmatprep.mubr.f32.mxu0 %v1894
        %2787 = vmatmul.mubr.f32.gmra.mrb[0].mxu0 %v1893
        %v2788 = vpop.f32.mrb[0].mxu0
        %v2789 = vadd.f32 %v2504, %v2788
        %v2790 = vpop.f32.mrb[0].mxu0
        %2791 = vmatprep.mubr.f32.mxu0 %v1903
        %2792 = vmatmul.mubr.f32.gmra.mrb[0].mxu0 %v1902
        %v2793 = vpop.f32.mrb[0].mxu0
        %v2794 = vadd.f32 %v2509, %v2793
        %v2795 = vpop.f32.mrb[0].mxu0
        %2796 = vmatprep.mubr.f32.mxu0 %v1912
        %2797 = vmatmul.mubr.f32.gmra.mrb[0].mxu0 %v1911
        %v2798 = vpop.f32.mrb[0].mxu0
        %v2799 = vadd.f32 %v2514, %v2798
        %v2800 = vpop.f32.mrb[0].mxu0
        %2801 = vmatprep.mubr.f32.mxu0 %v1921
        %2802 = vmatmul.mubr.f32.gmra.mrb[0].mxu0 %v1920
        %v2803 = vpop.f32.mrb[0].mxu0
        %v2804 = vadd.f32 %v2519, %v2803
        %v2805 = vpop.f32.mrb[0].mxu0
        %2806 = vmatprep.mubr.f32.mxu0 %v1930
        %2807 = vmatmul.mubr.f32.gmra.mrb[0].mxu0 %v1929
        %v2808 = vpop.f32.mrb[0].mxu0
        %v2809 = vadd.f32 %v2524, %v2808
        %v2810 = vpop.f32.mrb[0].mxu0
        %2811 = vmatprep.mubr.f32.mxu0 %v1939
        %2812 = vmatmul.mubr.f32.gmra.mrb[0].mxu0 %v1938
        %v2813 = vpop.f32.mrb[0].mxu0
        %v2814 = vadd.f32 %v2529, %v2813
        %v2815 = vpop.f32.mrb[0].mxu0
        %2816 = vmatprep.mubr.f32.mxu0 %v1948
        %2817 = vmatmul.mubr.f32.gmra.mrb[0].mxu0 %v1947
        %v2818 = vpop.f32.mrb[0].mxu0
        %v2819 = vadd.f32 %v2534, %v2818
        %v2820 = vpop.f32.mrb[0].mxu0
        %2821 = vmatprep.mubr.f32.mxu0 %v1957
        %2822 = vmatmul.mubr.f32.gmra.mrb[0].mxu0 %v1956
        %v2823 = vpop.f32.mrb[0].mxu0
        %v2824 = vadd.f32 %v2539, %v2823
        %v2825 = vpop.f32.mrb[0].mxu0
        %2826 = vmatprep.mubr.f32.mxu0 %v1966
        %2827 = vmatmul.mubr.f32.gmra.mrb[0].mxu0 %v1965
        %v2828 = vpop.f32.mrb[0].mxu0
        %v2829 = vadd.f32 %v2544, %v2828
        %v2830 = vpop.f32.mrb[0].mxu0
        %2831 = vmatprep.mubr.f32.mxu0 %v1975
        %2832 = vmatmul.mubr.f32.gmra.mrb[0].mxu0 %v1974
        %v2833 = vpop.f32.mrb[0].mxu0
        %v2834 = vadd.f32 %v2549, %v2833
        %v2835 = vpop.f32.mrb[0].mxu0
        %2836 = vmatprep.mubr.f32.mxu0 %v1984
        %2837 = vmatmul.mubr.f32.gmra.mrb[0].mxu0 %v1983
        %v2838 = vpop.f32.mrb[0].mxu0
        %v2839 = vadd.f32 %v2554, %v2838
        %v2840 = vpop.f32.mrb[0].mxu0
        %2841 = vmatprep.mubr.f32.mxu0 %v1993
        %2842 = vmatmul.mubr.f32.gmra.mrb[0].mxu0 %v1992
        %v2843 = vpop.f32.mrb[0].mxu0
        %v2844 = vadd.f32 %v2559, %v2843
        %v2845 = vpop.f32.mrb[0].mxu0
        %2846 = vmatprep.mubr.f32.mxu0 %v2002
        %2847 = vmatmul.mubr.f32.gmra.mrb[0].mxu0 %v2001
        %v2848 = vpop.f32.mrb[0].mxu0
        %v2849 = vadd.f32 %v2564, %v2848
        %v2850 = vpop.f32.mrb[0].mxu0
        %2851 = vmatprep.mubr.f32.mxu0 %v2011
        %2852 = vmatmul.mubr.f32.gmra.mrb[0].mxu0 %v2010
        %v2853 = vpop.f32.mrb[0].mxu0
        %v2854 = vadd.f32 %v2569, %v2853
        %v2855 = vpop.f32.mrb[0].mxu0
        %2856 = vmatprep.mubr.f32.mxu0 %v2020
        %2857 = vmatmul.mubr.f32.gmra.mrb[0].mxu0 %v2019
        %v2858 = vpop.f32.mrb[0].mxu0
        %v2859 = vadd.f32 %v2574, %v2858
        %v2860 = vpop.f32.mrb[0].mxu0
        %2861 = vmatprep.mubr.f32.mxu0 %v2029
        %2862 = vmatmul.mubr.f32.gmra.mrb[0].mxu0 %v2028
        %v2863 = vpop.f32.mrb[0].mxu0
        %v2864 = vadd.f32 %v2579, %v2863
        %v2865 = vpop.f32.mrb[0].mxu0
        %2866 = vmatprep.mubr.f32.mxu0 %v2038
        %2867 = vmatmul.mubr.f32.gmra.mrb[0].mxu0 %v2037
        %v2868 = vpop.f32.mrb[0].mxu0
        %v2869 = vadd.f32 %v2584, %v2868
        %v2870 = vpop.f32.mrb[0].mxu0
        %2871 = vmatprep.mubr.f32.mxu0 %v2047
        %2872 = vmatmul.mubr.f32.gmra.mrb[0].mxu0 %v2046
        %v2873 = vpop.f32.mrb[0].mxu0
        %v2874 = vadd.f32 %v2589, %v2873
        %v2875 = vpop.f32.mrb[0].mxu0
        %2876 = vmatprep.mubr.f32.mxu0 %v2056
        %2877 = vmatmul.mubr.f32.gmra.mrb[0].mxu0 %v2055
        %v2878 = vpop.f32.mrb[0].mxu0
        %v2879 = vadd.f32 %v2594, %v2878
        %v2880 = vpop.f32.mrb[0].mxu0
        %2881 = vmatprep.mubr.f32.mxu0 %v2065
        %2882 = vmatmul.mubr.f32.gmra.mrb[0].mxu0 %v2064
        %v2883 = vpop.f32.mrb[0].mxu0
        %v2884 = vadd.f32 %v2599, %v2883
        %v2885 = vpop.f32.mrb[0].mxu0
        %2886 = vmatprep.mubr.f32.mxu0 %v2074
        %2887 = vmatmul.mubr.f32.gmra.mrb[0].mxu0 %v2073
        %v2888 = vpop.f32.mrb[0].mxu0
        %v2889 = vadd.f32 %v2604, %v2888
        %v2890 = vpop.f32.mrb[0].mxu0
        %2891 = vmatprep.mubr.f32.mxu0 %v2083
        %2892 = vmatmul.mubr.f32.gmra.mrb[0].mxu0 %v2082
        %v2893 = vpop.f32.mrb[0].mxu0
        %v2894 = vadd.f32 %v2609, %v2893
        %v2895 = vpop.f32.mrb[0].mxu0
        %2896 = vmatprep.mubr.f32.mxu0 %v2092
        %2897 = vmatmul.mubr.f32.gmra.mrb[0].mxu0 %v2091
        %v2898 = vpop.f32.mrb[0].mxu0
        %v2899 = vadd.f32 %v2614, %v2898
        %v2900 = vpop.f32.mrb[0].mxu0
        %2901 = vmatprep.mubr.f32.mxu0 %v2101
        %2902 = vmatmul.mubr.f32.gmra.mrb[0].mxu0 %v2100
        %v2903 = vpop.f32.mrb[0].mxu0
        %v2904 = vadd.f32 %v2619, %v2903
        %v2905 = vpop.f32.mrb[0].mxu0
        %2906 = vmatprep.mubr.f32.mxu0 %v2110
        %2907 = vmatmul.mubr.f32.gmra.mrb[0].mxu0 %v2109
        %v2908 = vpop.f32.mrb[0].mxu0
        %v2909 = vadd.f32 %v2624, %v2908
        %v2910 = vpop.f32.mrb[0].mxu0
        %2911 = vmatprep.mubr.f32.mxu0 %v2119
        %2912 = vmatmul.mubr.f32.gmra.mrb[0].mxu0 %v2118
        %v2913 = vpop.f32.mrb[0].mxu0
        %v2914 = vadd.f32 %v2629, %v2913
        %v2915 = vpop.f32.mrb[0].mxu0
        %2916 = vmatprep.mubr.f32.mxu0 %v2128
        %2917 = vmatmul.mubr.f32.gmra.mrb[0].mxu0 %v2127
        %v2918 = vpop.f32.mrb[0].mxu0
        %v2919 = vadd.f32 %v2634, %v2918
        %v2920 = vpop.f32.mrb[0].mxu0
        %2921 = vmatprep.mubr.f32.mxu0 %v2137
        %2922 = vmatmul.mubr.f32.gmra.mrb[0].mxu0 %v2136
        %v2923 = vpop.f32.mrb[0].mxu0
        %v2924 = vadd.f32 %v2639, %v2923
        %v2925 = vpop.f32.mrb[0].mxu0
        %2926 = vmatprep.mubr.f32.mxu0 %v2146
        %2927 = vmatmul.mubr.f32.gmra.mrb[0].mxu0 %v2145
        %v2928 = vpop.f32.mrb[0].mxu0
        %v2929 = vadd.f32 %v2644, %v2928
        %v2930 = vpop.f32.mrb[0].mxu0
        %2931 = vmatprep.mubr.f32.mxu0 %v2155
        %2932 = vmatmul.mubr.f32.gmra.mrb[0].mxu0 %v2154
        %v2933 = vpop.f32.mrb[0].mxu0
        %v2934 = vadd.f32 %v2649, %v2933
        %v2935 = vpop.f32.mrb[0].mxu0
        %2936 = vmatprep.mubr.f32.mxu0 %v2164
        %2937 = vmatmul.mubr.f32.gmra.mrb[0].mxu0 %v2163
        %v2938 = vpop.f32.mrb[0].mxu0
        %v2939 = vadd.f32 %v2654, %v2938
        %v2940 = vpop.f32.mrb[0].mxu0
        %2941 = vmatprep.mubr.f32.mxu0 %v2173
        %2942 = vmatmul.mubr.f32.gmra.mrb[0].mxu0 %v2172
        %v2943 = vpop.f32.mrb[0].mxu0
        %v2944 = vadd.f32 %v2659, %v2943
        %v2945 = vpop.f32.mrb[0].mxu0
        %2946 = vmatprep.mubr.f32.mxu0 %v2182
        %2947 = vmatmul.mubr.f32.gmra.mrb[0].mxu0 %v2181
        %v2948 = vpop.f32.mrb[0].mxu0
        %v2949 = vadd.f32 %v2664, %v2948
        %v2950 = vpop.f32.mrb[0].mxu0
        %2951 = vmatprep.mubr.f32.mxu0 %v2191
        %2952 = vmatmul.mubr.f32.gmra.mrb[0].mxu0 %v2190
        %v2953 = vpop.f32.mrb[0].mxu0
        %v2954 = vadd.f32 %v2669, %v2953
        %v2955 = vpop.f32.mrb[0].mxu0
        %2956 = vmatprep.mubr.f32.mxu0 %v2200
        %2957 = vmatmul.mubr.f32.gmra.mrb[0].mxu0 %v2199
        %v2958 = vpop.f32.mrb[0].mxu0
        %v2959 = vadd.f32 %v2674, %v2958
        %v2960 = vpop.f32.mrb[0].mxu0
        %2961 = vmatprep.mubr.f32.mxu0 %v2209
        %2962 = vmatmul.mubr.f32.gmra.mrb[0].mxu0 %v2208
        %v2963 = vpop.f32.mrb[0].mxu0
        %v2964 = vadd.f32 %v2679, %v2963
        %v2965 = vpop.f32.mrb[0].mxu0
        %2966 = vmatprep.mubr.f32.mxu0 %v2218
        %2967 = vmatmul.mubr.f32.gmra.mrb[0].mxu0 %v2217
        %v2968 = vpop.f32.mrb[0].mxu0
        %v2969 = vadd.f32 %v2684, %v2968
        %v2970 = vpop.f32.mrb[0].mxu0
        %2971 = vmatprep.mubr.f32.mxu0 %v2227
        %2972 = vmatmul.mubr.f32.gmra.mrb[0].mxu0 %v2226
        %v2973 = vpop.f32.mrb[0].mxu0
        %v2974 = vadd.f32 %v2689, %v2973
        %v2975 = vpop.f32.mrb[0].mxu0
        %2976 = vmatprep.mubr.f32.mxu0 %v2236
        %2977 = vmatmul.mubr.f32.gmra.mrb[0].mxu0 %v2235
        %v2978 = vpop.f32.mrb[0].mxu0
        %v2979 = vadd.f32 %v2694, %v2978
        %v2980 = vpop.f32.mrb[0].mxu0
        %2981 = vmatprep.mubr.f32.mxu0 %v2245
        %2982 = vmatmul.mubr.f32.gmra.mrb[0].mxu0 %v2244
        %v2983 = vpop.f32.mrb[0].mxu0
        %v2984 = vadd.f32 %v2699, %v2983
        %v2985 = vpop.f32.mrb[0].mxu0
        %2986 = vmatprep.mubr.f32.mxu0 %v2254
        %2987 = vmatmul.mubr.f32.gmra.mrb[0].mxu0 %v2253
        %v2988 = vpop.f32.mrb[0].mxu0
        %v2989 = vadd.f32 %v2704, %v2988
        %v2990 = vpop.f32.mrb[0].mxu0
        %2991 = vmatprep.mubr.f32.mxu0 %v2263
        %2992 = vmatmul.mubr.f32.gmra.mrb[0].mxu0 %v2262
        %v2993 = vpop.f32.mrb[0].mxu0
        %v2994 = vadd.f32 %v2709, %v2993
        %v2995 = vpop.f32.mrb[0].mxu0
        %2996 = vmatprep.mubr.f32.mxu0 %v2272
        %2997 = vmatmul.mubr.f32.gmra.mrb[0].mxu0 %v2271
        %v2998 = vpop.f32.mrb[0].mxu0
        %v2999 = vadd.f32 %v2714, %v2998
        %v3000 = vpop.f32.mrb[0].mxu0
        %3001 = vdwg.mxu0
        %3002 = vmatprep.subr.mxu0 0.0
        %3003 = vmatpush1.msra.mxu0 %v2344
        %3004 = vmatprep.subr.mxu0 0.0
        %3005 = vmatpush1.msra.mxu0 %v2345
        %3006 = vmatprep.subr.mxu0 0.0
        %3007 = vmatpush1.msra.mxu0 %v2346
        %3008 = vmatprep.subr.mxu0 0.0
        %3009 = vmatpush1.msra.mxu0 %v2347
        %3010 = vmatprep.subr.mxu0 0.0
        %3011 = vmatpush1.msra.mxu0 %v2348
        %3012 = vmatprep.subr.mxu0 0.0
        %3013 = vmatpush1.msra.mxu0 %v2349
        %3014 = vmatprep.subr.mxu0 0.0
        %3015 = vmatpush1.msra.mxu0 %v2350
        %3016 = vmatprep.subr.mxu0 0.0
        %3017 = vmatpush1.msra.mxu0 %v2351
        %3018 = vmatprep.subr.mxu0 0.0
        %3019 = vmatpush1.msra.mxu0 %v2352
        %3020 = vmatprep.subr.mxu0 0.0
        %3021 = vmatpush1.msra.mxu0 %v2353
        %3022 = vmatprep.subr.mxu0 0.0
        %3023 = vmatpush1.msra.mxu0 %v2354
        %3024 = vmatprep.subr.mxu0 0.0
        %3025 = vmatpush1.msra.mxu0 %v2355
        %3026 = vmatprep.subr.mxu0 0.0
        %3027 = vmatpush1.msra.mxu0 %v2356
        %3028 = vmatprep.subr.mxu0 0.0
        %3029 = vmatpush1.msra.mxu0 %v2357
        %3030 = vmatprep.subr.mxu0 0.0
        %3031 = vmatpush1.msra.mxu0 %v2358
        %3032 = vmatprep.subr.mxu0 0.0
        %3033 = vmatpush1.msra.mxu0 %v2359
        %3034 = vmatprep.subr.mxu0 0.0
        %3035 = vmatpush1.msra.mxu0 %v2360
        %3036 = vmatprep.subr.mxu0 0.0
        %3037 = vmatpush1.msra.mxu0 %v2361
        %3038 = vmatprep.subr.mxu0 0.0
        %3039 = vmatpush1.msra.mxu0 %v2362
        %3040 = vmatprep.subr.mxu0 0.0
        %3041 = vmatpush1.msra.mxu0 %v2363
        %3042 = vmatprep.subr.mxu0 0.0
        %3043 = vmatpush1.msra.mxu0 %v2364
        %3044 = vmatprep.subr.mxu0 0.0
        %3045 = vmatpush1.msra.mxu0 %v2365
        %3046 = vmatprep.subr.mxu0 0.0
        %3047 = vmatpush1.msra.mxu0 %v2366
        %3048 = vmatprep.subr.mxu0 0.0
        %3049 = vmatpush1.msra.mxu0 %v2367
        %3050 = vmatprep.subr.mxu0 0.0
        %3051 = vmatpush1.msra.mxu0 %v2368
        %3052 = vmatprep.subr.mxu0 0.0
        %3053 = vmatpush1.msra.mxu0 %v2369
        %3054 = vmatprep.subr.mxu0 0.0
        %3055 = vmatpush1.msra.mxu0 %v2370
        %3056 = vmatprep.subr.mxu0 0.0
        %3057 = vmatpush1.msra.mxu0 %v2371
        %3058 = vmatprep.subr.mxu0 0.0
        %3059 = vmatpush1.msra.mxu0 %v2372
        %3060 = vmatprep.subr.mxu0 0.0
        %3061 = vmatpush1.msra.mxu0 %v2373
        %3062 = vmatprep.subr.mxu0 0.0
        %3063 = vmatpush1.msra.mxu0 %v2374
        %3064 = vmatprep.subr.mxu0 0.0
        %3065 = vmatpush1.msra.mxu0 %v2375
        %3066 = vmatprep.mubr.f32.mxu0 %v1887
        %3067 = vmatmul.mubr.f32.gmra.mrb[0].mxu0 %v1886
        %v3068 = vpop.f32.mrb[0].mxu0
        %v3069 = vadd.f32 %v2784, %v3068
        %v3070 = vpop.f32.mrb[0].mxu0
        %3071 = vmatprep.mubr.f32.mxu0 %v1896
        %3072 = vmatmul.mubr.f32.gmra.mrb[0].mxu0 %v1895
        %v3073 = vpop.f32.mrb[0].mxu0
        %v3074 = vadd.f32 %v2789, %v3073
        %v3075 = vpop.f32.mrb[0].mxu0
        %3076 = vmatprep.mubr.f32.mxu0 %v1905
        %3077 = vmatmul.mubr.f32.gmra.mrb[0].mxu0 %v1904
        %v3078 = vpop.f32.mrb[0].mxu0
        %v3079 = vadd.f32 %v2794, %v3078
        %v3080 = vpop.f32.mrb[0].mxu0
        %3081 = vmatprep.mubr.f32.mxu0 %v1914
        %3082 = vmatmul.mubr.f32.gmra.mrb[0].mxu0 %v1913
        %v3083 = vpop.f32.mrb[0].mxu0
        %v3084 = vadd.f32 %v2799, %v3083
        %v3085 = vpop.f32.mrb[0].mxu0
        %3086 = vmatprep.mubr.f32.mxu0 %v1923
        %3087 = vmatmul.mubr.f32.gmra.mrb[0].mxu0 %v1922
        %v3088 = vpop.f32.mrb[0].mxu0
        %v3089 = vadd.f32 %v2804, %v3088
        %v3090 = vpop.f32.mrb[0].mxu0
        %3091 = vmatprep.mubr.f32.mxu0 %v1932
        %3092 = vmatmul.mubr.f32.gmra.mrb[0].mxu0 %v1931
        %v3093 = vpop.f32.mrb[0].mxu0
        %v3094 = vadd.f32 %v2809, %v3093
        %v3095 = vpop.f32.mrb[0].mxu0
        %3096 = vmatprep.mubr.f32.mxu0 %v1941
        %3097 = vmatmul.mubr.f32.gmra.mrb[0].mxu0 %v1940
        %v3098 = vpop.f32.mrb[0].mxu0
        %v3099 = vadd.f32 %v2814, %v3098
        %v3100 = vpop.f32.mrb[0].mxu0
        %3101 = vmatprep.mubr.f32.mxu0 %v1950
        %3102 = vmatmul.mubr.f32.gmra.mrb[0].mxu0 %v1949
        %v3103 = vpop.f32.mrb[0].mxu0
        %v3104 = vadd.f32 %v2819, %v3103
        %v3105 = vpop.f32.mrb[0].mxu0
        %3106 = vmatprep.mubr.f32.mxu0 %v1959
        %3107 = vmatmul.mubr.f32.gmra.mrb[0].mxu0 %v1958
        %v3108 = vpop.f32.mrb[0].mxu0
        %v3109 = vadd.f32 %v2824, %v3108
        %v3110 = vpop.f32.mrb[0].mxu0
        %3111 = vmatprep.mubr.f32.mxu0 %v1968
        %3112 = vmatmul.mubr.f32.gmra.mrb[0].mxu0 %v1967
        %v3113 = vpop.f32.mrb[0].mxu0
        %v3114 = vadd.f32 %v2829, %v3113
        %v3115 = vpop.f32.mrb[0].mxu0
        %3116 = vmatprep.mubr.f32.mxu0 %v1977
        %3117 = vmatmul.mubr.f32.gmra.mrb[0].mxu0 %v1976
        %v3118 = vpop.f32.mrb[0].mxu0
        %v3119 = vadd.f32 %v2834, %v3118
        %v3120 = vpop.f32.mrb[0].mxu0
        %3121 = vmatprep.mubr.f32.mxu0 %v1986
        %3122 = vmatmul.mubr.f32.gmra.mrb[0].mxu0 %v1985
        %v3123 = vpop.f32.mrb[0].mxu0
        %v3124 = vadd.f32 %v2839, %v3123
        %v3125 = vpop.f32.mrb[0].mxu0
        %3126 = vmatprep.mubr.f32.mxu0 %v1995
        %3127 = vmatmul.mubr.f32.gmra.mrb[0].mxu0 %v1994
        %v3128 = vpop.f32.mrb[0].mxu0
        %v3129 = vadd.f32 %v2844, %v3128
        %v3130 = vpop.f32.mrb[0].mxu0
        %3131 = vmatprep.mubr.f32.mxu0 %v2004
        %3132 = vmatmul.mubr.f32.gmra.mrb[0].mxu0 %v2003
        %v3133 = vpop.f32.mrb[0].mxu0
        %v3134 = vadd.f32 %v2849, %v3133
        %v3135 = vpop.f32.mrb[0].mxu0
        %3136 = vmatprep.mubr.f32.mxu0 %v2013
        %3137 = vmatmul.mubr.f32.gmra.mrb[0].mxu0 %v2012
        %v3138 = vpop.f32.mrb[0].mxu0
        %v3139 = vadd.f32 %v2854, %v3138
        %v3140 = vpop.f32.mrb[0].mxu0
        %3141 = vmatprep.mubr.f32.mxu0 %v2022
        %3142 = vmatmul.mubr.f32.gmra.mrb[0].mxu0 %v2021
        %v3143 = vpop.f32.mrb[0].mxu0
        %v3144 = vadd.f32 %v2859, %v3143
        %v3145 = vpop.f32.mrb[0].mxu0
        %3146 = vmatprep.mubr.f32.mxu0 %v2031
        %3147 = vmatmul.mubr.f32.gmra.mrb[0].mxu0 %v2030
        %v3148 = vpop.f32.mrb[0].mxu0
        %v3149 = vadd.f32 %v2864, %v3148
        %v3150 = vpop.f32.mrb[0].mxu0
        %3151 = vmatprep.mubr.f32.mxu0 %v2040
        %3152 = vmatmul.mubr.f32.gmra.mrb[0].mxu0 %v2039
        %v3153 = vpop.f32.mrb[0].mxu0
        %v3154 = vadd.f32 %v2869, %v3153
        %v3155 = vpop.f32.mrb[0].mxu0
        %3156 = vmatprep.mubr.f32.mxu0 %v2049
        %3157 = vmatmul.mubr.f32.gmra.mrb[0].mxu0 %v2048
        %v3158 = vpop.f32.mrb[0].mxu0
        %v3159 = vadd.f32 %v2874, %v3158
        %v3160 = vpop.f32.mrb[0].mxu0
        %3161 = vmatprep.mubr.f32.mxu0 %v2058
        %3162 = vmatmul.mubr.f32.gmra.mrb[0].mxu0 %v2057
        %v3163 = vpop.f32.mrb[0].mxu0
        %v3164 = vadd.f32 %v2879, %v3163
        %v3165 = vpop.f32.mrb[0].mxu0
        %3166 = vmatprep.mubr.f32.mxu0 %v2067
        %3167 = vmatmul.mubr.f32.gmra.mrb[0].mxu0 %v2066
        %v3168 = vpop.f32.mrb[0].mxu0
        %v3169 = vadd.f32 %v2884, %v3168
        %v3170 = vpop.f32.mrb[0].mxu0
        %3171 = vmatprep.mubr.f32.mxu0 %v2076
        %3172 = vmatmul.mubr.f32.gmra.mrb[0].mxu0 %v2075
        %v3173 = vpop.f32.mrb[0].mxu0
        %v3174 = vadd.f32 %v2889, %v3173
        %v3175 = vpop.f32.mrb[0].mxu0
        %3176 = vmatprep.mubr.f32.mxu0 %v2085
        %3177 = vmatmul.mubr.f32.gmra.mrb[0].mxu0 %v2084
        %v3178 = vpop.f32.mrb[0].mxu0
        %v3179 = vadd.f32 %v2894, %v3178
        %v3180 = vpop.f32.mrb[0].mxu0
        %3181 = vmatprep.mubr.f32.mxu0 %v2094
        %3182 = vmatmul.mubr.f32.gmra.mrb[0].mxu0 %v2093
        %v3183 = vpop.f32.mrb[0].mxu0
        %v3184 = vadd.f32 %v2899, %v3183
        %v3185 = vpop.f32.mrb[0].mxu0
        %3186 = vmatprep.mubr.f32.mxu0 %v2103
        %3187 = vmatmul.mubr.f32.gmra.mrb[0].mxu0 %v2102
        %v3188 = vpop.f32.mrb[0].mxu0
        %v3189 = vadd.f32 %v2904, %v3188
        %v3190 = vpop.f32.mrb[0].mxu0
        %3191 = vmatprep.mubr.f32.mxu0 %v2112
        %3192 = vmatmul.mubr.f32.gmra.mrb[0].mxu0 %v2111
        %v3193 = vpop.f32.mrb[0].mxu0
        %v3194 = vadd.f32 %v2909, %v3193
        %v3195 = vpop.f32.mrb[0].mxu0
        %3196 = vmatprep.mubr.f32.mxu0 %v2121
        %3197 = vmatmul.mubr.f32.gmra.mrb[0].mxu0 %v2120
        %v3198 = vpop.f32.mrb[0].mxu0
        %v3199 = vadd.f32 %v2914, %v3198
        %v3200 = vpop.f32.mrb[0].mxu0
        %3201 = vmatprep.mubr.f32.mxu0 %v2130
        %3202 = vmatmul.mubr.f32.gmra.mrb[0].mxu0 %v2129
        %v3203 = vpop.f32.mrb[0].mxu0
        %v3204 = vadd.f32 %v2919, %v3203
        %v3205 = vpop.f32.mrb[0].mxu0
        %3206 = vmatprep.mubr.f32.mxu0 %v2139
        %3207 = vmatmul.mubr.f32.gmra.mrb[0].mxu0 %v2138
        %v3208 = vpop.f32.mrb[0].mxu0
        %v3209 = vadd.f32 %v2924, %v3208
        %v3210 = vpop.f32.mrb[0].mxu0
        %3211 = vmatprep.mubr.f32.mxu0 %v2148
        %3212 = vmatmul.mubr.f32.gmra.mrb[0].mxu0 %v2147
        %v3213 = vpop.f32.mrb[0].mxu0
        %v3214 = vadd.f32 %v2929, %v3213
        %v3215 = vpop.f32.mrb[0].mxu0
        %3216 = vmatprep.mubr.f32.mxu0 %v2157
        %3217 = vmatmul.mubr.f32.gmra.mrb[0].mxu0 %v2156
        %v3218 = vpop.f32.mrb[0].mxu0
        %v3219 = vadd.f32 %v2934, %v3218
        %v3220 = vpop.f32.mrb[0].mxu0
        %3221 = vmatprep.mubr.f32.mxu0 %v2166
        %3222 = vmatmul.mubr.f32.gmra.mrb[0].mxu0 %v2165
        %v3223 = vpop.f32.mrb[0].mxu0
        %v3224 = vadd.f32 %v2939, %v3223
        %v3225 = vpop.f32.mrb[0].mxu0
        %3226 = vmatprep.mubr.f32.mxu0 %v2175
        %3227 = vmatmul.mubr.f32.gmra.mrb[0].mxu0 %v2174
        %v3228 = vpop.f32.mrb[0].mxu0
        %v3229 = vadd.f32 %v2944, %v3228
        %v3230 = vpop.f32.mrb[0].mxu0
        %3231 = vmatprep.mubr.f32.mxu0 %v2184
        %3232 = vmatmul.mubr.f32.gmra.mrb[0].mxu0 %v2183
        %v3233 = vpop.f32.mrb[0].mxu0
        %v3234 = vadd.f32 %v2949, %v3233
        %v3235 = vpop.f32.mrb[0].mxu0
        %3236 = vmatprep.mubr.f32.mxu0 %v2193
        %3237 = vmatmul.mubr.f32.gmra.mrb[0].mxu0 %v2192
        %v3238 = vpop.f32.mrb[0].mxu0
        %v3239 = vadd.f32 %v2954, %v3238
        %v3240 = vpop.f32.mrb[0].mxu0
        %3241 = vmatprep.mubr.f32.mxu0 %v2202
        %3242 = vmatmul.mubr.f32.gmra.mrb[0].mxu0 %v2201
        %v3243 = vpop.f32.mrb[0].mxu0
        %v3244 = vadd.f32 %v2959, %v3243
        %v3245 = vpop.f32.mrb[0].mxu0
        %3246 = vmatprep.mubr.f32.mxu0 %v2211
        %3247 = vmatmul.mubr.f32.gmra.mrb[0].mxu0 %v2210
        %v3248 = vpop.f32.mrb[0].mxu0
        %v3249 = vadd.f32 %v2964, %v3248
        %v3250 = vpop.f32.mrb[0].mxu0
        %3251 = vmatprep.mubr.f32.mxu0 %v2220
        %3252 = vmatmul.mubr.f32.gmra.mrb[0].mxu0 %v2219
        %v3253 = vpop.f32.mrb[0].mxu0
        %v3254 = vadd.f32 %v2969, %v3253
        %v3255 = vpop.f32.mrb[0].mxu0
        %3256 = vmatprep.mubr.f32.mxu0 %v2229
        %3257 = vmatmul.mubr.f32.gmra.mrb[0].mxu0 %v2228
        %v3258 = vpop.f32.mrb[0].mxu0
        %v3259 = vadd.f32 %v2974, %v3258
        %v3260 = vpop.f32.mrb[0].mxu0
        %3261 = vmatprep.mubr.f32.mxu0 %v2238
        %3262 = vmatmul.mubr.f32.gmra.mrb[0].mxu0 %v2237
        %v3263 = vpop.f32.mrb[0].mxu0
        %v3264 = vadd.f32 %v2979, %v3263
        %v3265 = vpop.f32.mrb[0].mxu0
        %3266 = vmatprep.mubr.f32.mxu0 %v2247
        %3267 = vmatmul.mubr.f32.gmra.mrb[0].mxu0 %v2246
        %v3268 = vpop.f32.mrb[0].mxu0
        %v3269 = vadd.f32 %v2984, %v3268
        %v3270 = vpop.f32.mrb[0].mxu0
        %3271 = vmatprep.mubr.f32.mxu0 %v2256
        %3272 = vmatmul.mubr.f32.gmra.mrb[0].mxu0 %v2255
        %v3273 = vpop.f32.mrb[0].mxu0
        %v3274 = vadd.f32 %v2989, %v3273
        %v3275 = vpop.f32.mrb[0].mxu0
        %3276 = vmatprep.mubr.f32.mxu0 %v2265
        %3277 = vmatmul.mubr.f32.gmra.mrb[0].mxu0 %v2264
        %v3278 = vpop.f32.mrb[0].mxu0
        %v3279 = vadd.f32 %v2994, %v3278
        %v3280 = vpop.f32.mrb[0].mxu0
        %3281 = vmatprep.mubr.f32.mxu0 %v2274
        %3282 = vmatmul.mubr.f32.gmra.mrb[0].mxu0 %v2273
        %v3283 = vpop.f32.mrb[0].mxu0
        %v3284 = vadd.f32 %v2999, %v3283
        %v3285 = vpop.f32.mrb[0].mxu0
        %3286 = vdwg.mxu0
        %3287 = vmatprep.subr.mxu0 0.0
        %3288 = vmatpush1.msra.mxu0 %v2376
        %3289 = vmatprep.subr.mxu0 0.0
        %3290 = vmatpush1.msra.mxu0 %v2377
        %3291 = vmatprep.subr.mxu0 0.0
        %3292 = vmatpush1.msra.mxu0 %v2378
        %3293 = vmatprep.subr.mxu0 0.0
        %3294 = vmatpush1.msra.mxu0 %v2379
        %3295 = vmatprep.subr.mxu0 0.0
        %3296 = vmatpush1.msra.mxu0 %v2380
        %3297 = vmatprep.subr.mxu0 0.0
        %3298 = vmatpush1.msra.mxu0 %v2381
        %3299 = vmatprep.subr.mxu0 0.0
        %3300 = vmatpush1.msra.mxu0 %v2382
        %3301 = vmatprep.subr.mxu0 0.0
        %3302 = vmatpush1.msra.mxu0 %v2383
        %3303 = vmatprep.subr.mxu0 0.0
        %3304 = vmatpush1.msra.mxu0 %v2384
        %3305 = vmatprep.subr.mxu0 0.0
        %3306 = vmatpush1.msra.mxu0 %v2385
        %3307 = vmatprep.subr.mxu0 0.0
        %3308 = vmatpush1.msra.mxu0 %v2386
        %3309 = vmatprep.subr.mxu0 0.0
        %3310 = vmatpush1.msra.mxu0 %v2387
        %3311 = vmatprep.subr.mxu0 0.0
        %3312 = vmatpush1.msra.mxu0 %v2388
        %3313 = vmatprep.subr.mxu0 0.0
        %3314 = vmatpush1.msra.mxu0 %v2389
        %3315 = vmatprep.subr.mxu0 0.0
        %3316 = vmatpush1.msra.mxu0 %v2390
        %3317 = vmatprep.subr.mxu0 0.0
        %3318 = vmatpush1.msra.mxu0 %v2391
        %3319 = vmatprep.subr.mxu0 0.0
        %3320 = vmatpush1.msra.mxu0 %v2392
        %3321 = vmatprep.subr.mxu0 0.0
        %3322 = vmatpush1.msra.mxu0 %v2393
        %3323 = vmatprep.subr.mxu0 0.0
        %3324 = vmatpush1.msra.mxu0 %v2394
        %3325 = vmatprep.subr.mxu0 0.0
        %3326 = vmatpush1.msra.mxu0 %v2395
        %3327 = vmatprep.subr.mxu0 0.0
        %3328 = vmatpush1.msra.mxu0 %v2396
        %3329 = vmatprep.subr.mxu0 0.0
        %3330 = vmatpush1.msra.mxu0 %v2397
        %3331 = vmatprep.subr.mxu0 0.0
        %3332 = vmatpush1.msra.mxu0 %v2398
        %3333 = vmatprep.subr.mxu0 0.0
        %3334 = vmatpush1.msra.mxu0 %v2399
        %3335 = vmatprep.subr.mxu0 0.0
        %3336 = vmatpush1.msra.mxu0 %v2400
        %3337 = vmatprep.subr.mxu0 0.0
        %3338 = vmatpush1.msra.mxu0 %v2401
        %3339 = vmatprep.subr.mxu0 0.0
        %3340 = vmatpush1.msra.mxu0 %v2402
        %3341 = vmatprep.subr.mxu0 0.0
        %3342 = vmatpush1.msra.mxu0 %v2403
        %3343 = vmatprep.subr.mxu0 0.0
        %3344 = vmatpush1.msra.mxu0 %v2404
        %3345 = vmatprep.subr.mxu0 0.0
        %3346 = vmatpush1.msra.mxu0 %v2405
        %3347 = vmatprep.subr.mxu0 0.0
        %3348 = vmatpush1.msra.mxu0 %v2406
        %3349 = vmatprep.subr.mxu0 0.0
        %3350 = vmatpush1.msra.mxu0 %v2407
        %3351 = vmatprep.mubr.f32.mxu0 %v1889
        %3352 = vmatmul.mubr.f32.gmra.mrb[0].mxu0 %v1888
        %v3353 = vpop.f32.mrb[0].mxu0
        %v3354 = vadd.f32 %v3069, %v3353
        %v3355 = vpop.f32.mrb[0].mxu0
        %3356 = vmatprep.mubr.f32.mxu0 %v1898
        %3357 = vmatmul.mubr.f32.gmra.mrb[0].mxu0 %v1897
        %v3358 = vpop.f32.mrb[0].mxu0
        %v3359 = vadd.f32 %v3074, %v3358
        %v3360 = vpop.f32.mrb[0].mxu0
        %3361 = vmatprep.mubr.f32.mxu0 %v1907
        %3362 = vmatmul.mubr.f32.gmra.mrb[0].mxu0 %v1906
        %v3363 = vpop.f32.mrb[0].mxu0
        %v3364 = vadd.f32 %v3079, %v3363
        %v3365 = vpop.f32.mrb[0].mxu0
        %3366 = vmatprep.mubr.f32.mxu0 %v1916
        %3367 = vmatmul.mubr.f32.gmra.mrb[0].mxu0 %v1915
        %v3368 = vpop.f32.mrb[0].mxu0
        %v3369 = vadd.f32 %v3084, %v3368
        %v3370 = vpop.f32.mrb[0].mxu0
        %3371 = vmatprep.mubr.f32.mxu0 %v1925
        %3372 = vmatmul.mubr.f32.gmra.mrb[0].mxu0 %v1924
        %v3373 = vpop.f32.mrb[0].mxu0
        %v3374 = vadd.f32 %v3089, %v3373
        %v3375 = vpop.f32.mrb[0].mxu0
        %3376 = vmatprep.mubr.f32.mxu0 %v1934
        %3377 = vmatmul.mubr.f32.gmra.mrb[0].mxu0 %v1933
        %v3378 = vpop.f32.mrb[0].mxu0
        %v3379 = vadd.f32 %v3094, %v3378
        %v3380 = vpop.f32.mrb[0].mxu0
        %3381 = vmatprep.mubr.f32.mxu0 %v1943
        %3382 = vmatmul.mubr.f32.gmra.mrb[0].mxu0 %v1942
        %v3383 = vpop.f32.mrb[0].mxu0
        %v3384 = vadd.f32 %v3099, %v3383
        %v3385 = vpop.f32.mrb[0].mxu0
        %3386 = vmatprep.mubr.f32.mxu0 %v1952
        %3387 = vmatmul.mubr.f32.gmra.mrb[0].mxu0 %v1951
        %v3388 = vpop.f32.mrb[0].mxu0
        %v3389 = vadd.f32 %v3104, %v3388
        %v3390 = vpop.f32.mrb[0].mxu0
        %3391 = vmatprep.mubr.f32.mxu0 %v1961
        %3392 = vmatmul.mubr.f32.gmra.mrb[0].mxu0 %v1960
        %v3393 = vpop.f32.mrb[0].mxu0
        %v3394 = vadd.f32 %v3109, %v3393
        %v3395 = vpop.f32.mrb[0].mxu0
        %3396 = vmatprep.mubr.f32.mxu0 %v1970
        %3397 = vmatmul.mubr.f32.gmra.mrb[0].mxu0 %v1969
        %v3398 = vpop.f32.mrb[0].mxu0
        %v3399 = vadd.f32 %v3114, %v3398
        %v3400 = vpop.f32.mrb[0].mxu0
        %3401 = vmatprep.mubr.f32.mxu0 %v1979
        %3402 = vmatmul.mubr.f32.gmra.mrb[0].mxu0 %v1978
        %v3403 = vpop.f32.mrb[0].mxu0
        %v3404 = vadd.f32 %v3119, %v3403
        %v3405 = vpop.f32.mrb[0].mxu0
        %3406 = vmatprep.mubr.f32.mxu0 %v1988
        %3407 = vmatmul.mubr.f32.gmra.mrb[0].mxu0 %v1987
        %v3408 = vpop.f32.mrb[0].mxu0
        %v3409 = vadd.f32 %v3124, %v3408
        %v3410 = vpop.f32.mrb[0].mxu0
        %3411 = vmatprep.mubr.f32.mxu0 %v1997
        %3412 = vmatmul.mubr.f32.gmra.mrb[0].mxu0 %v1996
        %v3413 = vpop.f32.mrb[0].mxu0
        %v3414 = vadd.f32 %v3129, %v3413
        %v3415 = vpop.f32.mrb[0].mxu0
        %3416 = vmatprep.mubr.f32.mxu0 %v2006
        %3417 = vmatmul.mubr.f32.gmra.mrb[0].mxu0 %v2005
        %v3418 = vpop.f32.mrb[0].mxu0
        %v3419 = vadd.f32 %v3134, %v3418
        %v3420 = vpop.f32.mrb[0].mxu0
        %3421 = vmatprep.mubr.f32.mxu0 %v2015
        %3422 = vmatmul.mubr.f32.gmra.mrb[0].mxu0 %v2014
        %v3423 = vpop.f32.mrb[0].mxu0
        %v3424 = vadd.f32 %v3139, %v3423
        %v3425 = vpop.f32.mrb[0].mxu0
        %3426 = vmatprep.mubr.f32.mxu0 %v2024
        %3427 = vmatmul.mubr.f32.gmra.mrb[0].mxu0 %v2023
        %v3428 = vpop.f32.mrb[0].mxu0
        %v3429 = vadd.f32 %v3144, %v3428
        %v3430 = vpop.f32.mrb[0].mxu0
        %3431 = vmatprep.mubr.f32.mxu0 %v2033
        %3432 = vmatmul.mubr.f32.gmra.mrb[0].mxu0 %v2032
        %v3433 = vpop.f32.mrb[0].mxu0
        %v3434 = vadd.f32 %v3149, %v3433
        %v3435 = vpop.f32.mrb[0].mxu0
        %3436 = vmatprep.mubr.f32.mxu0 %v2042
        %3437 = vmatmul.mubr.f32.gmra.mrb[0].mxu0 %v2041
        %v3438 = vpop.f32.mrb[0].mxu0
        %v3439 = vadd.f32 %v3154, %v3438
        %v3440 = vpop.f32.mrb[0].mxu0
        %3441 = vmatprep.mubr.f32.mxu0 %v2051
        %3442 = vmatmul.mubr.f32.gmra.mrb[0].mxu0 %v2050
        %v3443 = vpop.f32.mrb[0].mxu0
        %v3444 = vadd.f32 %v3159, %v3443
        %v3445 = vpop.f32.mrb[0].mxu0
        %3446 = vmatprep.mubr.f32.mxu0 %v2060
        %3447 = vmatmul.mubr.f32.gmra.mrb[0].mxu0 %v2059
        %v3448 = vpop.f32.mrb[0].mxu0
        %v3449 = vadd.f32 %v3164, %v3448
        %v3450 = vpop.f32.mrb[0].mxu0
        %3451 = vmatprep.mubr.f32.mxu0 %v2069
        %3452 = vmatmul.mubr.f32.gmra.mrb[0].mxu0 %v2068
        %v3453 = vpop.f32.mrb[0].mxu0
        %v3454 = vadd.f32 %v3169, %v3453
        %v3455 = vpop.f32.mrb[0].mxu0
        %3456 = vmatprep.mubr.f32.mxu0 %v2078
        %3457 = vmatmul.mubr.f32.gmra.mrb[0].mxu0 %v2077
        %v3458 = vpop.f32.mrb[0].mxu0
        %v3459 = vadd.f32 %v3174, %v3458
        %v3460 = vpop.f32.mrb[0].mxu0
        %3461 = vmatprep.mubr.f32.mxu0 %v2087
        %3462 = vmatmul.mubr.f32.gmra.mrb[0].mxu0 %v2086
        %v3463 = vpop.f32.mrb[0].mxu0
        %v3464 = vadd.f32 %v3179, %v3463
        %v3465 = vpop.f32.mrb[0].mxu0
        %3466 = vmatprep.mubr.f32.mxu0 %v2096
        %3467 = vmatmul.mubr.f32.gmra.mrb[0].mxu0 %v2095
        %v3468 = vpop.f32.mrb[0].mxu0
        %v3469 = vadd.f32 %v3184, %v3468
        %v3470 = vpop.f32.mrb[0].mxu0
        %3471 = vmatprep.mubr.f32.mxu0 %v2105
        %3472 = vmatmul.mubr.f32.gmra.mrb[0].mxu0 %v2104
        %v3473 = vpop.f32.mrb[0].mxu0
        %v3474 = vadd.f32 %v3189, %v3473
        %v3475 = vpop.f32.mrb[0].mxu0
        %3476 = vmatprep.mubr.f32.mxu0 %v2114
        %3477 = vmatmul.mubr.f32.gmra.mrb[0].mxu0 %v2113
        %v3478 = vpop.f32.mrb[0].mxu0
        %v3479 = vadd.f32 %v3194, %v3478
        %v3480 = vpop.f32.mrb[0].mxu0
        %3481 = vmatprep.mubr.f32.mxu0 %v2123
        %3482 = vmatmul.mubr.f32.gmra.mrb[0].mxu0 %v2122
        %v3483 = vpop.f32.mrb[0].mxu0
        %v3484 = vadd.f32 %v3199, %v3483
        %v3485 = vpop.f32.mrb[0].mxu0
        %3486 = vmatprep.mubr.f32.mxu0 %v2132
        %3487 = vmatmul.mubr.f32.gmra.mrb[0].mxu0 %v2131
        %v3488 = vpop.f32.mrb[0].mxu0
        %v3489 = vadd.f32 %v3204, %v3488
        %v3490 = vpop.f32.mrb[0].mxu0
        %3491 = vmatprep.mubr.f32.mxu0 %v2141
        %3492 = vmatmul.mubr.f32.gmra.mrb[0].mxu0 %v2140
        %v3493 = vpop.f32.mrb[0].mxu0
        %v3494 = vadd.f32 %v3209, %v3493
        %v3495 = vpop.f32.mrb[0].mxu0
        %3496 = vmatprep.mubr.f32.mxu0 %v2150
        %3497 = vmatmul.mubr.f32.gmra.mrb[0].mxu0 %v2149
        %v3498 = vpop.f32.mrb[0].mxu0
        %v3499 = vadd.f32 %v3214, %v3498
        %v3500 = vpop.f32.mrb[0].mxu0
        %3501 = vmatprep.mubr.f32.mxu0 %v2159
        %3502 = vmatmul.mubr.f32.gmra.mrb[0].mxu0 %v2158
        %v3503 = vpop.f32.mrb[0].mxu0
        %v3504 = vadd.f32 %v3219, %v3503
        %v3505 = vpop.f32.mrb[0].mxu0
        %3506 = vmatprep.mubr.f32.mxu0 %v2168
        %3507 = vmatmul.mubr.f32.gmra.mrb[0].mxu0 %v2167
        %v3508 = vpop.f32.mrb[0].mxu0
        %v3509 = vadd.f32 %v3224, %v3508
        %v3510 = vpop.f32.mrb[0].mxu0
        %3511 = vmatprep.mubr.f32.mxu0 %v2177
        %3512 = vmatmul.mubr.f32.gmra.mrb[0].mxu0 %v2176
        %v3513 = vpop.f32.mrb[0].mxu0
        %v3514 = vadd.f32 %v3229, %v3513
        %v3515 = vpop.f32.mrb[0].mxu0
        %3516 = vmatprep.mubr.f32.mxu0 %v2186
        %3517 = vmatmul.mubr.f32.gmra.mrb[0].mxu0 %v2185
        %v3518 = vpop.f32.mrb[0].mxu0
        %v3519 = vadd.f32 %v3234, %v3518
        %v3520 = vpop.f32.mrb[0].mxu0
        %3521 = vmatprep.mubr.f32.mxu0 %v2195
        %3522 = vmatmul.mubr.f32.gmra.mrb[0].mxu0 %v2194
        %v3523 = vpop.f32.mrb[0].mxu0
        %v3524 = vadd.f32 %v3239, %v3523
        %v3525 = vpop.f32.mrb[0].mxu0
        %3526 = vmatprep.mubr.f32.mxu0 %v2204
        %3527 = vmatmul.mubr.f32.gmra.mrb[0].mxu0 %v2203
        %v3528 = vpop.f32.mrb[0].mxu0
        %v3529 = vadd.f32 %v3244, %v3528
        %v3530 = vpop.f32.mrb[0].mxu0
        %3531 = vmatprep.mubr.f32.mxu0 %v2213
        %3532 = vmatmul.mubr.f32.gmra.mrb[0].mxu0 %v2212
        %v3533 = vpop.f32.mrb[0].mxu0
        %v3534 = vadd.f32 %v3249, %v3533
        %v3535 = vpop.f32.mrb[0].mxu0
        %3536 = vmatprep.mubr.f32.mxu0 %v2222
        %3537 = vmatmul.mubr.f32.gmra.mrb[0].mxu0 %v2221
        %v3538 = vpop.f32.mrb[0].mxu0
        %v3539 = vadd.f32 %v3254, %v3538
        %v3540 = vpop.f32.mrb[0].mxu0
        %3541 = vmatprep.mubr.f32.mxu0 %v2231
        %3542 = vmatmul.mubr.f32.gmra.mrb[0].mxu0 %v2230
        %v3543 = vpop.f32.mrb[0].mxu0
        %v3544 = vadd.f32 %v3259, %v3543
        %v3545 = vpop.f32.mrb[0].mxu0
        %3546 = vmatprep.mubr.f32.mxu0 %v2240
        %3547 = vmatmul.mubr.f32.gmra.mrb[0].mxu0 %v2239
        %v3548 = vpop.f32.mrb[0].mxu0
        %v3549 = vadd.f32 %v3264, %v3548
        %v3550 = vpop.f32.mrb[0].mxu0
        %3551 = vmatprep.mubr.f32.mxu0 %v2249
        %3552 = vmatmul.mubr.f32.gmra.mrb[0].mxu0 %v2248
        %v3553 = vpop.f32.mrb[0].mxu0
        %v3554 = vadd.f32 %v3269, %v3553
        %v3555 = vpop.f32.mrb[0].mxu0
        %3556 = vmatprep.mubr.f32.mxu0 %v2258
        %3557 = vmatmul.mubr.f32.gmra.mrb[0].mxu0 %v2257
        %v3558 = vpop.f32.mrb[0].mxu0
        %v3559 = vadd.f32 %v3274, %v3558
        %v3560 = vpop.f32.mrb[0].mxu0
        %3561 = vmatprep.mubr.f32.mxu0 %v2267
        %3562 = vmatmul.mubr.f32.gmra.mrb[0].mxu0 %v2266
        %v3563 = vpop.f32.mrb[0].mxu0
        %v3564 = vadd.f32 %v3279, %v3563
        %v3565 = vpop.f32.mrb[0].mxu0
        %3566 = vmatprep.mubr.f32.mxu0 %v2276
        %3567 = vmatmul.mubr.f32.gmra.mrb[0].mxu0 %v2275
        %v3568 = vpop.f32.mrb[0].mxu0
        %v3569 = vadd.f32 %v3284, %v3568
        %v3570 = vpop.f32.mrb[0].mxu0
        %3571 = vdwg.mxu0
        %3572 = vmatprep.subr.mxu0 0.0
        %3573 = vmatpush1.msra.mxu0 %v2408
        %3574 = vmatprep.subr.mxu0 0.0
        %3575 = vmatpush1.msra.mxu0 %v2409
        %3576 = vmatprep.subr.mxu0 0.0
        %3577 = vmatpush1.msra.mxu0 %v2410
        %3578 = vmatprep.subr.mxu0 0.0
        %3579 = vmatpush1.msra.mxu0 %v2411
        %3580 = vmatprep.subr.mxu0 0.0
        %3581 = vmatpush1.msra.mxu0 %v2412
        %3582 = vmatprep.subr.mxu0 0.0
        %3583 = vmatpush1.msra.mxu0 %v2413
        %3584 = vmatprep.subr.mxu0 0.0
        %3585 = vmatpush1.msra.mxu0 %v2414
        %3586 = vmatprep.subr.mxu0 0.0
        %3587 = vmatpush1.msra.mxu0 %v2415
        %3588 = vmatprep.subr.mxu0 0.0
        %3589 = vmatpush1.msra.mxu0 %v2416
        %3590 = vmatprep.subr.mxu0 0.0
        %3591 = vmatpush1.msra.mxu0 %v2417
        %3592 = vmatprep.subr.mxu0 0.0
        %3593 = vmatpush1.msra.mxu0 %v2418
        %3594 = vmatprep.subr.mxu0 0.0
        %3595 = vmatpush1.msra.mxu0 %v2419
        %3596 = vmatprep.subr.mxu0 0.0
        %3597 = vmatpush1.msra.mxu0 %v2420
        %3598 = vmatprep.subr.mxu0 0.0
        %3599 = vmatpush1.msra.mxu0 %v2421
        %3600 = vmatprep.subr.mxu0 0.0
        %3601 = vmatpush1.msra.mxu0 %v2422
        %3602 = vmatprep.subr.mxu0 0.0
        %3603 = vmatpush1.msra.mxu0 %v2423
        %3604 = vmatprep.subr.mxu0 0.0
        %3605 = vmatpush1.msra.mxu0 0.0
        %3606 = vmatprep.subr.mxu0 0.0
        %3607 = vmatpush1.msra.mxu0 0.0
        %3608 = vmatprep.subr.mxu0 0.0
        %3609 = vmatpush1.msra.mxu0 0.0
        %3610 = vmatprep.subr.mxu0 0.0
        %3611 = vmatpush1.msra.mxu0 0.0
        %3612 = vmatprep.subr.mxu0 0.0
        %3613 = vmatpush1.msra.mxu0 0.0
        %3614 = vmatprep.subr.mxu0 0.0
        %3615 = vmatpush1.msra.mxu0 0.0
        %3616 = vmatprep.subr.mxu0 0.0
        %3617 = vmatpush1.msra.mxu0 0.0
        %3618 = vmatprep.subr.mxu0 0.0
        %3619 = vmatpush1.msra.mxu0 0.0
        %3620 = vmatprep.subr.mxu0 0.0
        %3621 = vmatpush1.msra.mxu0 0.0
        %3622 = vmatprep.subr.mxu0 0.0
        %3623 = vmatpush1.msra.mxu0 0.0
        %3624 = vmatprep.subr.mxu0 0.0
        %3625 = vmatpush1.msra.mxu0 0.0
        %3626 = vmatprep.subr.mxu0 0.0
        %3627 = vmatpush1.msra.mxu0 0.0
        %3628 = vmatprep.subr.mxu0 0.0
        %3629 = vmatpush1.msra.mxu0 0.0
        %3630 = vmatprep.subr.mxu0 0.0
        %3631 = vmatpush1.msra.mxu0 0.0
        %3632 = vmatprep.subr.mxu0 0.0
        %3633 = vmatpush1.msra.mxu0 0.0
        %3634 = vmatprep.subr.mxu0 0.0
        %3635 = vmatpush1.msra.mxu0 0.0
        %3636 = vmatprep.mubr.f32.mxu0 0.0
        %3637 = vmatmul.mubr.f32.gmra.mrb[0].mxu0 %v1890
        %v3638 = vpop.f32.mrb[0].mxu0
        %v3639 = vadd.f32 %v3354, %v3638
        %v3640 = vpop.f32.mrb[0].mxu0
        %3641 = vmatprep.mubr.f32.mxu0 0.0
        %3642 = vmatmul.mubr.f32.gmra.mrb[0].mxu0 %v1899
        %v3643 = vpop.f32.mrb[0].mxu0
        %v3644 = vadd.f32 %v3359, %v3643
        %v3645 = vpop.f32.mrb[0].mxu0
        %3646 = vmatprep.mubr.f32.mxu0 0.0
        %3647 = vmatmul.mubr.f32.gmra.mrb[0].mxu0 %v1908
        %v3648 = vpop.f32.mrb[0].mxu0
        %v3649 = vadd.f32 %v3364, %v3648
        %v3650 = vpop.f32.mrb[0].mxu0
        %3651 = vmatprep.mubr.f32.mxu0 0.0
        %3652 = vmatmul.mubr.f32.gmra.mrb[0].mxu0 %v1917
        %v3653 = vpop.f32.mrb[0].mxu0
        %v3654 = vadd.f32 %v3369, %v3653
        %v3655 = vpop.f32.mrb[0].mxu0
        %3656 = vmatprep.mubr.f32.mxu0 0.0
        %3657 = vmatmul.mubr.f32.gmra.mrb[0].mxu0 %v1926
        %v3658 = vpop.f32.mrb[0].mxu0
        %v3659 = vadd.f32 %v3374, %v3658
        %v3660 = vpop.f32.mrb[0].mxu0
        %3661 = vmatprep.mubr.f32.mxu0 0.0
        %3662 = vmatmul.mubr.f32.gmra.mrb[0].mxu0 %v1935
        %v3663 = vpop.f32.mrb[0].mxu0
        %v3664 = vadd.f32 %v3379, %v3663
        %v3665 = vpop.f32.mrb[0].mxu0
        %3666 = vmatprep.mubr.f32.mxu0 0.0
        %3667 = vmatmul.mubr.f32.gmra.mrb[0].mxu0 %v1944
        %v3668 = vpop.f32.mrb[0].mxu0
        %v3669 = vadd.f32 %v3384, %v3668
        %v3670 = vpop.f32.mrb[0].mxu0
        %3671 = vmatprep.mubr.f32.mxu0 0.0
        %3672 = vmatmul.mubr.f32.gmra.mrb[0].mxu0 %v1953
        %v3673 = vpop.f32.mrb[0].mxu0
        %v3674 = vadd.f32 %v3389, %v3673
        %v3675 = vpop.f32.mrb[0].mxu0
        %3676 = vmatprep.mubr.f32.mxu0 0.0
        %3677 = vmatmul.mubr.f32.gmra.mrb[0].mxu0 %v1962
        %v3678 = vpop.f32.mrb[0].mxu0
        %v3679 = vadd.f32 %v3394, %v3678
        %v3680 = vpop.f32.mrb[0].mxu0
        %3681 = vmatprep.mubr.f32.mxu0 0.0
        %3682 = vmatmul.mubr.f32.gmra.mrb[0].mxu0 %v1971
        %v3683 = vpop.f32.mrb[0].mxu0
        %v3684 = vadd.f32 %v3399, %v3683
        %v3685 = vpop.f32.mrb[0].mxu0
        %3686 = vmatprep.mubr.f32.mxu0 0.0
        %3687 = vmatmul.mubr.f32.gmra.mrb[0].mxu0 %v1980
        %v3688 = vpop.f32.mrb[0].mxu0
        %v3689 = vadd.f32 %v3404, %v3688
        %v3690 = vpop.f32.mrb[0].mxu0
        %3691 = vmatprep.mubr.f32.mxu0 0.0
        %3692 = vmatmul.mubr.f32.gmra.mrb[0].mxu0 %v1989
        %v3693 = vpop.f32.mrb[0].mxu0
        %v3694 = vadd.f32 %v3409, %v3693
        %v3695 = vpop.f32.mrb[0].mxu0
        %3696 = vmatprep.mubr.f32.mxu0 0.0
        %3697 = vmatmul.mubr.f32.gmra.mrb[0].mxu0 %v1998
        %v3698 = vpop.f32.mrb[0].mxu0
        %v3699 = vadd.f32 %v3414, %v3698
        %v3700 = vpop.f32.mrb[0].mxu0
        %3701 = vmatprep.mubr.f32.mxu0 0.0
        %3702 = vmatmul.mubr.f32.gmra.mrb[0].mxu0 %v2007
        %v3703 = vpop.f32.mrb[0].mxu0
        %v3704 = vadd.f32 %v3419, %v3703
        %v3705 = vpop.f32.mrb[0].mxu0
        %3706 = vmatprep.mubr.f32.mxu0 0.0
        %3707 = vmatmul.mubr.f32.gmra.mrb[0].mxu0 %v2016
        %v3708 = vpop.f32.mrb[0].mxu0
        %v3709 = vadd.f32 %v3424, %v3708
        %v3710 = vpop.f32.mrb[0].mxu0
        %3711 = vmatprep.mubr.f32.mxu0 0.0
        %3712 = vmatmul.mubr.f32.gmra.mrb[0].mxu0 %v2025
        %v3713 = vpop.f32.mrb[0].mxu0
        %v3714 = vadd.f32 %v3429, %v3713
        %v3715 = vpop.f32.mrb[0].mxu0
        %3716 = vmatprep.mubr.f32.mxu0 0.0
        %3717 = vmatmul.mubr.f32.gmra.mrb[0].mxu0 %v2034
        %v3718 = vpop.f32.mrb[0].mxu0
        %v3719 = vadd.f32 %v3434, %v3718
        %v3720 = vpop.f32.mrb[0].mxu0
        %3721 = vmatprep.mubr.f32.mxu0 0.0
        %3722 = vmatmul.mubr.f32.gmra.mrb[0].mxu0 %v2043
        %v3723 = vpop.f32.mrb[0].mxu0
        %v3724 = vadd.f32 %v3439, %v3723
        %v3725 = vpop.f32.mrb[0].mxu0
        %3726 = vmatprep.mubr.f32.mxu0 0.0
        %3727 = vmatmul.mubr.f32.gmra.mrb[0].mxu0 %v2052
        %v3728 = vpop.f32.mrb[0].mxu0
        %v3729 = vadd.f32 %v3444, %v3728
        %v3730 = vpop.f32.mrb[0].mxu0
        %3731 = vmatprep.mubr.f32.mxu0 0.0
        %3732 = vmatmul.mubr.f32.gmra.mrb[0].mxu0 %v2061
        %v3733 = vpop.f32.mrb[0].mxu0
        %v3734 = vadd.f32 %v3449, %v3733
        %v3735 = vpop.f32.mrb[0].mxu0
        %3736 = vmatprep.mubr.f32.mxu0 0.0
        %3737 = vmatmul.mubr.f32.gmra.mrb[0].mxu0 %v2070
        %v3738 = vpop.f32.mrb[0].mxu0
        %v3739 = vadd.f32 %v3454, %v3738
        %v3740 = vpop.f32.mrb[0].mxu0
        %3741 = vmatprep.mubr.f32.mxu0 0.0
        %3742 = vmatmul.mubr.f32.gmra.mrb[0].mxu0 %v2079
        %v3743 = vpop.f32.mrb[0].mxu0
        %v3744 = vadd.f32 %v3459, %v3743
        %v3745 = vpop.f32.mrb[0].mxu0
        %3746 = vmatprep.mubr.f32.mxu0 0.0
        %3747 = vmatmul.mubr.f32.gmra.mrb[0].mxu0 %v2088
        %v3748 = vpop.f32.mrb[0].mxu0
        %v3749 = vadd.f32 %v3464, %v3748
        %v3750 = vpop.f32.mrb[0].mxu0
        %3751 = vmatprep.mubr.f32.mxu0 0.0
        %3752 = vmatmul.mubr.f32.gmra.mrb[0].mxu0 %v2097
        %v3753 = vpop.f32.mrb[0].mxu0
        %v3754 = vadd.f32 %v3469, %v3753
        %v3755 = vpop.f32.mrb[0].mxu0
        %3756 = vmatprep.mubr.f32.mxu0 0.0
        %3757 = vmatmul.mubr.f32.gmra.mrb[0].mxu0 %v2106
        %v3758 = vpop.f32.mrb[0].mxu0
        %v3759 = vadd.f32 %v3474, %v3758
        %v3760 = vpop.f32.mrb[0].mxu0
        %3761 = vmatprep.mubr.f32.mxu0 0.0
        %3762 = vmatmul.mubr.f32.gmra.mrb[0].mxu0 %v2115
        %v3763 = vpop.f32.mrb[0].mxu0
        %v3764 = vadd.f32 %v3479, %v3763
        %v3765 = vpop.f32.mrb[0].mxu0
        %3766 = vmatprep.mubr.f32.mxu0 0.0
        %3767 = vmatmul.mubr.f32.gmra.mrb[0].mxu0 %v2124
        %v3768 = vpop.f32.mrb[0].mxu0
        %v3769 = vadd.f32 %v3484, %v3768
        %v3770 = vpop.f32.mrb[0].mxu0
        %3771 = vmatprep.mubr.f32.mxu0 0.0
        %3772 = vmatmul.mubr.f32.gmra.mrb[0].mxu0 %v2133
        %v3773 = vpop.f32.mrb[0].mxu0
        %v3774 = vadd.f32 %v3489, %v3773
        %v3775 = vpop.f32.mrb[0].mxu0
        %3776 = vmatprep.mubr.f32.mxu0 0.0
        %3777 = vmatmul.mubr.f32.gmra.mrb[0].mxu0 %v2142
        %v3778 = vpop.f32.mrb[0].mxu0
        %v3779 = vadd.f32 %v3494, %v3778
        %v3780 = vpop.f32.mrb[0].mxu0
        %3781 = vmatprep.mubr.f32.mxu0 0.0
        %3782 = vmatmul.mubr.f32.gmra.mrb[0].mxu0 %v2151
        %v3783 = vpop.f32.mrb[0].mxu0
        %v3784 = vadd.f32 %v3499, %v3783
        %v3785 = vpop.f32.mrb[0].mxu0
        %3786 = vmatprep.mubr.f32.mxu0 0.0
        %3787 = vmatmul.mubr.f32.gmra.mrb[0].mxu0 %v2160
        %v3788 = vpop.f32.mrb[0].mxu0
        %v3789 = vadd.f32 %v3504, %v3788
        %v3790 = vpop.f32.mrb[0].mxu0
        %3791 = vmatprep.mubr.f32.mxu0 0.0
        %3792 = vmatmul.mubr.f32.gmra.mrb[0].mxu0 %v2169
        %v3793 = vpop.f32.mrb[0].mxu0
        %v3794 = vadd.f32 %v3509, %v3793
        %v3795 = vpop.f32.mrb[0].mxu0
        %3796 = vmatprep.mubr.f32.mxu0 0.0
        %3797 = vmatmul.mubr.f32.gmra.mrb[0].mxu0 %v2178
        %v3798 = vpop.f32.mrb[0].mxu0
        %v3799 = vadd.f32 %v3514, %v3798
        %v3800 = vpop.f32.mrb[0].mxu0
        %3801 = vmatprep.mubr.f32.mxu0 0.0
        %3802 = vmatmul.mubr.f32.gmra.mrb[0].mxu0 %v2187
        %v3803 = vpop.f32.mrb[0].mxu0
        %v3804 = vadd.f32 %v3519, %v3803
        %v3805 = vpop.f32.mrb[0].mxu0
        %3806 = vmatprep.mubr.f32.mxu0 0.0
        %3807 = vmatmul.mubr.f32.gmra.mrb[0].mxu0 %v2196
        %v3808 = vpop.f32.mrb[0].mxu0
        %v3809 = vadd.f32 %v3524, %v3808
        %v3810 = vpop.f32.mrb[0].mxu0
        %3811 = vmatprep.mubr.f32.mxu0 0.0
        %3812 = vmatmul.mubr.f32.gmra.mrb[0].mxu0 %v2205
        %v3813 = vpop.f32.mrb[0].mxu0
        %v3814 = vadd.f32 %v3529, %v3813
        %v3815 = vpop.f32.mrb[0].mxu0
        %3816 = vmatprep.mubr.f32.mxu0 0.0
        %3817 = vmatmul.mubr.f32.gmra.mrb[0].mxu0 %v2214
        %v3818 = vpop.f32.mrb[0].mxu0
        %v3819 = vadd.f32 %v3534, %v3818
        %v3820 = vpop.f32.mrb[0].mxu0
        %3821 = vmatprep.mubr.f32.mxu0 0.0
        %3822 = vmatmul.mubr.f32.gmra.mrb[0].mxu0 %v2223
        %v3823 = vpop.f32.mrb[0].mxu0
        %v3824 = vadd.f32 %v3539, %v3823
        %v3825 = vpop.f32.mrb[0].mxu0
        %3826 = vmatprep.mubr.f32.mxu0 0.0
        %3827 = vmatmul.mubr.f32.gmra.mrb[0].mxu0 %v2232
        %v3828 = vpop.f32.mrb[0].mxu0
        %v3829 = vadd.f32 %v3544, %v3828
        %v3830 = vpop.f32.mrb[0].mxu0
        %3831 = vmatprep.mubr.f32.mxu0 0.0
        %3832 = vmatmul.mubr.f32.gmra.mrb[0].mxu0 %v2241
        %v3833 = vpop.f32.mrb[0].mxu0
        %v3834 = vadd.f32 %v3549, %v3833
        %v3835 = vpop.f32.mrb[0].mxu0
        %3836 = vmatprep.mubr.f32.mxu0 0.0
        %3837 = vmatmul.mubr.f32.gmra.mrb[0].mxu0 %v2250
        %v3838 = vpop.f32.mrb[0].mxu0
        %v3839 = vadd.f32 %v3554, %v3838
        %v3840 = vpop.f32.mrb[0].mxu0
        %3841 = vmatprep.mubr.f32.mxu0 0.0
        %3842 = vmatmul.mubr.f32.gmra.mrb[0].mxu0 %v2259
        %v3843 = vpop.f32.mrb[0].mxu0
        %v3844 = vadd.f32 %v3559, %v3843
        %v3845 = vpop.f32.mrb[0].mxu0
        %3846 = vmatprep.mubr.f32.mxu0 0.0
        %3847 = vmatmul.mubr.f32.gmra.mrb[0].mxu0 %v2268
        %v3848 = vpop.f32.mrb[0].mxu0
        %v3849 = vadd.f32 %v3564, %v3848
        %v3850 = vpop.f32.mrb[0].mxu0
        %3851 = vmatprep.mubr.f32.mxu0 0.0
        %3852 = vmatmul.mubr.f32.gmra.mrb[0].mxu0 %v2277
        %v3853 = vpop.f32.mrb[0].mxu0
        %v3854 = vadd.f32 %v3569, %v3853
        %v3855 = vpop.f32.mrb[0].mxu0
        %3856 = vdwg.mxu0
        %v3857 = vmul.f32 %v3639, 0.1
        %v3858 = vmul.f32 %v3644, 0.1
        %v3859 = vmul.f32 %v3649, 0.1
        %v3860 = vmul.f32 %v3654, 0.1
        %v3861 = vmul.f32 %v3659, 0.1
        %v3862 = vmul.f32 %v3664, 0.1
        %v3863 = vmul.f32 %v3669, 0.1
        %v3864 = vmul.f32 %v3674, 0.1
        %v3865 = vmul.f32 %v3679, 0.1
        %v3866 = vmul.f32 %v3684, 0.1
        %v3867 = vmul.f32 %v3689, 0.1
        %v3868 = vmul.f32 %v3694, 0.1
        %v3869 = vmul.f32 %v3699, 0.1
        %v3870 = vmul.f32 %v3704, 0.1
        %v3871 = vmul.f32 %v3709, 0.1
        %v3872 = vmul.f32 %v3714, 0.1
        %v3873 = vmul.f32 %v3719, 0.1
        %v3874 = vmul.f32 %v3724, 0.1
        %v3875 = vmul.f32 %v3729, 0.1
        %v3876 = vmul.f32 %v3734, 0.1
        %v3877 = vmul.f32 %v3739, 0.1
        %v3878 = vmul.f32 %v3744, 0.1
        %v3879 = vmul.f32 %v3749, 0.1
        %v3880 = vmul.f32 %v3754, 0.1
        %v3881 = vmul.f32 %v3759, 0.1
        %v3882 = vmul.f32 %v3764, 0.1
        %v3883 = vmul.f32 %v3769, 0.1
        %v3884 = vmul.f32 %v3774, 0.1
        %v3885 = vmul.f32 %v3779, 0.1
        %v3886 = vmul.f32 %v3784, 0.1
        %v3887 = vmul.f32 %v3789, 0.1
        %v3888 = vmul.f32 %v3794, 0.1
        %v3889 = vmul.f32 %v3799, 0.1
        %v3890 = vmul.f32 %v3804, 0.1
        %v3891 = vmul.f32 %v3809, 0.1
        %v3892 = vmul.f32 %v3814, 0.1
        %v3893 = vmul.f32 %v3819, 0.1
        %v3894 = vmul.f32 %v3824, 0.1
        %v3895 = vmul.f32 %v3829, 0.1
        %v3896 = vmul.f32 %v3834, 0.1
        %v3897 = vmul.f32 %v3839, 0.1
        %v3898 = vmul.f32 %v3844, 0.1
        %v3899 = vmul.f32 %v3849, 0.1
        %v3900 = vmul.f32 %v3854, 0.1
        %v3901 = vmax.f32 %v3639, %v3857
        %v3902 = vmax.f32 %v3644, %v3858
        %v3903 = vmax.f32 %v3649, %v3859
        %v3904 = vmax.f32 %v3654, %v3860
        %v3905 = vmax.f32 %v3659, %v3861
        %v3906 = vmax.f32 %v3664, %v3862
        %v3907 = vmax.f32 %v3669, %v3863
        %v3908 = vmax.f32 %v3674, %v3864
        %v3909 = vmax.f32 %v3679, %v3865
        %v3910 = vmax.f32 %v3684, %v3866
        %v3911 = vmax.f32 %v3689, %v3867
        %v3912 = vmax.f32 %v3694, %v3868
        %v3913 = vmax.f32 %v3699, %v3869
        %v3914 = vmax.f32 %v3704, %v3870
        %v3915 = vmax.f32 %v3709, %v3871
        %v3916 = vmax.f32 %v3714, %v3872
        %v3917 = vmax.f32 %v3719, %v3873
        %v3918 = vmax.f32 %v3724, %v3874
        %v3919 = vmax.f32 %v3729, %v3875
        %v3920 = vmax.f32 %v3734, %v3876
        %v3921 = vmax.f32 %v3739, %v3877
        %v3922 = vmax.f32 %v3744, %v3878
        %v3923 = vmax.f32 %v3749, %v3879
        %v3924 = vmax.f32 %v3754, %v3880
        %v3925 = vmax.f32 %v3759, %v3881
        %v3926 = vmax.f32 %v3764, %v3882
        %v3927 = vmax.f32 %v3769, %v3883
        %v3928 = vmax.f32 %v3774, %v3884
        %v3929 = vmax.f32 %v3779, %v3885
        %v3930 = vmax.f32 %v3784, %v3886
        %v3931 = vmax.f32 %v3789, %v3887
        %v3932 = vmax.f32 %v3794, %v3888
        %v3933 = vmax.f32 %v3799, %v3889
        %v3934 = vmax.f32 %v3804, %v3890
        %v3935 = vmax.f32 %v3809, %v3891
        %v3936 = vmax.f32 %v3814, %v3892
        %v3937 = vmax.f32 %v3819, %v3893
        %v3938 = vmax.f32 %v3824, %v3894
        %v3939 = vmax.f32 %v3829, %v3895
        %v3940 = vmax.f32 %v3834, %v3896
        %v3941 = vmax.f32 %v3839, %v3897
        %v3942 = vmax.f32 %v3844, %v3898
        %v3943 = vmax.f32 %v3849, %v3899
        %v3944 = vmax.f32 %v3854, %v3900
        %3945 = vst [vmem:[#allocation2 + $0x18] sm:$0xff] %v3901
        %3946 = vst [vmem:[#allocation2 + $0x20] sm:$0xff] %v3902
        %3947 = vst [vmem:[#allocation2 + $0x28] sm:$0xff] %v3903
        %3948 = vst [vmem:[#allocation2 + $0x30] sm:$0xff] %v3904
        %3949 = vst [vmem:[#allocation2 + $0x38] sm:$0xff] %v3905
        %3950 = vst [vmem:[#allocation2 + $0x40] sm:$0xff] %v3906
        %3951 = vst [vmem:[#allocation2 + $0x48] sm:$0xff] %v3907
        %3952 = vst [vmem:[#allocation2 + $0x50] sm:$0xff] %v3908
        %3953 = vst [vmem:[#allocation2 + $0x58] sm:$0xff] %v3909
        %3954 = vst [vmem:[#allocation2 + $0x60] sm:$0xff] %v3910
        %3955 = vst [vmem:[#allocation2 + $0x68] sm:$0xff] %v3911
        %3956 = vst [vmem:[#allocation2 + $0x70] sm:$0xff] %v3912
        %3957 = vst [vmem:[#allocation2 + $0x78] sm:$0xff] %v3913
        %3958 = vst [vmem:[#allocation2 + $0x80] sm:$0xff] %v3914
        %3959 = vst [vmem:[#allocation2 + $0x88] sm:$0xff] %v3915
        %3960 = vst [vmem:[#allocation2 + $0x90] sm:$0xff] %v3916
        %3961 = vst [vmem:[#allocation2 + $0x98] sm:$0xff] %v3917
        %3962 = vst [vmem:[#allocation2 + $0xa0] sm:$0xff] %v3918
        %3963 = vst [vmem:[#allocation2 + $0xa8] sm:$0xff] %v3919
        %3964 = vst [vmem:[#allocation2 + $0xb0] sm:$0xff] %v3920
        %3965 = vst [vmem:[#allocation2 + $0xb8] sm:$0xff] %v3921
        %3966 = vst [vmem:[#allocation2 + $0xc0] sm:$0xff] %v3922
        %3967 = vst [vmem:[#allocation2 + $0xc8] sm:$0xff] %v3923
        %3968 = vst [vmem:[#allocation2 + $0xd0] sm:$0xff] %v3924
        %3969 = vst [vmem:[#allocation2 + $0xd8] sm:$0xff] %v3925
        %3970 = vst [vmem:[#allocation2 + $0xe0] sm:$0xff] %v3926
        %3971 = vst [vmem:[#allocation2 + $0xe8] sm:$0xff] %v3927
        %3972 = vst [vmem:[#allocation2 + $0xf0] sm:$0xff] %v3928
        %3973 = vst [vmem:[#allocation2 + $0xf8] sm:$0xff] %v3929
        %3974 = vst [vmem:[#allocation2 + $0x100] sm:$0xff] %v3930
        %3975 = vst [vmem:[#allocation2 + $0x108] sm:$0xff] %v3931
        %3976 = vst [vmem:[#allocation2 + $0x110] sm:$0xff] %v3932
        %3977 = vst [vmem:[#allocation2 + $0x118] sm:$0xff] %v3933
        %3978 = vst [vmem:[#allocation2 + $0x120] sm:$0xff] %v3934
        %3979 = vst [vmem:[#allocation2 + $0x128] sm:$0xff] %v3935
        %3980 = vst [vmem:[#allocation2 + $0x130] sm:$0xff] %v3936
        %3981 = vst [vmem:[#allocation2 + $0x138] sm:$0xff] %v3937
        %3982 = vst [vmem:[#allocation2 + $0x140] sm:$0xff] %v3938
        %3983 = vst [vmem:[#allocation2 + $0x148] sm:$0xff] %v3939
        %3984 = vst [vmem:[#allocation2 + $0x150] sm:$0xff] %v3940
        %3985 = vst [vmem:[#allocation2 + $0x158] sm:$0xff] %v3941
        %3986 = vst [vmem:[#allocation2 + $0x160] sm:$0xff] %v3942
        %3987 = vst [vmem:[#allocation2 + $0x168] sm:$0xff] %v3943
        %3988 = vst [vmem:[#allocation2 + $0x170] sm:$0xff] %v3944
      $region41: #{feature_pyramid_forward.1} parent=35 // loop_footer
        %s297 = sadd.s32 1, %s293
      $region42: #{feature_pyramid_forward.1} parent=35 // loop_footer_branch
        %292 = sbr.rel target = $region38
      $region43: #{feature_pyramid_forward.1} parent=35 // loop_exit
        _
      %v3989 = vld [vmem:[#allocation2 + $0x18] sm:$0xff]
      %v3990 = vld [vmem:[#allocation2 + $0x20] sm:$0xff]
      %v3991 = vld [vmem:[#allocation2 + $0x28] sm:$0xff]
      %v3992 = vld [vmem:[#allocation2 + $0x30] sm:$0xff]
      %v3993 = vld [vmem:[#allocation2 + $0x38] sm:$0xff]
      %v3994 = vld [vmem:[#allocation2 + $0x40] sm:$0xff]
      %v3995 = vld [vmem:[#allocation2 + $0x48] sm:$0xff]
      %v3996 = vld [vmem:[#allocation2 + $0x50] sm:$0xff]
      %v3997 = vld [vmem:[#allocation2 + $0x58] sm:$0xff]
      %v3998 = vld [vmem:[#allocation2 + $0x60] sm:$0xff]
      %v3999 = vld [vmem:[#allocation2 + $0x68] sm:$0xff]
      %v4000 = vld [vmem:[#allocation2 + $0x70] sm:$0xff]
      %v4001 = vld [vmem:[#allocation2 + $0x78] sm:$0xff]
      %v4002 = vld [vmem:[#allocation2 + $0x80] sm:$0xff]
      %v4003 = vld [vmem:[#allocation2 + $0x88] sm:$0xff]
      %v4004 = vld [vmem:[#allocation2 + $0x90] sm:$0xff]
      %v4005 = vld [vmem:[#allocation2 + $0x98] sm:$0xff]
      %v4006 = vld [vmem:[#allocation2 + $0xa0] sm:$0xff]
      %v4007 = vld [vmem:[#allocation2 + $0xa8] sm:$0xff]
      %v4008 = vld [vmem:[#allocation2 + $0xb0] sm:$0xff]
      %v4009 = vld [vmem:[#allocation2 + $0xb8] sm:$0xff]
      %v4010 = vld [vmem:[#allocation2 + $0xc0] sm:$0xff]
      %v4011 = vld [vmem:[#allocation2 + $0xc8] sm:$0xff]
      %v4012 = vld [vmem:[#allocation2 + $0xd0] sm:$0xff]
      %v4013 = vld [vmem:[#allocation2 + $0xd8] sm:$0xff]
      %v4014 = vld [vmem:[#allocation2 + $0xe0] sm:$0xff]
      %v4015 = vld [vmem:[#allocation2 + $0xe8] sm:$0xff]
      %v4016 = vld [vmem:[#allocation2 + $0xf0] sm:$0xff]
      %v4017 = vld [vmem:[#allocation2 + $0xf8] sm:$0xff]
      %v4018 = vld [vmem:[#allocation2 + $0x100] sm:$0xff]
      %v4019 = vld [vmem:[#allocation2 + $0x108] sm:$0xff]
      %v4020 = vld [vmem:[#allocation2 + $0x110] sm:$0xff]
      %v4021 = vld [vmem:[#allocation2 + $0x118] sm:$0xff]
      %v4022 = vld [vmem:[#allocation2 + $0x120] sm:$0xff]
      %v4023 = vld [vmem:[#allocation2 + $0x128] sm:$0xff]
      %v4024 = vld [vmem:[#allocation2 + $0x130] sm:$0xff]
      %v4025 = vld [vmem:[#allocation2 + $0x138] sm:$0xff]
      %v4026 = vld [vmem:[#allocation2 + $0x140] sm:$0xff]
      %v4027 = vld [vmem:[#allocation2 + $0x148] sm:$0xff]
      %v4028 = vld [vmem:[#allocation2 + $0x150] sm:$0xff]
      %v4029 = vld [vmem:[#allocation2 + $0x158] sm:$0xff]
      %v4030 = vld [vmem:[#allocation2 + $0x160] sm:$0xff]
      %v4031 = vld [vmem:[#allocation2 + $0x168] sm:$0xff]
      %v4032 = vld [vmem:[#allocation2 + $0x170] sm:$0xff]
      %4033 = vst [vmem:[%s197] sm:$0xff] %v3989
      %4034 = vst [vmem:[%s197 + $0x8] sm:$0xff] %v3990
      %4035 = vst [vmem:[%s197 + $0x10] sm:$0xff] %v3991
      %4036 = vst [vmem:[%s197 + $0x18] sm:$0xff] %v3992
      %4037 = vst [vmem:[%s197 + $0x20] sm:$0xff] %v3993
      %4038 = vst [vmem:[%s197 + $0x28] sm:$0xff] %v3994
      %4039 = vst [vmem:[%s197 + $0x30] sm:$0xff] %v3995
      %4040 = vst [vmem:[%s197 + $0x38] sm:$0xff] %v3996
      %4041 = vst [vmem:[%s197 + $0x40] sm:$0xff] %v3997
      %4042 = vst [vmem:[%s197 + $0x48] sm:$0xff] %v3998
      %4043 = vst [vmem:[%s197 + $0x50] sm:$0xff] %v3999
      %4044 = vst [vmem:[%s197 + $0x58] sm:$0xff] %v4000
      %4045 = vst [vmem:[%s197 + $0x60] sm:$0xff] %v4001
      %4046 = vst [vmem:[%s197 + $0x68] sm:$0xff] %v4002
      %4047 = vst [vmem:[%s197 + $0x70] sm:$0xff] %v4003
      %4048 = vst [vmem:[%s197 + $0x78] sm:$0xff] %v4004
      %4049 = vst [vmem:[%s197 + $0x80] sm:$0xff] %v4005
      %4050 = vst [vmem:[%s197 + $0x88] sm:$0xff] %v4006
      %4051 = vst [vmem:[%s197 + $0x90] sm:$0xff] %v4007
      %4052 = vst [vmem:[%s197 + $0x98] sm:$0xff] %v4008
      %4053 = vst [vmem:[%s197 + $0xa0] sm:$0xff] %v4009
      %4054 = vst [vmem:[%s197 + $0xa8] sm:$0xff] %v4010
      %4055 = vst [vmem:[%s197 + $0xb0] sm:$0xff] %v4011
      %4056 = vst [vmem:[%s197 + $0xb8] sm:$0xff] %v4012
      %4057 = vst [vmem:[%s197 + $0xc0] sm:$0xff] %v4013
      %4058 = vst [vmem:[%s197 + $0xc8] sm:$0xff] %v4014
      %4059 = vst [vmem:[%s197 + $0xd0] sm:$0xff] %v4015
      %4060 = vst [vmem:[%s197 + $0xd8] sm:$0xff] %v4016
      %4061 = vst [vmem:[%s197 + $0xe0] sm:$0xff] %v4017
      %4062 = vst [vmem:[%s197 + $0xe8] sm:$0xff] %v4018
      %4063 = vst [vmem:[%s197 + $0xf0] sm:$0xff] %v4019
      %4064 = vst [vmem:[%s197 + $0xf8] sm:$0xff] %v4020
      %4065 = vst [vmem:[%s197 + $0x100] sm:$0xff] %v4021
      %4066 = vst [vmem:[%s197 + $0x108] sm:$0xff] %v4022
      %4067 = vst [vmem:[%s197 + $0x110] sm:$0xff] %v4023
      %4068 = vst [vmem:[%s197 + $0x118] sm:$0xff] %v4024
      %4069 = vst [vmem:[%s197 + $0x120] sm:$0xff] %v4025
      %4070 = vst [vmem:[%s197 + $0x128] sm:$0xff] %v4026
      %4071 = vst [vmem:[%s197 + $0x130] sm:$0xff] %v4027
      %4072 = vst [vmem:[%s197 + $0x138] sm:$0xff] %v4028
      %4073 = vst [vmem:[%s197 + $0x140] sm:$0xff] %v4029
      %4074 = vst [vmem:[%s197 + $0x148] sm:$0xff] %v4030
      %4075 = vst [vmem:[%s197 + $0x150] sm:$0xff] %v4031
      %4076 = vst [vmem:[%s197 + $0x158] sm:$0xff] %v4032
      %p4077 = scmp.lt.s32.totalorder %s15, 1
      %s4078 = scalar_select %p4077, %s15, 1
      %s4079 = smul.addr %s4078, 44
      %s4080 = smul.addr %s4079, 8
      %s4081 = scalar_lea.vmem %s4, %s4080
      // Predicated region
      $region44: #{feature_pyramid_forward.1} parent=35 // pred_check
        %p4082 = pneg %p122
      $region45: #{feature_pyramid_forward.1} parent=35 // pred_check_branch
        %4084 = sbr.rel (%p4082) target = $region47
      $region46: #{feature_pyramid_forward.1} parent=35 // pred_region
        _
      $region47: #{feature_pyramid_forward.1} parent=35 // pred_fallthru
        _
    $region36: #{feature_pyramid_forward.1} parent=5 // pred_fallthru
      _
    %p4085 = scmp.le.s32.totalorder 2, %s10
    // Predicated region
    $region48: #{feature_pyramid_forward.1} parent=5 // pred_check
      %p4086 = pneg %p4085
    $region49: #{feature_pyramid_forward.1} parent=5 // pred_check_branch
      %4088 = sbr.rel (%p4086) target = $region51
    $region50: #{feature_pyramid_forward.1} parent=5 // pred_region
      %s4089 = ssub.s32 %s10, 2
      // Predicated region
      $region52: #{feature_pyramid_forward.1} parent=50 // pred_check
        %p4090 = pneg %p128
      $region53: #{feature_pyramid_forward.1} parent=50 // pred_check_branch
        %4092 = sbr.rel (%p4090) target = $region55
      $region54: #{feature_pyramid_forward.1} parent=50 // pred_region
        %p4093 = scmp.lt.s32.totalorder %s16, 1
        %s4094 = scalar_select %p4093, %s16, 1
        %s4095 = smul.addr %s4094, 44
        %s4096 = smul.addr %s4095, 8
        %s4097 = scalar_lea.vmem %s4, %s4096
      $region55: #{feature_pyramid_forward.1} parent=50 // pred_fallthru
        _
    $region51: #{feature_pyramid_forward.1} parent=5 // pred_fallthru
      _
  $region6: #{feature_pyramid_forward.1} parent=0 // loop_footer
    %s14 = sadd.s32 1, %s10
  $region7: #{feature_pyramid_forward.1} parent=0 // loop_footer_branch
    %9 = sbr.rel target = $region3
  $region8: #{feature_pyramid_forward.1} parent=0 // loop_exit
    _

</llo_original>
